<compile_context>
chip_gen: v7x
topology: tpu7x:2x2x1
jax: 0.10.0
libtpu: 0.0.40
codegen_flags: <defaults>
</compile_context>

<pallas_src>
import math
from functools import partial

import jax
import jax.numpy as jnp
from jax import lax
from jax.experimental import pallas as pl
from jax.experimental.pallas import tpu as pltpu

F32 = jnp.float32
BF16 = jnp.bfloat16
LN_EPS = 1e-5          # torch.nn.LayerNorm default
NEG_INF = -1e30        # additive key-padding mask value (kept in f32)
RW_PAD = 128           # lane-dense padded width of the decoder output slab


def _vmem_limit_bytes():
    """Per-generation scoped-VMEM limit (v7x: 64 MiB/TC, v5e/v6e: 128 MiB)."""
    default_cap = 64 * 1024 * 1024
    try:
        info = pltpu.get_tpu_info()
        cap = int(getattr(info, "vmem_capacity_bytes", default_cap))
    except Exception:
        cap = default_cap
    return min((cap * 3) // 4, 96 * 1024 * 1024)


# ----------------------------------------------------------------------------
# Fused kernel: patch-proj (l==0) -> encoder layer l -> pool+decode (l==L-1)
# Grid = (B, L).  Activation h (T, D) is a VMEM-resident scratch across L.
# ----------------------------------------------------------------------------
def _fused_forward_kernel(n_heads,
                          x_ref, mask_ref, valid_ref,
                          pw_ref, pb_ref,
                          wqkv_ref, bqkv_ref, wo_ref, bo_ref,
                          g1_ref, be1_ref, w1_ref, b1_ref,
                          w2_ref, b2_ref, g2_ref, be2_ref,
                          dw_ref, db_ref,
                          o_ref,
                          h_ref, ctx_ref):
    T, D = h_ref.shape
    H = n_heads
    hd = D // H
    scale = 1.0 / math.sqrt(hd)
    l = pl.program_id(1)

    # ---- prologue (first layer only): patch projection into resident h ----
    @pl.when(l == 0)
    def _():
        # (T, chunk) x (chunk, D): tiny K, no MXU win -> keep f32, fused here
        # purely to avoid an extra HBM write+read of h and a separate launch.
        h_ref[...] = (jnp.dot(x_ref[...], pw_ref[...],
                              preferred_element_type=F32) + pb_ref[...])

    x = h_ref[...]                                   # (T, D) f32
    mask = mask_ref[...]                             # (1, T) additive mask

    # ---- fused QKV projection (bf16 operands, f32 accumulation) ----
    qkv = (jnp.dot(x.astype(BF16), wqkv_ref[...],
                   preferred_element_type=F32) + bqkv_ref[...])     # (T, 3D) f32

    # ---- head split -> (H, T, hd)  (see TODO(synk) about reshape/einshape) ----
    q = jnp.stack([qkv[:, h * hd:(h + 1) * hd] for h in range(H)], axis=0)
    k = jnp.stack([qkv[:, D + h * hd:D + (h + 1) * hd] for h in range(H)], axis=0)
    v = jnp.stack([qkv[:, 2 * D + h * hd:2 * D + (h + 1) * hd] for h in range(H)],
                  axis=0)

    # ---- scores (batched over heads) + key-padding mask, softmax in f32 ----
    s = jnp.einsum('hqd,hkd->hqk', q.astype(BF16), k.astype(BF16),
                   preferred_element_type=F32) * scale + mask       # (H, T, T)
    s = s - jnp.max(s, axis=-1, keepdims=True)
    p = jnp.exp(s)
    p = p * pl.reciprocal(jnp.sum(p, axis=-1, keepdims=True), approx=True)

    # ---- per-head context, then CONCAT heads back to a (T, D) tile ----
    ctx = jnp.einsum('hqk,hkd->hqd', p.astype(BF16), v.astype(BF16),
                     preferred_element_type=F32)                    # (H, T, hd)
    for h in range(H):                                              # lane-slice
        ctx_ref[:, h * hd:(h + 1) * hd] = ctx[h]                    # stores

    # ---- output projection: ONE full-K (T,D)x(D,D) MXU matmul ----
    attn = (jnp.dot(ctx_ref[...].astype(BF16), wo_ref[...],
                    preferred_element_type=F32) + bo_ref[...])      # (T, D)

    # ---- residual + LayerNorm1 (post-norm, f32) ----
    y = x + attn
    mu = jnp.mean(y, axis=-1, keepdims=True)
    var = jnp.mean(jnp.square(y - mu), axis=-1, keepdims=True)
    y = (y - mu) * lax.rsqrt(var + LN_EPS) * g1_ref[...] + be1_ref[...]

    # ---- ReLU feed-forward (bf16 matmuls, f32 elementwise) ----
    h1 = jnp.maximum(
        jnp.dot(y.astype(BF16), w1_ref[...], preferred_element_type=F32)
        + b1_ref[...], 0.0)                                         # (T, dff)
    ff = (jnp.dot(h1.astype(BF16), w2_ref[...], preferred_element_type=F32)
          + b2_ref[...])                                            # (T, D)

    # ---- residual + LayerNorm2 (f32) ----
    z = y + ff
    mu2 = jnp.mean(z, axis=-1, keepdims=True)
    var2 = jnp.mean(jnp.square(z - mu2), axis=-1, keepdims=True)
    h_new = (z - mu2) * lax.rsqrt(var2 + LN_EPS) * g2_ref[...] + be2_ref[...]
    h_ref[...] = h_new

    # ---- epilogue (last layer only): masked mean-pool + decoder ----
    @pl.when(l == pl.num_programs(1) - 1)
    def _():
        valid = valid_ref[...]                                      # (1, T)
        sum_vec = jnp.dot(valid, h_new, preferred_element_type=F32) # (1, D)
        length = jnp.maximum(jnp.sum(valid, axis=-1, keepdims=True), 1.0)
        pooled = sum_vec / length              # exact division (not approx)
        o_ref[...] = (jnp.dot(pooled, dw_ref[...],
                              preferred_element_type=F32) + db_ref[...])


# ----------------------------------------------------------------------------
# Wrapper: mask prep + one fused pallas_call
# ----------------------------------------------------------------------------
def chunked_transformer_rw(kp, posts, pad_mask, *, chunk_size, n_heads, rw_dim):
    B, S, post_dim = posts.shape
    assert post_dim % chunk_size == 0
    num_chunks = post_dim // chunk_size
    T = S * num_chunks
    D = kp["patch_w"].shape[1]
    L = kp["wqkv"].shape[0]
    dff = kp["w1"].shape[2]

    # posts.view(B,S,num_chunks,chunk).flatten(1,2) == row-major reshape
    x = posts.reshape(B, T, chunk_size).astype(F32)
    # pad_mask.unsqueeze(-1).expand(B,S,num_chunks).flatten(1,2)
    token_mask = jnp.repeat(pad_mask, num_chunks, axis=1)              # (B, T)
    mask_add = jnp.where(token_mask, NEG_INF, 0.0).astype(F32).reshape(B, 1, T)
    valid = jnp.logical_not(token_mask).astype(F32).reshape(B, 1, T)

    batch_map = lambda b, l: (b, 0, 0)   # per-batch tensors, constant over L
    layer_map = lambda b, l: (l, 0, 0)   # stacked layer weights
    const_map = lambda b, l: (0, 0)      # patch / decoder weights

    in_specs = [
        pl.BlockSpec((None, T, chunk_size), batch_map),   # x tokens
        pl.BlockSpec((None, 1, T), batch_map),            # additive mask
        pl.BlockSpec((None, 1, T), batch_map),            # valid (pooling)
        pl.BlockSpec((chunk_size, D), const_map),         # patch_w
        pl.BlockSpec((1, D), const_map),                  # patch_b
        pl.BlockSpec((None, D, 3 * D), layer_map),        # wqkv (bf16)
        pl.BlockSpec((None, 1, 3 * D), layer_map),        # bqkv
        pl.BlockSpec((None, D, D), layer_map),            # wo   (bf16)
        pl.BlockSpec((None, 1, D), layer_map),            # bo
        pl.BlockSpec((None, 1, D), layer_map),            # g1
        pl.BlockSpec((None, 1, D), layer_map),            # be1
        pl.BlockSpec((None, D, dff), layer_map),          # w1   (bf16)
        pl.BlockSpec((None, 1, dff), layer_map),          # b1
        pl.BlockSpec((None, dff, D), layer_map),          # w2   (bf16)
        pl.BlockSpec((None, 1, D), layer_map),            # b2
        pl.BlockSpec((None, 1, D), layer_map),            # g2
        pl.BlockSpec((None, 1, D), layer_map),            # be2
        pl.BlockSpec((D, RW_PAD), const_map),             # dec_w (lane-padded)
        pl.BlockSpec((1, RW_PAD), const_map),             # dec_b (lane-padded)
    ]

    out = pl.pallas_call(
        partial(_fused_forward_kernel, n_heads),
        grid=(B, L),
        in_specs=in_specs,
        out_specs=pl.BlockSpec((None, 1, RW_PAD), batch_map),
        out_shape=jax.ShapeDtypeStruct((B, 1, RW_PAD), F32),
        scratch_shapes=[pltpu.VMEM((T, D), F32),   # resident activation h
                        pltpu.VMEM((T, D), F32)],  # concat-heads staging
        compiler_params=pltpu.CompilerParams(
            dimension_semantics=("parallel", "arbitrary"),
            vmem_limit_bytes=_vmem_limit_bytes()),
    )(x, mask_add, valid,
      kp["patch_w"], kp["patch_b"],
      kp["wqkv"], kp["bqkv"], kp["wo"], kp["bo"],
      kp["g1"], kp["be1"], kp["w1"], kp["b1"],
      kp["w2"], kp["b2"], kp["g2"], kp["be2"],
      kp["dec_w"], kp["dec_b"])

    return out[:, 0, :rw_dim]                                        # (B, rw)


# ----------------------------------------------------------------------------
# Parameter init (torch-like layout, f32) and kernel-side preparation
#   wqkv == in_proj_weight.T  (columns ordered [Q | K | V], head-major within)
#   wo   == out_proj.weight.T
# ----------------------------------------------------------------------------
def init_params(key, chunk_size, d_model, n_heads, enc_layers, rw_dim):
    def nrm(k, shape, scale=0.05):
        return (scale * jax.random.normal(k, shape)).astype(F32)

    dff = 4 * d_model
    keys = jax.random.split(key, 4 + enc_layers)
    params = {
        "patch_w": nrm(keys[0], (chunk_size, d_model)),
        "patch_b": nrm(keys[1], (1, d_model)),
        "dec_w": nrm(keys[2], (d_model, rw_dim)),
        "dec_b": nrm(keys[3], (1, rw_dim)),
        "layers": [],
    }
    for li in range(enc_layers):
        lk = jax.random.split(keys[4 + li], 8)
        params["layers"].append({
            "wqkv": nrm(lk[0], (d_model, 3 * d_model)),
            "bqkv": nrm(lk[1], (1, 3 * d_model)),
            "wo": nrm(lk[2], (d_model, d_model)),
            "bo": nrm(lk[3], (1, d_model)),
            "g1": jnp.ones((1, d_model), F32), "be1": jnp.zeros((1, d_model), F32),
            "w1": nrm(lk[4], (d_model, dff)), "b1": nrm(lk[5], (1, dff)),
            "w2": nrm(lk[6], (dff, d_model)), "b2": nrm(lk[7], (1, d_model)),
            "g2": jnp.ones((1, d_model), F32), "be2": jnp.zeros((1, d_model), F32),
        })
    return params


def prepare_params(params):
    """Stack layer weights on a leading L axis, cast matmul weights to bf16,
    pad the decoder to a lane-dense 128-wide output slab."""
    stack = lambda name: jnp.stack([lyr[name] for lyr in params["layers"]], axis=0)
    D, rw = params["dec_w"].shape
    dec_w = jnp.zeros((D, RW_PAD), F32).at[:, :rw].set(params["dec_w"])
    dec_b = jnp.zeros((1, RW_PAD), F32).at[:, :rw].set(params["dec_b"])
    return {
        "patch_w": params["patch_w"], "patch_b": params["patch_b"],
        "wqkv": stack("wqkv").astype(BF16), "bqkv": stack("bqkv"),
        "wo": stack("wo").astype(BF16), "bo": stack("bo"),
        "g1": stack("g1"), "be1": stack("be1"),
        "w1": stack("w1").astype(BF16), "b1": stack("b1"),
        "w2": stack("w2").astype(BF16), "b2": stack("b2"),
        "g2": stack("g2"), "be2": stack("be2"),
        "dec_w": dec_w, "dec_b": dec_b,
    }


# ----------------------------------------------------------------------------
# Pure-JAX (f32, no Pallas) reference for a numerical sanity check
# ----------------------------------------------------------------------------
def reference_forward(params, posts, pad_mask, *, chunk_size, n_heads):
    B, S, post_dim = posts.shape
    num_chunks = post_dim // chunk_size
    T = S * num_chunks
    D = params["patch_w"].shape[1]
    hd = D // n_heads

    x = posts.reshape(B, T, chunk_size).astype(F32)
    token_mask = jnp.repeat(pad_mask, num_chunks, axis=1)
    mask_add = jnp.where(token_mask, NEG_INF, 0.0)[:, None, None, :]

    h = x @ params["patch_w"] + params["patch_b"]
    for p in params["layers"]:
        qkv = h @ p["wqkv"] + p["bqkv"]
        q, k, v = jnp.split(qkv, 3, axis=-1)
        split = lambda t: t.reshape(B, T, n_heads, hd).transpose(0, 2, 1, 3)
        qh, kh, vh = split(q), split(k), split(v)
        s = jnp.einsum('bhqd,bhkd->bhqk', qh, kh) / math.sqrt(hd) + mask_add
        att = jax.nn.softmax(s, axis=-1)
        ctx = jnp.einsum('bhqk,bhkd->bhqd', att, vh)
        ctx = ctx.transpose(0, 2, 1, 3).reshape(B, T, D)
        attn = ctx @ p["wo"] + p["bo"]
        y = h + attn
        y = ((y - y.mean(-1, keepdims=True))
             / jnp.sqrt(y.var(-1, keepdims=True) + LN_EPS)) * p["g1"] + p["be1"]
        ff = jnp.maximum(y @ p["w1"] + p["b1"], 0.0) @ p["w2"] + p["b2"]
        z = y + ff
        h = ((z - z.mean(-1, keepdims=True))
             / jnp.sqrt(z.var(-1, keepdims=True) + LN_EPS)) * p["g2"] + p["be2"]

    valid = jnp.logical_not(token_mask).astype(F32)
    sum_vec = jnp.einsum('bt,btd->bd', valid, h)
    lengths = jnp.maximum(valid.sum(-1, keepdims=True), 1.0)
    pooled = sum_vec / lengths
    return pooled @ params["dec_w"] + params["dec_b"]


if __name__ == "__main__":
    # Small shapes consistent with the module; d_model / dff lane-dense.
    B, S = 2, 8
    post_dim, chunk_size = 16, 4          # num_chunks = 4 -> T = 32 tokens
    d_model, n_heads = 128, 4             # head_dim = 32, dff = 512
    enc_layers, rw_dim = 2, 8
    dropout = 0.0                         # eval-mode forward

    key = jax.random.PRNGKey(0)
    kparam, kposts = jax.random.split(key)
    params = init_params(kparam, chunk_size, d_model, n_heads, enc_layers, rw_dim)
    kernel_params = prepare_params(params)

    posts = jax.random.normal(kposts, (B, S, post_dim), dtype=F32)
    seq_lengths = jnp.array([6, 5])                                # valid lengths
    pad_mask = jnp.arange(S)[None, :] >= seq_lengths[:, None]      # True = pad

    out = chunked_transformer_rw(kernel_params, posts, pad_mask,
                                 chunk_size=chunk_size, n_heads=n_heads,
                                 rw_dim=rw_dim)
    out = jax.block_until_ready(out)

    assert out.shape == (B, rw_dim), out.shape
    assert bool(jnp.all(jnp.isfinite(out)))

    ref = reference_forward(params, posts, pad_mask,
                            chunk_size=chunk_size, n_heads=n_heads)
    # tolerance covers bf16 matmul operands (f32 accumulation / LN / softmax)
    assert bool(jnp.allclose(out, ref, rtol=3e-2, atol=3e-2)), (out, ref)

    print("KERNEL_OK")
</pallas_src>

<mosaic_0001>
module attributes {stable_mosaic.version = 11 : i64} {
  func.func @_fused_forward_kernel(%arg0: i32, %arg1: i32, %arg2: memref<1x32x4xf32, #tpu.memory_space<vmem>>, %arg3: memref<1x1x32xf32, #tpu.memory_space<vmem>>, %arg4: memref<1x1x32xf32, #tpu.memory_space<vmem>>, %arg5: memref<4x128xf32, #tpu.memory_space<vmem>>, %arg6: memref<1x128xf32, #tpu.memory_space<vmem>>, %arg7: memref<1x128x384xbf16, #tpu.memory_space<vmem>>, %arg8: memref<1x1x384xf32, #tpu.memory_space<vmem>>, %arg9: memref<1x128x128xbf16, #tpu.memory_space<vmem>>, %arg10: memref<1x1x128xf32, #tpu.memory_space<vmem>>, %arg11: memref<1x1x128xf32, #tpu.memory_space<vmem>>, %arg12: memref<1x1x128xf32, #tpu.memory_space<vmem>>, %arg13: memref<1x128x512xbf16, #tpu.memory_space<vmem>>, %arg14: memref<1x1x512xf32, #tpu.memory_space<vmem>>, %arg15: memref<1x512x128xbf16, #tpu.memory_space<vmem>>, %arg16: memref<1x1x128xf32, #tpu.memory_space<vmem>>, %arg17: memref<1x1x128xf32, #tpu.memory_space<vmem>>, %arg18: memref<1x1x128xf32, #tpu.memory_space<vmem>>, %arg19: memref<128x128xf32, #tpu.memory_space<vmem>>, %arg20: memref<1x128xf32, #tpu.memory_space<vmem>>, %arg21: memref<1x1x128xf32, #tpu.memory_space<vmem>>, %arg22: memref<32x128xf32, #tpu.memory_space<vmem>>, %arg23: memref<32x128xf32, #tpu.memory_space<vmem>>) attributes {dimension_semantics = [#tpu.dimension_semantics<parallel>, #tpu.dimension_semantics<arbitrary>], iteration_bounds = array<i64: 2, 2>, scalar_prefetch = 0 : i64, scratch_operands = 2 : i64, tpu.core_type = #tpu.core_type<tc>, window_params = [{transform_indices = @transform_0, window_bounds = array<i64: 1, 32, 4>}, {transform_indices = @transform_1, window_bounds = array<i64: 1, 1, 32>}, {transform_indices = @transform_2, window_bounds = array<i64: 1, 1, 32>}, {pipeline_mode = #tpu.pipeline_mode<synchronous>, transform_indices = @transform_3, window_bounds = array<i64: 4, 128>}, {pipeline_mode = #tpu.pipeline_mode<synchronous>, transform_indices = @transform_4, window_bounds = array<i64: 1, 128>}, {transform_indices = @transform_5, window_bounds = array<i64: 1, 128, 384>}, {transform_indices = @transform_6, window_bounds = array<i64: 1, 1, 384>}, {transform_indices = @transform_7, window_bounds = array<i64: 1, 128, 128>}, {transform_indices = @transform_8, window_bounds = array<i64: 1, 1, 128>}, {transform_indices = @transform_9, window_bounds = array<i64: 1, 1, 128>}, {transform_indices = @transform_10, window_bounds = array<i64: 1, 1, 128>}, {transform_indices = @transform_11, window_bounds = array<i64: 1, 128, 512>}, {transform_indices = @transform_12, window_bounds = array<i64: 1, 1, 512>}, {transform_indices = @transform_13, window_bounds = array<i64: 1, 512, 128>}, {transform_indices = @transform_14, window_bounds = array<i64: 1, 1, 128>}, {transform_indices = @transform_15, window_bounds = array<i64: 1, 1, 128>}, {transform_indices = @transform_16, window_bounds = array<i64: 1, 1, 128>}, {pipeline_mode = #tpu.pipeline_mode<synchronous>, transform_indices = @transform_17, window_bounds = array<i64: 128, 128>}, {pipeline_mode = #tpu.pipeline_mode<synchronous>, transform_indices = @transform_18, window_bounds = array<i64: 1, 128>}, {transform_indices = @transform_19, window_bounds = array<i64: 1, 1, 128>}]} {
    %c0_i32 = arith.constant 0 : i32
    %0 = arith.cmpi eq, %arg1, %c0_i32 : i32
    %1 = arith.extui %0 : i1 to i32
    %c0_i32_0 = arith.constant 0 : i32
    %2 = arith.cmpi ne, %1, %c0_i32_0 : i32
    scf.if %2 {
      %c0_70 = arith.constant 0 : index
      %c0_71 = arith.constant 0 : index
      %c0_72 = arith.constant 0 : index
      %159 = vector.load %arg2[%c0_70, %c0_71, %c0_72] : memref<1x32x4xf32, #tpu.memory_space<vmem>>, vector<1x32x4xf32>
      %160 = vector.shape_cast %159 : vector<1x32x4xf32> to vector<32x4xf32>
      %c0_73 = arith.constant 0 : index
      %c0_74 = arith.constant 0 : index
      %161 = vector.load %arg5[%c0_73, %c0_74] : memref<4x128xf32, #tpu.memory_space<vmem>>, vector<4x128xf32>
      %cst_75 = arith.constant dense<0.000000e+00> : vector<32x128xf32>
      %162 = tpu.matmul %160, %161, %cst_75 {dimension_numbers = #tpu.dot_dimension_numbers<[1], [0], [0], [1], [0, 0, 1, 1], [], []>} : vector<32x4xf32>, vector<4x128xf32>, vector<32x128xf32> -> vector<32x128xf32>
      %c0_76 = arith.constant 0 : index
      %c0_77 = arith.constant 0 : index
      %163 = vector.load %arg6[%c0_76, %c0_77] : memref<1x128xf32, #tpu.memory_space<vmem>>, vector<1x128xf32>
      %164 = vector.broadcast %163 : vector<1x128xf32> to vector<32x128xf32>
      %165 = arith.addf %162, %164 : vector<32x128xf32>
      %c0_78 = arith.constant 0 : index
      %c0_79 = arith.constant 0 : index
      %166 = vector.load %arg22[%c0_78, %c0_79] : memref<32x128xf32, #tpu.memory_space<vmem>>, vector<32x128xf32>
      tpu.vector_store %arg22[%c0_78, %c0_79], %165 {strides = array<i32>} : memref<32x128xf32, #tpu.memory_space<vmem>>, vector<32x128xf32>,
    } else {
    }
    %c0 = arith.constant 0 : index
    %c0_1 = arith.constant 0 : index
    %3 = vector.load %arg22[%c0, %c0_1] : memref<32x128xf32, #tpu.memory_space<vmem>>, vector<32x128xf32>
    %c0_2 = arith.constant 0 : index
    %c0_3 = arith.constant 0 : index
    %c0_4 = arith.constant 0 : index
    %4 = vector.load %arg3[%c0_2, %c0_3, %c0_4] : memref<1x1x32xf32, #tpu.memory_space<vmem>>, vector<1x1x32xf32>
    %5 = vector.shape_cast %4 : vector<1x1x32xf32> to vector<1x32xf32>
    %6 = arith.truncf %3 : vector<32x128xf32> to vector<32x128xbf16>
    %c0_5 = arith.constant 0 : index
    %c0_6 = arith.constant 0 : index
    %c0_7 = arith.constant 0 : index
    %7 = vector.load %arg7[%c0_5, %c0_6, %c0_7] : memref<1x128x384xbf16, #tpu.memory_space<vmem>>, vector<1x128x384xbf16>
    %8 = vector.shape_cast %7 : vector<1x128x384xbf16> to vector<128x384xbf16>
    %cst = arith.constant dense<0.000000e+00> : vector<32x384xf32>
    %9 = tpu.matmul %6, %8, %cst {dimension_numbers = #tpu.dot_dimension_numbers<[1], [0], [0], [1], [0, 0, 1, 1], [], []>} : vector<32x128xbf16>, vector<128x384xbf16>, vector<32x384xf32> -> vector<32x384xf32>
    %c0_8 = arith.constant 0 : index
    %c0_9 = arith.constant 0 : index
    %c0_10 = arith.constant 0 : index
    %10 = vector.load %arg8[%c0_8, %c0_9, %c0_10] : memref<1x1x384xf32, #tpu.memory_space<vmem>>, vector<1x1x384xf32>
    %11 = vector.shape_cast %10 : vector<1x1x384xf32> to vector<1x384xf32>
    %12 = vector.broadcast %11 : vector<1x384xf32> to vector<32x384xf32>
    %13 = arith.addf %9, %12 : vector<32x384xf32>
    %14 = vector.extract_strided_slice %13 {offsets = [0, 0], sizes = [32, 32], strides = [1, 1]} : vector<32x384xf32> to vector<32x32xf32>
    %15 = vector.extract_strided_slice %13 {offsets = [0, 32], sizes = [32, 32], strides = [1, 1]} : vector<32x384xf32> to vector<32x32xf32>
    %16 = vector.extract_strided_slice %13 {offsets = [0, 64], sizes = [32, 32], strides = [1, 1]} : vector<32x384xf32> to vector<32x32xf32>
    %17 = vector.extract_strided_slice %13 {offsets = [0, 96], sizes = [32, 32], strides = [1, 1]} : vector<32x384xf32> to vector<32x32xf32>
    %18 = vector.shape_cast %14 : vector<32x32xf32> to vector<1x32x32xf32>
    %19 = vector.shape_cast %15 : vector<32x32xf32> to vector<1x32x32xf32>
    %20 = vector.shape_cast %16 : vector<32x32xf32> to vector<1x32x32xf32>
    %21 = vector.shape_cast %17 : vector<32x32xf32> to vector<1x32x32xf32>
    %22 = tpu.concatenate %18, %19, %20, %21 in 0 : vector<1x32x32xf32>, vector<1x32x32xf32>, vector<1x32x32xf32>, vector<1x32x32xf32> -> vector<4x32x32xf32>
    %23 = vector.extract_strided_slice %13 {offsets = [0, 128], sizes = [32, 32], strides = [1, 1]} : vector<32x384xf32> to vector<32x32xf32>
    %24 = vector.extract_strided_slice %13 {offsets = [0, 160], sizes = [32, 32], strides = [1, 1]} : vector<32x384xf32> to vector<32x32xf32>
    %25 = vector.extract_strided_slice %13 {offsets = [0, 192], sizes = [32, 32], strides = [1, 1]} : vector<32x384xf32> to vector<32x32xf32>
    %26 = vector.extract_strided_slice %13 {offsets = [0, 224], sizes = [32, 32], strides = [1, 1]} : vector<32x384xf32> to vector<32x32xf32>
    %27 = vector.shape_cast %23 : vector<32x32xf32> to vector<1x32x32xf32>
    %28 = vector.shape_cast %24 : vector<32x32xf32> to vector<1x32x32xf32>
    %29 = vector.shape_cast %25 : vector<32x32xf32> to vector<1x32x32xf32>
    %30 = vector.shape_cast %26 : vector<32x32xf32> to vector<1x32x32xf32>
    %31 = tpu.concatenate %27, %28, %29, %30 in 0 : vector<1x32x32xf32>, vector<1x32x32xf32>, vector<1x32x32xf32>, vector<1x32x32xf32> -> vector<4x32x32xf32>
    %32 = vector.extract_strided_slice %13 {offsets = [0, 256], sizes = [32, 32], strides = [1, 1]} : vector<32x384xf32> to vector<32x32xf32>
    %33 = vector.extract_strided_slice %13 {offsets = [0, 288], sizes = [32, 32], strides = [1, 1]} : vector<32x384xf32> to vector<32x32xf32>
    %34 = vector.extract_strided_slice %13 {offsets = [0, 320], sizes = [32, 32], strides = [1, 1]} : vector<32x384xf32> to vector<32x32xf32>
    %35 = vector.extract_strided_slice %13 {offsets = [0, 352], sizes = [32, 32], strides = [1, 1]} : vector<32x384xf32> to vector<32x32xf32>
    %36 = vector.shape_cast %32 : vector<32x32xf32> to vector<1x32x32xf32>
    %37 = vector.shape_cast %33 : vector<32x32xf32> to vector<1x32x32xf32>
    %38 = vector.shape_cast %34 : vector<32x32xf32> to vector<1x32x32xf32>
    %39 = vector.shape_cast %35 : vector<32x32xf32> to vector<1x32x32xf32>
    %40 = tpu.concatenate %36, %37, %38, %39 in 0 : vector<1x32x32xf32>, vector<1x32x32xf32>, vector<1x32x32xf32>, vector<1x32x32xf32> -> vector<4x32x32xf32>
    %41 = arith.truncf %22 : vector<4x32x32xf32> to vector<4x32x32xbf16>
    %42 = arith.truncf %31 : vector<4x32x32xf32> to vector<4x32x32xbf16>
    "tpu.trace_start"() <{level = 10 : i32, message = "hqd,hkd->hqk"}> : () -> ()
    %cst_11 = arith.constant dense<0.000000e+00> : vector<4x32x32xf32>
    %43 = tpu.matmul %41, %42, %cst_11 {dimension_numbers = #tpu.dot_dimension_numbers<[2], [2], [1], [1], [0, 0, 0, 1, 1, 1], [0], [0]>} : vector<4x32x32xbf16>, vector<4x32x32xbf16>, vector<4x32x32xf32> -> vector<4x32x32xf32>
    "tpu.trace_stop"() : () -> ()
    %cst_12 = arith.constant 0.176776692 : f32
    %44 = vector.broadcast %cst_12 : f32 to vector<4x32x32xf32>
    %45 = arith.mulf %43, %44 : vector<4x32x32xf32>
    %46 = vector.shape_cast %5 : vector<1x32xf32> to vector<1x1x32xf32>
    %47 = vector.broadcast %46 : vector<1x1x32xf32> to vector<4x32x32xf32>
    %48 = arith.addf %45, %47 : vector<4x32x32xf32>
    %cst_13 = arith.constant dense<0xFF800000> : vector<4x32xf32>
    %49 = vector.multi_reduction <maximumf>, %48, %cst_13 [2] : vector<4x32x32xf32> to vector<4x32xf32>
    %50 = vector.shape_cast %49 : vector<4x32xf32> to vector<4x32x1xf32>
    %51 = vector.broadcast %50 : vector<4x32x1xf32> to vector<4x32x32xf32>
    %52 = arith.subf %48, %51 : vector<4x32x32xf32>
    %53 = math.exp %52 : vector<4x32x32xf32>
    %cst_14 = arith.constant dense<0.000000e+00> : vector<4x32xf32>
    %54 = vector.multi_reduction <add>, %53, %cst_14 [2] : vector<4x32x32xf32> to vector<4x32xf32>
    %55 = vector.shape_cast %54 : vector<4x32xf32> to vector<4x32x1xf32>
    %56 = tpu.reciprocal %55 {approx = true} : vector<4x32x1xf32> -> vector<4x32x1xf32>
    %57 = vector.broadcast %56 : vector<4x32x1xf32> to vector<4x32x32xf32>
    %58 = arith.mulf %53, %57 : vector<4x32x32xf32>
    %59 = arith.truncf %58 : vector<4x32x32xf32> to vector<4x32x32xbf16>
    %60 = arith.truncf %40 : vector<4x32x32xf32> to vector<4x32x32xbf16>
    "tpu.trace_start"() <{level = 10 : i32, message = "hqk,hkd->hqd"}> : () -> ()
    %cst_15 = arith.constant dense<0.000000e+00> : vector<4x32x32xf32>
    %61 = tpu.matmul %59, %60, %cst_15 {dimension_numbers = #tpu.dot_dimension_numbers<[2], [1], [1], [2], [0, 0, 0, 1, 1, 2], [0], [0]>} : vector<4x32x32xbf16>, vector<4x32x32xbf16>, vector<4x32x32xf32> -> vector<4x32x32xf32>
    "tpu.trace_stop"() : () -> ()
    %62 = vector.extract_strided_slice %61 {offsets = [0, 0, 0], sizes = [1, 32, 32], strides = [1, 1, 1]} : vector<4x32x32xf32> to vector<1x32x32xf32>
    %63 = vector.shape_cast %62 : vector<1x32x32xf32> to vector<32x32xf32>
    %c0_16 = arith.constant 0 : index
    %c0_17 = arith.constant 0 : index
    %64 = vector.load %arg23[%c0_16, %c0_17] : memref<32x128xf32, #tpu.memory_space<vmem>>, vector<32x32xf32>
    tpu.vector_store %arg23[%c0_16, %c0_17], %63 {strides = array<i32>} : memref<32x128xf32, #tpu.memory_space<vmem>>, vector<32x32xf32>,
    %65 = vector.extract_strided_slice %61 {offsets = [1, 0, 0], sizes = [1, 32, 32], strides = [1, 1, 1]} : vector<4x32x32xf32> to vector<1x32x32xf32>
    %66 = vector.shape_cast %65 : vector<1x32x32xf32> to vector<32x32xf32>
    %c0_18 = arith.constant 0 : index
    %c32 = arith.constant 32 : index
    %67 = vector.load %arg23[%c0_18, %c32] : memref<32x128xf32, #tpu.memory_space<vmem>>, vector<32x32xf32>
    tpu.vector_store %arg23[%c0_18, %c32], %66 {strides = array<i32>} : memref<32x128xf32, #tpu.memory_space<vmem>>, vector<32x32xf32>,
    %68 = vector.extract_strided_slice %61 {offsets = [2, 0, 0], sizes = [1, 32, 32], strides = [1, 1, 1]} : vector<4x32x32xf32> to vector<1x32x32xf32>
    %69 = vector.shape_cast %68 : vector<1x32x32xf32> to vector<32x32xf32>
    %c0_19 = arith.constant 0 : index
    %c64 = arith.constant 64 : index
    %70 = vector.load %arg23[%c0_19, %c64] : memref<32x128xf32, #tpu.memory_space<vmem>>, vector<32x32xf32>
    tpu.vector_store %arg23[%c0_19, %c64], %69 {strides = array<i32>} : memref<32x128xf32, #tpu.memory_space<vmem>>, vector<32x32xf32>,
    %71 = vector.extract_strided_slice %61 {offsets = [3, 0, 0], sizes = [1, 32, 32], strides = [1, 1, 1]} : vector<4x32x32xf32> to vector<1x32x32xf32>
    %72 = vector.shape_cast %71 : vector<1x32x32xf32> to vector<32x32xf32>
    %c0_20 = arith.constant 0 : index
    %c96 = arith.constant 96 : index
    %73 = vector.load %arg23[%c0_20, %c96] : memref<32x128xf32, #tpu.memory_space<vmem>>, vector<32x32xf32>
    tpu.vector_store %arg23[%c0_20, %c96], %72 {strides = array<i32>} : memref<32x128xf32, #tpu.memory_space<vmem>>, vector<32x32xf32>,
    %c0_21 = arith.constant 0 : index
    %c0_22 = arith.constant 0 : index
    %74 = vector.load %arg23[%c0_21, %c0_22] : memref<32x128xf32, #tpu.memory_space<vmem>>, vector<32x128xf32>
    %75 = arith.truncf %74 : vector<32x128xf32> to vector<32x128xbf16>
    %c0_23 = arith.constant 0 : index
    %c0_24 = arith.constant 0 : index
    %c0_25 = arith.constant 0 : index
    %76 = vector.load %arg9[%c0_23, %c0_24, %c0_25] : memref<1x128x128xbf16, #tpu.memory_space<vmem>>, vector<1x128x128xbf16>
    %77 = vector.shape_cast %76 : vector<1x128x128xbf16> to vector<128x128xbf16>
    %cst_26 = arith.constant dense<0.000000e+00> : vector<32x128xf32>
    %78 = tpu.matmul %75, %77, %cst_26 {dimension_numbers = #tpu.dot_dimension_numbers<[1], [0], [0], [1], [0, 0, 1, 1], [], []>} : vector<32x128xbf16>, vector<128x128xbf16>, vector<32x128xf32> -> vector<32x128xf32>
    %c0_27 = arith.constant 0 : index
    %c0_28 = arith.constant 0 : index
    %c0_29 = arith.constant 0 : index
    %79 = vector.load %arg10[%c0_27, %c0_28, %c0_29] : memref<1x1x128xf32, #tpu.memory_space<vmem>>, vector<1x1x128xf32>
    %80 = vector.shape_cast %79 : vector<1x1x128xf32> to vector<1x128xf32>
    %81 = vector.broadcast %80 : vector<1x128xf32> to vector<32x128xf32>
    %82 = arith.addf %78, %81 : vector<32x128xf32>
    %83 = arith.addf %3, %82 : vector<32x128xf32>
    %cst_30 = arith.constant dense<0.000000e+00> : vector<32xf32>
    %84 = vector.multi_reduction <add>, %83, %cst_30 [1] : vector<32x128xf32> to vector<32xf32>
    %85 = vector.shape_cast %84 : vector<32xf32> to vector<32x1xf32>
    %cst_31 = arith.constant 1.280000e+02 : f32
    %86 = vector.broadcast %cst_31 : f32 to vector<32x1xf32>
    %87 = arith.divf %85, %86 : vector<32x1xf32>
    %88 = vector.broadcast %87 : vector<32x1xf32> to vector<32x128xf32>
    %89 = arith.subf %83, %88 : vector<32x128xf32>
    %90 = arith.mulf %89, %89 : vector<32x128xf32>
    %cst_32 = arith.constant dense<0.000000e+00> : vector<32xf32>
    %91 = vector.multi_reduction <add>, %90, %cst_32 [1] : vector<32x128xf32> to vector<32xf32>
    %92 = vector.shape_cast %91 : vector<32xf32> to vector<32x1xf32>
    %cst_33 = arith.constant 1.280000e+02 : f32
    %93 = vector.broadcast %cst_33 : f32 to vector<32x1xf32>
    %94 = arith.divf %92, %93 : vector<32x1xf32>
    %95 = vector.broadcast %87 : vector<32x1xf32> to vector<32x128xf32>
    %96 = arith.subf %83, %95 : vector<32x128xf32>
    %cst_34 = arith.constant 9.99999974E-6 : f32
    %97 = vector.broadcast %cst_34 : f32 to vector<32x1xf32>
    %98 = arith.addf %94, %97 : vector<32x1xf32>
    %99 = math.rsqrt %98 : vector<32x1xf32>
    %100 = vector.broadcast %99 : vector<32x1xf32> to vector<32x128xf32>
    %101 = arith.mulf %96, %100 : vector<32x128xf32>
    %c0_35 = arith.constant 0 : index
    %c0_36 = arith.constant 0 : index
    %c0_37 = arith.constant 0 : index
    %102 = vector.load %arg11[%c0_35, %c0_36, %c0_37] : memref<1x1x128xf32, #tpu.memory_space<vmem>>, vector<1x1x128xf32>
    %103 = vector.shape_cast %102 : vector<1x1x128xf32> to vector<1x128xf32>
    %104 = vector.broadcast %103 : vector<1x128xf32> to vector<32x128xf32>
    %105 = arith.mulf %101, %104 : vector<32x128xf32>
    %c0_38 = arith.constant 0 : index
    %c0_39 = arith.constant 0 : index
    %c0_40 = arith.constant 0 : index
    %106 = vector.load %arg12[%c0_38, %c0_39, %c0_40] : memref<1x1x128xf32, #tpu.memory_space<vmem>>, vector<1x1x128xf32>
    %107 = vector.shape_cast %106 : vector<1x1x128xf32> to vector<1x128xf32>
    %108 = vector.broadcast %107 : vector<1x128xf32> to vector<32x128xf32>
    %109 = arith.addf %105, %108 : vector<32x128xf32>
    %110 = arith.truncf %109 : vector<32x128xf32> to vector<32x128xbf16>
    %c0_41 = arith.constant 0 : index
    %c0_42 = arith.constant 0 : index
    %c0_43 = arith.constant 0 : index
    %111 = vector.load %arg13[%c0_41, %c0_42, %c0_43] : memref<1x128x512xbf16, #tpu.memory_space<vmem>>, vector<1x128x512xbf16>
    %112 = vector.shape_cast %111 : vector<1x128x512xbf16> to vector<128x512xbf16>
    %cst_44 = arith.constant dense<0.000000e+00> : vector<32x512xf32>
    %113 = tpu.matmul %110, %112, %cst_44 {dimension_numbers = #tpu.dot_dimension_numbers<[1], [0], [0], [1], [0, 0, 1, 1], [], []>} : vector<32x128xbf16>, vector<128x512xbf16>, vector<32x512xf32> -> vector<32x512xf32>
    %c0_45 = arith.constant 0 : index
    %c0_46 = arith.constant 0 : index
    %c0_47 = arith.constant 0 : index
    %114 = vector.load %arg14[%c0_45, %c0_46, %c0_47] : memref<1x1x512xf32, #tpu.memory_space<vmem>>, vector<1x1x512xf32>
    %115 = vector.shape_cast %114 : vector<1x1x512xf32> to vector<1x512xf32>
    %116 = vector.broadcast %115 : vector<1x512xf32> to vector<32x512xf32>
    %117 = arith.addf %113, %116 : vector<32x512xf32>
    %cst_48 = arith.constant 0.000000e+00 : f32
    %118 = vector.broadcast %cst_48 : f32 to vector<32x512xf32>
    %119 = arith.maximumf %117, %118 : vector<32x512xf32>
    %120 = arith.truncf %119 : vector<32x512xf32> to vector<32x512xbf16>
    %c0_49 = arith.constant 0 : index
    %c0_50 = arith.constant 0 : index
    %c0_51 = arith.constant 0 : index
    %121 = vector.load %arg15[%c0_49, %c0_50, %c0_51] : memref<1x512x128xbf16, #tpu.memory_space<vmem>>, vector<1x512x128xbf16>
    %122 = vector.shape_cast %121 : vector<1x512x128xbf16> to vector<512x128xbf16>
    %cst_52 = arith.constant dense<0.000000e+00> : vector<32x128xf32>
    %123 = tpu.matmul %120, %122, %cst_52 {dimension_numbers = #tpu.dot_dimension_numbers<[1], [0], [0], [1], [0, 0, 1, 1], [], []>} : vector<32x512xbf16>, vector<512x128xbf16>, vector<32x128xf32> -> vector<32x128xf32>
    %c0_53 = arith.constant 0 : index
    %c0_54 = arith.constant 0 : index
    %c0_55 = arith.constant 0 : index
    %124 = vector.load %arg16[%c0_53, %c0_54, %c0_55] : memref<1x1x128xf32, #tpu.memory_space<vmem>>, vector<1x1x128xf32>
    %125 = vector.shape_cast %124 : vector<1x1x128xf32> to vector<1x128xf32>
    %126 = vector.broadcast %125 : vector<1x128xf32> to vector<32x128xf32>
    %127 = arith.addf %123, %126 : vector<32x128xf32>
    %128 = arith.addf %109, %127 : vector<32x128xf32>
    %cst_56 = arith.constant dense<0.000000e+00> : vector<32xf32>
    %129 = vector.multi_reduction <add>, %128, %cst_56 [1] : vector<32x128xf32> to vector<32xf32>
    %130 = vector.shape_cast %129 : vector<32xf32> to vector<32x1xf32>
    %cst_57 = arith.constant 1.280000e+02 : f32
    %131 = vector.broadcast %cst_57 : f32 to vector<32x1xf32>
    %132 = arith.divf %130, %131 : vector<32x1xf32>
    %133 = vector.broadcast %132 : vector<32x1xf32> to vector<32x128xf32>
    %134 = arith.subf %128, %133 : vector<32x128xf32>
    %135 = arith.mulf %134, %134 : vector<32x128xf32>
    %cst_58 = arith.constant dense<0.000000e+00> : vector<32xf32>
    %136 = vector.multi_reduction <add>, %135, %cst_58 [1] : vector<32x128xf32> to vector<32xf32>
    %137 = vector.shape_cast %136 : vector<32xf32> to vector<32x1xf32>
    %cst_59 = arith.constant 1.280000e+02 : f32
    %138 = vector.broadcast %cst_59 : f32 to vector<32x1xf32>
    %139 = arith.divf %137, %138 : vector<32x1xf32>
    %140 = vector.broadcast %132 : vector<32x1xf32> to vector<32x128xf32>
    %141 = arith.subf %128, %140 : vector<32x128xf32>
    %cst_60 = arith.constant 9.99999974E-6 : f32
    %142 = vector.broadcast %cst_60 : f32 to vector<32x1xf32>
    %143 = arith.addf %139, %142 : vector<32x1xf32>
    %144 = math.rsqrt %143 : vector<32x1xf32>
    %145 = vector.broadcast %144 : vector<32x1xf32> to vector<32x128xf32>
    %146 = arith.mulf %141, %145 : vector<32x128xf32>
    %c0_61 = arith.constant 0 : index
    %c0_62 = arith.constant 0 : index
    %c0_63 = arith.constant 0 : index
    %147 = vector.load %arg17[%c0_61, %c0_62, %c0_63] : memref<1x1x128xf32, #tpu.memory_space<vmem>>, vector<1x1x128xf32>
    %148 = vector.shape_cast %147 : vector<1x1x128xf32> to vector<1x128xf32>
    %149 = vector.broadcast %148 : vector<1x128xf32> to vector<32x128xf32>
    %150 = arith.mulf %146, %149 : vector<32x128xf32>
    %c0_64 = arith.constant 0 : index
    %c0_65 = arith.constant 0 : index
    %c0_66 = arith.constant 0 : index
    %151 = vector.load %arg18[%c0_64, %c0_65, %c0_66] : memref<1x1x128xf32, #tpu.memory_space<vmem>>, vector<1x1x128xf32>
    %152 = vector.shape_cast %151 : vector<1x1x128xf32> to vector<1x128xf32>
    %153 = vector.broadcast %152 : vector<1x128xf32> to vector<32x128xf32>
    %154 = arith.addf %150, %153 : vector<32x128xf32>
    %c0_67 = arith.constant 0 : index
    %c0_68 = arith.constant 0 : index
    %155 = vector.load %arg22[%c0_67, %c0_68] : memref<32x128xf32, #tpu.memory_space<vmem>>, vector<32x128xf32>
    tpu.vector_store %arg22[%c0_67, %c0_68], %154 {strides = array<i32>} : memref<32x128xf32, #tpu.memory_space<vmem>>, vector<32x128xf32>,
    %c1_i32 = arith.constant 1 : i32
    %156 = arith.cmpi eq, %arg1, %c1_i32 : i32
    %157 = arith.extui %156 : i1 to i32
    %c0_i32_69 = arith.constant 0 : i32
    %158 = arith.cmpi ne, %157, %c0_i32_69 : i32
    scf.if %158 {
      %c0_70 = arith.constant 0 : index
      %c0_71 = arith.constant 0 : index
      %c0_72 = arith.constant 0 : index
      %159 = vector.load %arg4[%c0_70, %c0_71, %c0_72] : memref<1x1x32xf32, #tpu.memory_space<vmem>>, vector<1x1x32xf32>
      %160 = vector.shape_cast %159 : vector<1x1x32xf32> to vector<1x32xf32>
      %cst_73 = arith.constant dense<0.000000e+00> : vector<1x128xf32>
      %161 = tpu.matmul %160, %154, %cst_73 {dimension_numbers = #tpu.dot_dimension_numbers<[1], [0], [0], [1], [0, 0, 1, 1], [], []>} : vector<1x32xf32>, vector<32x128xf32>, vector<1x128xf32> -> vector<1x128xf32>
      %cst_74 = arith.constant dense<0.000000e+00> : vector<1xf32>
      %162 = vector.multi_reduction <add>, %160, %cst_74 [1] : vector<1x32xf32> to vector<1xf32>
      %163 = vector.shape_cast %162 : vector<1xf32> to vector<1x1xf32>
      %cst_75 = arith.constant 1.000000e+00 : f32
      %164 = vector.broadcast %cst_75 : f32 to vector<1x1xf32>
      %165 = arith.maximumf %163, %164 : vector<1x1xf32>
      %166 = vector.broadcast %165 : vector<1x1xf32> to vector<1x128xf32>
      %167 = arith.divf %161, %166 : vector<1x128xf32>
      %c0_76 = arith.constant 0 : index
      %c0_77 = arith.constant 0 : index
      %168 = vector.load %arg19[%c0_76, %c0_77] : memref<128x128xf32, #tpu.memory_space<vmem>>, vector<128x128xf32>
      %cst_78 = arith.constant dense<0.000000e+00> : vector<1x128xf32>
      %169 = tpu.matmul %167, %168, %cst_78 {dimension_numbers = #tpu.dot_dimension_numbers<[1], [0], [0], [1], [0, 0, 1, 1], [], []>} : vector<1x128xf32>, vector<128x128xf32>, vector<1x128xf32> -> vector<1x128xf32>
      %c0_79 = arith.constant 0 : index
      %c0_80 = arith.constant 0 : index
      %170 = vector.load %arg20[%c0_79, %c0_80] : memref<1x128xf32, #tpu.memory_space<vmem>>, vector<1x128xf32>
      %171 = arith.addf %169, %170 : vector<1x128xf32>
      %c0_81 = arith.constant 0 : index
      %c0_82 = arith.constant 0 : index
      %c0_83 = arith.constant 0 : index
      %172 = vector.load %arg21[%c0_81, %c0_82, %c0_83] : memref<1x1x128xf32, #tpu.memory_space<vmem>>, vector<1x1x128xf32>
      %173 = vector.shape_cast %172 : vector<1x1x128xf32> to vector<1x128xf32>
      %174 = vector.shape_cast %171 : vector<1x128xf32> to vector<1x1x128xf32>
      tpu.vector_store %arg21[%c0_81, %c0_82, %c0_83], %174 {strides = array<i32>} : memref<1x1x128xf32, #tpu.memory_space<vmem>>, vector<1x1x128xf32>,
    } else {
    }
    return
  }
  func.func @transform_0(%arg0: i32, %arg1: i32) -> (i32, i32, i32) {
    %c0_i32 = arith.constant 0 : i32
    %c0_i32_0 = arith.constant 0 : i32
    %c0_i32_1 = arith.constant 0 : i32
    return %arg0, %c0_i32, %c0_i32_0 : i32, i32, i32
  }
  func.func @transform_1(%arg0: i32, %arg1: i32) -> (i32, i32, i32) {
    %c0_i32 = arith.constant 0 : i32
    %c0_i32_0 = arith.constant 0 : i32
    %c0_i32_1 = arith.constant 0 : i32
    return %arg0, %c0_i32, %c0_i32_0 : i32, i32, i32
  }
  func.func @transform_2(%arg0: i32, %arg1: i32) -> (i32, i32, i32) {
    %c0_i32 = arith.constant 0 : i32
    %c0_i32_0 = arith.constant 0 : i32
    %c0_i32_1 = arith.constant 0 : i32
    return %arg0, %c0_i32, %c0_i32_0 : i32, i32, i32
  }
  func.func @transform_3(%arg0: i32, %arg1: i32) -> (i32, i32) {
    %c0_i32 = arith.constant 0 : i32
    %c0_i32_0 = arith.constant 0 : i32
    %c0_i32_1 = arith.constant 0 : i32
    return %c0_i32, %c0_i32_0 : i32, i32
  }
  func.func @transform_4(%arg0: i32, %arg1: i32) -> (i32, i32) {
    %c0_i32 = arith.constant 0 : i32
    %c0_i32_0 = arith.constant 0 : i32
    %c0_i32_1 = arith.constant 0 : i32
    return %c0_i32, %c0_i32_0 : i32, i32
  }
  func.func @transform_5(%arg0: i32, %arg1: i32) -> (i32, i32, i32) {
    %c0_i32 = arith.constant 0 : i32
    %c0_i32_0 = arith.constant 0 : i32
    %c0_i32_1 = arith.constant 0 : i32
    return %arg1, %c0_i32, %c0_i32_0 : i32, i32, i32
  }
  func.func @transform_6(%arg0: i32, %arg1: i32) -> (i32, i32, i32) {
    %c0_i32 = arith.constant 0 : i32
    %c0_i32_0 = arith.constant 0 : i32
    %c0_i32_1 = arith.constant 0 : i32
    return %arg1, %c0_i32, %c0_i32_0 : i32, i32, i32
  }
  func.func @transform_7(%arg0: i32, %arg1: i32) -> (i32, i32, i32) {
    %c0_i32 = arith.constant 0 : i32
    %c0_i32_0 = arith.constant 0 : i32
    %c0_i32_1 = arith.constant 0 : i32
    return %arg1, %c0_i32, %c0_i32_0 : i32, i32, i32
  }
  func.func @transform_8(%arg0: i32, %arg1: i32) -> (i32, i32, i32) {
    %c0_i32 = arith.constant 0 : i32
    %c0_i32_0 = arith.constant 0 : i32
    %c0_i32_1 = arith.constant 0 : i32
    return %arg1, %c0_i32, %c0_i32_0 : i32, i32, i32
  }
  func.func @transform_9(%arg0: i32, %arg1: i32) -> (i32, i32, i32) {
    %c0_i32 = arith.constant 0 : i32
    %c0_i32_0 = arith.constant 0 : i32
    %c0_i32_1 = arith.constant 0 : i32
    return %arg1, %c0_i32, %c0_i32_0 : i32, i32, i32
  }
  func.func @transform_10(%arg0: i32, %arg1: i32) -> (i32, i32, i32) {
    %c0_i32 = arith.constant 0 : i32
    %c0_i32_0 = arith.constant 0 : i32
    %c0_i32_1 = arith.constant 0 : i32
    return %arg1, %c0_i32, %c0_i32_0 : i32, i32, i32
  }
  func.func @transform_11(%arg0: i32, %arg1: i32) -> (i32, i32, i32) {
    %c0_i32 = arith.constant 0 : i32
    %c0_i32_0 = arith.constant 0 : i32
    %c0_i32_1 = arith.constant 0 : i32
    return %arg1, %c0_i32, %c0_i32_0 : i32, i32, i32
  }
  func.func @transform_12(%arg0: i32, %arg1: i32) -> (i32, i32, i32) {
    %c0_i32 = arith.constant 0 : i32
    %c0_i32_0 = arith.constant 0 : i32
    %c0_i32_1 = arith.constant 0 : i32
    return %arg1, %c0_i32, %c0_i32_0 : i32, i32, i32
  }
  func.func @transform_13(%arg0: i32, %arg1: i32) -> (i32, i32, i32) {
    %c0_i32 = arith.constant 0 : i32
    %c0_i32_0 = arith.constant 0 : i32
    %c0_i32_1 = arith.constant 0 : i32
    return %arg1, %c0_i32, %c0_i32_0 : i32, i32, i32
  }
  func.func @transform_14(%arg0: i32, %arg1: i32) -> (i32, i32, i32) {
    %c0_i32 = arith.constant 0 : i32
    %c0_i32_0 = arith.constant 0 : i32
    %c0_i32_1 = arith.constant 0 : i32
    return %arg1, %c0_i32, %c0_i32_0 : i32, i32, i32
  }
  func.func @transform_15(%arg0: i32, %arg1: i32) -> (i32, i32, i32) {
    %c0_i32 = arith.constant 0 : i32
    %c0_i32_0 = arith.constant 0 : i32
    %c0_i32_1 = arith.constant 0 : i32
    return %arg1, %c0_i32, %c0_i32_0 : i32, i32, i32
  }
  func.func @transform_16(%arg0: i32, %arg1: i32) -> (i32, i32, i32) {
    %c0_i32 = arith.constant 0 : i32
    %c0_i32_0 = arith.constant 0 : i32
    %c0_i32_1 = arith.constant 0 : i32
    return %arg1, %c0_i32, %c0_i32_0 : i32, i32, i32
  }
  func.func @transform_17(%arg0: i32, %arg1: i32) -> (i32, i32) {
    %c0_i32 = arith.constant 0 : i32
    %c0_i32_0 = arith.constant 0 : i32
    %c0_i32_1 = arith.constant 0 : i32
    return %c0_i32, %c0_i32_0 : i32, i32
  }
  func.func @transform_18(%arg0: i32, %arg1: i32) -> (i32, i32) {
    %c0_i32 = arith.constant 0 : i32
    %c0_i32_0 = arith.constant 0 : i32
    %c0_i32_1 = arith.constant 0 : i32
    return %c0_i32, %c0_i32_0 : i32, i32
  }
  func.func @transform_19(%arg0: i32, %arg1: i32) -> (i32, i32, i32) {
    %c0_i32 = arith.constant 0 : i32
    %c0_i32_0 = arith.constant 0 : i32
    %c0_i32_1 = arith.constant 0 : i32
    return %arg0, %c0_i32, %c0_i32_0 : i32, i32, i32
  }
}

</mosaic_0001>

<llo_original>
// kernel: tpu_custom_call.1
$region0: #{tpu_custom_call.1}
  #allocation0 [shape = 'u32[]', space=smem, size = 0x4, offset = 0x4, fixed_abs, tag = 'smem constant byte address 0x4 - core index']
  #allocation1 [shape = 'u32[144,128]{1,0:T(1,128)}', space=vmem, size = 0x12000, scoped, tag = 'internal scratch']
  #allocation2 [shape = 'f32[32,128]{1,0:T(8,128)}', space=vmem, size = 0x4000, scoped, tag = 'scratch operand']
  #allocation3 [shape = 'f32[32,128]{1,0:T(8,128)}', space=vmem, size = 0x4000, scoped, tag = 'scratch operand']
  %s0 = inlined_call_operand.vmem [shape: f32[2,32,4], index: 0, kind: input, shape index: {}]
  %s1 = inlined_call_operand.hbm [shape: f32[2,1,32], index: 1, kind: input, shape index: {}]
  %s2 = inlined_call_operand.hbm [shape: f32[2,1,32], index: 2, kind: input, shape index: {}]
  %s3 = inlined_call_operand.hbm [shape: f32[4,128], index: 3, kind: input, shape index: {}]
  %s4 = inlined_call_operand.hbm [shape: f32[1,128], index: 4, kind: input, shape index: {}]
  %s5 = inlined_call_operand.hbm [shape: bf16[2,128,384], index: 5, kind: input, shape index: {}]
  %s6 = inlined_call_operand.hbm [shape: f32[2,1,384], index: 6, kind: input, shape index: {}]
  %s7 = inlined_call_operand.hbm [shape: bf16[2,128,128], index: 7, kind: input, shape index: {}]
  %s8 = inlined_call_operand.hbm [shape: f32[2,1,128], index: 8, kind: input, shape index: {}]
  %s9 = inlined_call_operand.hbm [shape: f32[2,1,128], index: 9, kind: input, shape index: {}]
  %s10 = inlined_call_operand.hbm [shape: f32[2,1,128], index: 10, kind: input, shape index: {}]
  %s11 = inlined_call_operand.hbm [shape: bf16[2,128,512], index: 11, kind: input, shape index: {}]
  %s12 = inlined_call_operand.vmem [shape: f32[2,1,512], index: 12, kind: input, shape index: {}]
  %s13 = inlined_call_operand.hbm [shape: bf16[2,512,128], index: 13, kind: input, shape index: {}]
  %s14 = inlined_call_operand.hbm [shape: f32[2,1,128], index: 14, kind: input, shape index: {}]
  %s15 = inlined_call_operand.hbm [shape: f32[2,1,128], index: 15, kind: input, shape index: {}]
  %s16 = inlined_call_operand.hbm [shape: f32[2,1,128], index: 16, kind: input, shape index: {}]
  %s17 = inlined_call_operand.vmem [shape: f32[128,128], index: 17, kind: input, shape index: {}]
  %s18 = inlined_call_operand.vmem [shape: f32[1,128], index: 18, kind: input, shape index: {}]
  %s19 = inlined_call_operand.hbm [shape: f32[2,1,128], index: 19, kind: output, shape index: {}]
  %s20 = sld [smem:[#allocation0]]
  $region177: #{tpu_custom_call.1} parent=0
    _
  %s22 = ssub.s32 1, %s20
  %s23 = scalar_select 0, %s22, %s20
  $region1: #{tpu_custom_call.1} parent=0
    #allocation4 [shape = 'u8[1024]{0}', space=vmem, size = 0x400, scoped, tag = 'input window, operand 1']
    #allocation5 [shape = 's32[2]{0}', space=sflag, size = 0x8, scoped, tag = 'scoped memory for tpu_custom_call.1']
    #allocation6 [shape = 's32[2]{0}', space=sflag, size = 0x8, scoped, tag = 'scoped memory for tpu_custom_call.1']
    #allocation7 [shape = 'u8[1024]{0}', space=vmem, size = 0x400, scoped, tag = 'input window, operand 2']
    #allocation8 [shape = 's32[2]{0}', space=sflag, size = 0x8, scoped, tag = 'scoped memory for tpu_custom_call.1']
    #allocation9 [shape = 'u8[2048]{0}', space=vmem, size = 0x800, scoped, tag = 'input window, operand 3, single buffered']
    #allocation10 [shape = 'u8[512]{0}', space=vmem, size = 0x400, scoped, tag = 'input window, operand 4, single buffered']
    #allocation11 [shape = 's32[1]{0}', space=sflag, size = 0x4, scoped, tag = 'scoped memory for tpu_custom_call.1']
    #allocation12 [shape = 'u8[196608]{0}', space=vmem, size = 0x30000, scoped, tag = 'input window, operand 5']
    #allocation13 [shape = 'u8[3072]{0}', space=vmem, size = 0xc00, scoped, tag = 'input window, operand 6']
    #allocation14 [shape = 'u8[65536]{0}', space=vmem, size = 0x10000, scoped, tag = 'input window, operand 7']
    #allocation15 [shape = 'u8[1024]{0}', space=vmem, size = 0x400, scoped, tag = 'input window, operand 8']
    #allocation16 [shape = 'u8[1024]{0}', space=vmem, size = 0x400, scoped, tag = 'input window, operand 9']
    #allocation17 [shape = 'u8[1024]{0}', space=vmem, size = 0x400, scoped, tag = 'input window, operand 10']
    #allocation18 [shape = 'u8[262144]{0}', space=vmem, size = 0x40000, scoped, tag = 'input window, operand 11']
    #allocation19 [shape = 'u8[262144]{0}', space=vmem, size = 0x40000, scoped, tag = 'input window, operand 13']
    #allocation20 [shape = 'u8[1024]{0}', space=vmem, size = 0x400, scoped, tag = 'input window, operand 14']
    #allocation21 [shape = 'u8[1024]{0}', space=vmem, size = 0x400, scoped, tag = 'input window, operand 15']
    #allocation22 [shape = 'u8[1024]{0}', space=vmem, size = 0x400, scoped, tag = 'input window, operand 16']
    #allocation23 [shape = 'u8[1024]{0}', space=vmem, size = 0x400, scoped, tag = 'output window, operand 0']
    %24 = vsyncpa [#allocation5], 0
    %s25 = scalar_lea.sflag [#allocation5], 1
    %26 = vsyncpa %s25, 0
    %27 = vsyncpa [#allocation8], 0
    %s28 = scalar_lea.sflag [#allocation8], 1
    %29 = vsyncpa %s28, 0
    %30 = vsyncpa [#allocation11], 0
    %31 = vsyncpa [#allocation6], 0
    %s32 = scalar_lea.sflag [#allocation6], 1
    %33 = vsyncpa %s32, 0
    loop: start=0, step=1, limit=6
    $region2: #{tpu_custom_call.1} parent=1 // loop_pre_header
      _
    $region3: #{tpu_custom_call.1} parent=1 // loop_header
      %s35 = sphi 0, %s39
      %p36 = scmp.ge.s32.totalorder %s35, 6
      %s42 = sphi 0, %s54
      %s43 = sphi 0, %s50
      %s44 = sphi 0, %s42
      %s45 = sphi 0, %s43
      %s46 = sphi 0, %s44
      %s47 = sphi 0, %s45
      %s57 = sphi 0, %s59
      %s60 = sphi 0, %s57
      %s61 = sphi 0, %s60
      %s77 = sphi 0, %s61
      %s83 = sphi 0, %s85
      %s86 = sphi 0, %s83
      %s87 = sphi 0, %s86
      %s103 = sphi 0, %s87
      %s109 = sphi 0, %s111
      %s112 = sphi 0, %s109
      %s113 = sphi 0, %s112
      %s129 = sphi 0, %s113
      %s133 = sphi 0, %s133
      %s135 = sphi 0, %s133
      %s136 = sphi 0, %s135
      %s150 = sphi 0, %s136
      %s154 = sphi 0, %s154
      %s156 = sphi 0, %s154
      %s157 = sphi 0, %s156
      %s171 = sphi 0, %s157
      %s177 = sphi 0, %s179
      %s180 = sphi 0, %s177
      %s181 = sphi 0, %s180
      %s197 = sphi 0, %s181
      %s203 = sphi 0, %s205
      %s206 = sphi 0, %s203
      %s207 = sphi 0, %s206
      %s223 = sphi 0, %s207
      %s229 = sphi 0, %s231
      %s232 = sphi 0, %s229
      %s233 = sphi 0, %s232
      %s249 = sphi 0, %s233
      %s255 = sphi 0, %s257
      %s258 = sphi 0, %s255
      %s259 = sphi 0, %s258
      %s275 = sphi 0, %s259
      %s281 = sphi 0, %s283
      %s284 = sphi 0, %s281
      %s285 = sphi 0, %s284
      %s301 = sphi 0, %s285
      %s307 = sphi 0, %s309
      %s310 = sphi 0, %s307
      %s311 = sphi 0, %s310
      %s327 = sphi 0, %s311
      %s333 = sphi 0, %s335
      %s336 = sphi 0, %s333
      %s337 = sphi 0, %s336
      %s353 = sphi 0, %s337
      %s359 = sphi 0, %s361
      %s362 = sphi 0, %s359
      %s363 = sphi 0, %s362
      %s379 = sphi 0, %s363
      %s385 = sphi 0, %s387
      %s388 = sphi 0, %s385
      %s389 = sphi 0, %s388
      %s405 = sphi 0, %s389
      %s411 = sphi 0, %s413
      %s414 = sphi 0, %s411
      %s415 = sphi 0, %s414
      %s431 = sphi 0, %s415
      %s437 = sphi 0, %s439
      %s440 = sphi 0, %s437
      %s441 = sphi 0, %s440
      %s457 = sphi 0, %s441
      %s463 = sphi 0, %s465
      %s466 = sphi 0, %s463
      %s467 = sphi 0, %s466
      %s483 = sphi 0, %s467
      %s487 = sphi 0, %s487
      %s489 = sphi 0, %s487
      %s490 = sphi 0, %s489
      %s504 = sphi 0, %s490
      %s508 = sphi 0, %s508
      %s510 = sphi 0, %s508
      %s511 = sphi 0, %s510
      %s525 = sphi 0, %s511
      %s531 = sphi 0, %s533
      %s534 = sphi 0, %s531
      %s535 = sphi 0, %s534
      %s551 = sphi 0, %s535
    $region4: #{tpu_custom_call.1} parent=1 // loop_header_branch
      %38 = sbr.rel (%p36) target = $region8
    $region5: #{tpu_custom_call.1} parent=1 // loop_body
      %s40 = ssub.s32 %s35, 1
      %s41 = ssub.s32 %s35, 2
      %s48 = sadd.s32 1, %s43
      %p49 = scmp.ge.s32.totalorder %s48, 2
      %s50 = scalar_select %p49, 0, %s48
      %s51 = sadd.s32 1, %s42
      %s52 = scalar_select %p49, %s51, %s42
      %p53 = scmp.ge.s32.totalorder %s52, 2
      %s54 = scalar_select %p53, 0, %s52
      %s55 = ssub.s32 %s42, %s54
      %p56 = scmp.eq.s32.totalorder %s55, 0
      %s58 = sadd.s32 %s57, 1
      %s59 = scalar_select %p56, %s57, %s58
      %p62 = pneg %p56
      %p63 = scmp.eq.s32.totalorder %s35, 3
      %p64 = por %p62, %p63
      %p65 = scmp.ne.s32.totalorder %s57, %s60
      %p66 = scmp.eq.s32.totalorder %s35, 0
      %p67 = por %p65, %p66
      %p68 = scmp.ne.s32.totalorder %s57, %s60
      %p69 = scmp.eq.s32.totalorder %s40, 3
      %p70 = por %p68, %p69
      %p71 = scmp.ne.s32.totalorder %s60, %s61
      %p72 = scmp.eq.s32.totalorder %s40, 0
      %p73 = por %p71, %p72
      %p74 = scmp.ne.s32.totalorder %s60, %s61
      %p75 = scmp.eq.s32.totalorder %s41, 3
      %p76 = por %p74, %p75
      %p78 = scmp.ne.s32.totalorder %s61, %s77
      %p79 = scmp.eq.s32.totalorder %s41, 0
      %p80 = por %p78, %p79
      %s81 = ssub.s32 %s42, %s54
      %p82 = scmp.eq.s32.totalorder %s81, 0
      %s84 = sadd.s32 %s83, 1
      %s85 = scalar_select %p82, %s83, %s84
      %p88 = pneg %p82
      %p89 = scmp.eq.s32.totalorder %s35, 3
      %p90 = por %p88, %p89
      %p91 = scmp.ne.s32.totalorder %s83, %s86
      %p92 = scmp.eq.s32.totalorder %s35, 0
      %p93 = por %p91, %p92
      %p94 = scmp.ne.s32.totalorder %s83, %s86
      %p95 = scmp.eq.s32.totalorder %s40, 3
      %p96 = por %p94, %p95
      %p97 = scmp.ne.s32.totalorder %s86, %s87
      %p98 = scmp.eq.s32.totalorder %s40, 0
      %p99 = por %p97, %p98
      %p100 = scmp.ne.s32.totalorder %s86, %s87
      %p101 = scmp.eq.s32.totalorder %s41, 3
      %p102 = por %p100, %p101
      %p104 = scmp.ne.s32.totalorder %s87, %s103
      %p105 = scmp.eq.s32.totalorder %s41, 0
      %p106 = por %p104, %p105
      %s107 = ssub.s32 %s42, %s54
      %p108 = scmp.eq.s32.totalorder %s107, 0
      %s110 = sadd.s32 %s109, 1
      %s111 = scalar_select %p108, %s109, %s110
      %p114 = pneg %p108
      %p115 = scmp.eq.s32.totalorder %s35, 3
      %p116 = por %p114, %p115
      %p117 = scmp.ne.s32.totalorder %s109, %s112
      %p118 = scmp.eq.s32.totalorder %s35, 0
      %p119 = por %p117, %p118
      %p120 = scmp.ne.s32.totalorder %s109, %s112
      %p121 = scmp.eq.s32.totalorder %s40, 3
      %p122 = por %p120, %p121
      %p123 = scmp.ne.s32.totalorder %s112, %s113
      %p124 = scmp.eq.s32.totalorder %s40, 0
      %p125 = por %p123, %p124
      %p126 = scmp.ne.s32.totalorder %s112, %s113
      %p127 = scmp.eq.s32.totalorder %s41, 3
      %p128 = por %p126, %p127
      %p130 = scmp.ne.s32.totalorder %s113, %s129
      %p131 = scmp.eq.s32.totalorder %s41, 0
      %p132 = por %p130, %p131
      %s134 = sadd.s32 %s133, 1
      %p137 = scmp.eq.s32.totalorder %s35, 3
      %p138 = scmp.ne.s32.totalorder %s133, %s135
      %p139 = scmp.eq.s32.totalorder %s35, 0
      %p140 = por %p138, %p139
      %p141 = scmp.ne.s32.totalorder %s133, %s135
      %p142 = scmp.eq.s32.totalorder %s40, 3
      %p143 = por %p141, %p142
      %p144 = scmp.ne.s32.totalorder %s135, %s136
      %p145 = scmp.eq.s32.totalorder %s40, 0
      %p146 = por %p144, %p145
      %p147 = scmp.ne.s32.totalorder %s135, %s136
      %p148 = scmp.eq.s32.totalorder %s41, 3
      %p149 = por %p147, %p148
      %p151 = scmp.ne.s32.totalorder %s136, %s150
      %p152 = scmp.eq.s32.totalorder %s41, 0
      %p153 = por %p151, %p152
      %s155 = sadd.s32 %s154, 1
      %p158 = scmp.eq.s32.totalorder %s35, 3
      %p159 = scmp.ne.s32.totalorder %s154, %s156
      %p160 = scmp.eq.s32.totalorder %s35, 0
      %p161 = por %p159, %p160
      %p162 = scmp.ne.s32.totalorder %s154, %s156
      %p163 = scmp.eq.s32.totalorder %s40, 3
      %p164 = por %p162, %p163
      %p165 = scmp.ne.s32.totalorder %s156, %s157
      %p166 = scmp.eq.s32.totalorder %s40, 0
      %p167 = por %p165, %p166
      %p168 = scmp.ne.s32.totalorder %s156, %s157
      %p169 = scmp.eq.s32.totalorder %s41, 3
      %p170 = por %p168, %p169
      %p172 = scmp.ne.s32.totalorder %s157, %s171
      %p173 = scmp.eq.s32.totalorder %s41, 0
      %p174 = por %p172, %p173
      %s175 = ssub.s32 %s43, %s50
      %p176 = scmp.eq.s32.totalorder %s175, 0
      %s178 = sadd.s32 %s177, 1
      %s179 = scalar_select %p176, %s177, %s178
      %p182 = pneg %p176
      %p183 = scmp.eq.s32.totalorder %s35, 3
      %p184 = por %p182, %p183
      %p185 = scmp.ne.s32.totalorder %s177, %s180
      %p186 = scmp.eq.s32.totalorder %s35, 0
      %p187 = por %p185, %p186
      %p188 = scmp.ne.s32.totalorder %s177, %s180
      %p189 = scmp.eq.s32.totalorder %s40, 3
      %p190 = por %p188, %p189
      %p191 = scmp.ne.s32.totalorder %s180, %s181
      %p192 = scmp.eq.s32.totalorder %s40, 0
      %p193 = por %p191, %p192
      %p194 = scmp.ne.s32.totalorder %s180, %s181
      %p195 = scmp.eq.s32.totalorder %s41, 3
      %p196 = por %p194, %p195
      %p198 = scmp.ne.s32.totalorder %s181, %s197
      %p199 = scmp.eq.s32.totalorder %s41, 0
      %p200 = por %p198, %p199
      %s201 = ssub.s32 %s43, %s50
      %p202 = scmp.eq.s32.totalorder %s201, 0
      %s204 = sadd.s32 %s203, 1
      %s205 = scalar_select %p202, %s203, %s204
      %p208 = pneg %p202
      %p209 = scmp.eq.s32.totalorder %s35, 3
      %p210 = por %p208, %p209
      %p211 = scmp.ne.s32.totalorder %s203, %s206
      %p212 = scmp.eq.s32.totalorder %s35, 0
      %p213 = por %p211, %p212
      %p214 = scmp.ne.s32.totalorder %s203, %s206
      %p215 = scmp.eq.s32.totalorder %s40, 3
      %p216 = por %p214, %p215
      %p217 = scmp.ne.s32.totalorder %s206, %s207
      %p218 = scmp.eq.s32.totalorder %s40, 0
      %p219 = por %p217, %p218
      %p220 = scmp.ne.s32.totalorder %s206, %s207
      %p221 = scmp.eq.s32.totalorder %s41, 3
      %p222 = por %p220, %p221
      %p224 = scmp.ne.s32.totalorder %s207, %s223
      %p225 = scmp.eq.s32.totalorder %s41, 0
      %p226 = por %p224, %p225
      %s227 = ssub.s32 %s43, %s50
      %p228 = scmp.eq.s32.totalorder %s227, 0
      %s230 = sadd.s32 %s229, 1
      %s231 = scalar_select %p228, %s229, %s230
      %p234 = pneg %p228
      %p235 = scmp.eq.s32.totalorder %s35, 3
      %p236 = por %p234, %p235
      %p237 = scmp.ne.s32.totalorder %s229, %s232
      %p238 = scmp.eq.s32.totalorder %s35, 0
      %p239 = por %p237, %p238
      %p240 = scmp.ne.s32.totalorder %s229, %s232
      %p241 = scmp.eq.s32.totalorder %s40, 3
      %p242 = por %p240, %p241
      %p243 = scmp.ne.s32.totalorder %s232, %s233
      %p244 = scmp.eq.s32.totalorder %s40, 0
      %p245 = por %p243, %p244
      %p246 = scmp.ne.s32.totalorder %s232, %s233
      %p247 = scmp.eq.s32.totalorder %s41, 3
      %p248 = por %p246, %p247
      %p250 = scmp.ne.s32.totalorder %s233, %s249
      %p251 = scmp.eq.s32.totalorder %s41, 0
      %p252 = por %p250, %p251
      %s253 = ssub.s32 %s43, %s50
      %p254 = scmp.eq.s32.totalorder %s253, 0
      %s256 = sadd.s32 %s255, 1
      %s257 = scalar_select %p254, %s255, %s256
      %p260 = pneg %p254
      %p261 = scmp.eq.s32.totalorder %s35, 3
      %p262 = por %p260, %p261
      %p263 = scmp.ne.s32.totalorder %s255, %s258
      %p264 = scmp.eq.s32.totalorder %s35, 0
      %p265 = por %p263, %p264
      %p266 = scmp.ne.s32.totalorder %s255, %s258
      %p267 = scmp.eq.s32.totalorder %s40, 3
      %p268 = por %p266, %p267
      %p269 = scmp.ne.s32.totalorder %s258, %s259
      %p270 = scmp.eq.s32.totalorder %s40, 0
      %p271 = por %p269, %p270
      %p272 = scmp.ne.s32.totalorder %s258, %s259
      %p273 = scmp.eq.s32.totalorder %s41, 3
      %p274 = por %p272, %p273
      %p276 = scmp.ne.s32.totalorder %s259, %s275
      %p277 = scmp.eq.s32.totalorder %s41, 0
      %p278 = por %p276, %p277
      %s279 = ssub.s32 %s43, %s50
      %p280 = scmp.eq.s32.totalorder %s279, 0
      %s282 = sadd.s32 %s281, 1
      %s283 = scalar_select %p280, %s281, %s282
      %p286 = pneg %p280
      %p287 = scmp.eq.s32.totalorder %s35, 3
      %p288 = por %p286, %p287
      %p289 = scmp.ne.s32.totalorder %s281, %s284
      %p290 = scmp.eq.s32.totalorder %s35, 0
      %p291 = por %p289, %p290
      %p292 = scmp.ne.s32.totalorder %s281, %s284
      %p293 = scmp.eq.s32.totalorder %s40, 3
      %p294 = por %p292, %p293
      %p295 = scmp.ne.s32.totalorder %s284, %s285
      %p296 = scmp.eq.s32.totalorder %s40, 0
      %p297 = por %p295, %p296
      %p298 = scmp.ne.s32.totalorder %s284, %s285
      %p299 = scmp.eq.s32.totalorder %s41, 3
      %p300 = por %p298, %p299
      %p302 = scmp.ne.s32.totalorder %s285, %s301
      %p303 = scmp.eq.s32.totalorder %s41, 0
      %p304 = por %p302, %p303
      %s305 = ssub.s32 %s43, %s50
      %p306 = scmp.eq.s32.totalorder %s305, 0
      %s308 = sadd.s32 %s307, 1
      %s309 = scalar_select %p306, %s307, %s308
      %p312 = pneg %p306
      %p313 = scmp.eq.s32.totalorder %s35, 3
      %p314 = por %p312, %p313
      %p315 = scmp.ne.s32.totalorder %s307, %s310
      %p316 = scmp.eq.s32.totalorder %s35, 0
      %p317 = por %p315, %p316
      %p318 = scmp.ne.s32.totalorder %s307, %s310
      %p319 = scmp.eq.s32.totalorder %s40, 3
      %p320 = por %p318, %p319
      %p321 = scmp.ne.s32.totalorder %s310, %s311
      %p322 = scmp.eq.s32.totalorder %s40, 0
      %p323 = por %p321, %p322
      %p324 = scmp.ne.s32.totalorder %s310, %s311
      %p325 = scmp.eq.s32.totalorder %s41, 3
      %p326 = por %p324, %p325
      %p328 = scmp.ne.s32.totalorder %s311, %s327
      %p329 = scmp.eq.s32.totalorder %s41, 0
      %p330 = por %p328, %p329
      %s331 = ssub.s32 %s43, %s50
      %p332 = scmp.eq.s32.totalorder %s331, 0
      %s334 = sadd.s32 %s333, 1
      %s335 = scalar_select %p332, %s333, %s334
      %p338 = pneg %p332
      %p339 = scmp.eq.s32.totalorder %s35, 3
      %p340 = por %p338, %p339
      %p341 = scmp.ne.s32.totalorder %s333, %s336
      %p342 = scmp.eq.s32.totalorder %s35, 0
      %p343 = por %p341, %p342
      %p344 = scmp.ne.s32.totalorder %s333, %s336
      %p345 = scmp.eq.s32.totalorder %s40, 3
      %p346 = por %p344, %p345
      %p347 = scmp.ne.s32.totalorder %s336, %s337
      %p348 = scmp.eq.s32.totalorder %s40, 0
      %p349 = por %p347, %p348
      %p350 = scmp.ne.s32.totalorder %s336, %s337
      %p351 = scmp.eq.s32.totalorder %s41, 3
      %p352 = por %p350, %p351
      %p354 = scmp.ne.s32.totalorder %s337, %s353
      %p355 = scmp.eq.s32.totalorder %s41, 0
      %p356 = por %p354, %p355
      %s357 = ssub.s32 %s43, %s50
      %p358 = scmp.eq.s32.totalorder %s357, 0
      %s360 = sadd.s32 %s359, 1
      %s361 = scalar_select %p358, %s359, %s360
      %p364 = pneg %p358
      %p365 = scmp.eq.s32.totalorder %s35, 3
      %p366 = por %p364, %p365
      %p367 = scmp.ne.s32.totalorder %s359, %s362
      %p368 = scmp.eq.s32.totalorder %s35, 0
      %p369 = por %p367, %p368
      %p370 = scmp.ne.s32.totalorder %s359, %s362
      %p371 = scmp.eq.s32.totalorder %s40, 3
      %p372 = por %p370, %p371
      %p373 = scmp.ne.s32.totalorder %s362, %s363
      %p374 = scmp.eq.s32.totalorder %s40, 0
      %p375 = por %p373, %p374
      %p376 = scmp.ne.s32.totalorder %s362, %s363
      %p377 = scmp.eq.s32.totalorder %s41, 3
      %p378 = por %p376, %p377
      %p380 = scmp.ne.s32.totalorder %s363, %s379
      %p381 = scmp.eq.s32.totalorder %s41, 0
      %p382 = por %p380, %p381
      %s383 = ssub.s32 %s43, %s50
      %p384 = scmp.eq.s32.totalorder %s383, 0
      %s386 = sadd.s32 %s385, 1
      %s387 = scalar_select %p384, %s385, %s386
      %p390 = pneg %p384
      %p391 = scmp.eq.s32.totalorder %s35, 3
      %p392 = por %p390, %p391
      %p393 = scmp.ne.s32.totalorder %s385, %s388
      %p394 = scmp.eq.s32.totalorder %s35, 0
      %p395 = por %p393, %p394
      %p396 = scmp.ne.s32.totalorder %s385, %s388
      %p397 = scmp.eq.s32.totalorder %s40, 3
      %p398 = por %p396, %p397
      %p399 = scmp.ne.s32.totalorder %s388, %s389
      %p400 = scmp.eq.s32.totalorder %s40, 0
      %p401 = por %p399, %p400
      %p402 = scmp.ne.s32.totalorder %s388, %s389
      %p403 = scmp.eq.s32.totalorder %s41, 3
      %p404 = por %p402, %p403
      %p406 = scmp.ne.s32.totalorder %s389, %s405
      %p407 = scmp.eq.s32.totalorder %s41, 0
      %p408 = por %p406, %p407
      %s409 = ssub.s32 %s43, %s50
      %p410 = scmp.eq.s32.totalorder %s409, 0
      %s412 = sadd.s32 %s411, 1
      %s413 = scalar_select %p410, %s411, %s412
      %p416 = pneg %p410
      %p417 = scmp.eq.s32.totalorder %s35, 3
      %p418 = por %p416, %p417
      %p419 = scmp.ne.s32.totalorder %s411, %s414
      %p420 = scmp.eq.s32.totalorder %s35, 0
      %p421 = por %p419, %p420
      %p422 = scmp.ne.s32.totalorder %s411, %s414
      %p423 = scmp.eq.s32.totalorder %s40, 3
      %p424 = por %p422, %p423
      %p425 = scmp.ne.s32.totalorder %s414, %s415
      %p426 = scmp.eq.s32.totalorder %s40, 0
      %p427 = por %p425, %p426
      %p428 = scmp.ne.s32.totalorder %s414, %s415
      %p429 = scmp.eq.s32.totalorder %s41, 3
      %p430 = por %p428, %p429
      %p432 = scmp.ne.s32.totalorder %s415, %s431
      %p433 = scmp.eq.s32.totalorder %s41, 0
      %p434 = por %p432, %p433
      %s435 = ssub.s32 %s43, %s50
      %p436 = scmp.eq.s32.totalorder %s435, 0
      %s438 = sadd.s32 %s437, 1
      %s439 = scalar_select %p436, %s437, %s438
      %p442 = pneg %p436
      %p443 = scmp.eq.s32.totalorder %s35, 3
      %p444 = por %p442, %p443
      %p445 = scmp.ne.s32.totalorder %s437, %s440
      %p446 = scmp.eq.s32.totalorder %s35, 0
      %p447 = por %p445, %p446
      %p448 = scmp.ne.s32.totalorder %s437, %s440
      %p449 = scmp.eq.s32.totalorder %s40, 3
      %p450 = por %p448, %p449
      %p451 = scmp.ne.s32.totalorder %s440, %s441
      %p452 = scmp.eq.s32.totalorder %s40, 0
      %p453 = por %p451, %p452
      %p454 = scmp.ne.s32.totalorder %s440, %s441
      %p455 = scmp.eq.s32.totalorder %s41, 3
      %p456 = por %p454, %p455
      %p458 = scmp.ne.s32.totalorder %s441, %s457
      %p459 = scmp.eq.s32.totalorder %s41, 0
      %p460 = por %p458, %p459
      %s461 = ssub.s32 %s43, %s50
      %p462 = scmp.eq.s32.totalorder %s461, 0
      %s464 = sadd.s32 %s463, 1
      %s465 = scalar_select %p462, %s463, %s464
      %p468 = pneg %p462
      %p469 = scmp.eq.s32.totalorder %s35, 3
      %p470 = por %p468, %p469
      %p471 = scmp.ne.s32.totalorder %s463, %s466
      %p472 = scmp.eq.s32.totalorder %s35, 0
      %p473 = por %p471, %p472
      %p474 = scmp.ne.s32.totalorder %s463, %s466
      %p475 = scmp.eq.s32.totalorder %s40, 3
      %p476 = por %p474, %p475
      %p477 = scmp.ne.s32.totalorder %s466, %s467
      %p478 = scmp.eq.s32.totalorder %s40, 0
      %p479 = por %p477, %p478
      %p480 = scmp.ne.s32.totalorder %s466, %s467
      %p481 = scmp.eq.s32.totalorder %s41, 3
      %p482 = por %p480, %p481
      %p484 = scmp.ne.s32.totalorder %s467, %s483
      %p485 = scmp.eq.s32.totalorder %s41, 0
      %p486 = por %p484, %p485
      %s488 = sadd.s32 %s487, 1
      %p491 = scmp.eq.s32.totalorder %s35, 3
      %p492 = scmp.ne.s32.totalorder %s487, %s489
      %p493 = scmp.eq.s32.totalorder %s35, 0
      %p494 = por %p492, %p493
      %p495 = scmp.ne.s32.totalorder %s487, %s489
      %p496 = scmp.eq.s32.totalorder %s40, 3
      %p497 = por %p495, %p496
      %p498 = scmp.ne.s32.totalorder %s489, %s490
      %p499 = scmp.eq.s32.totalorder %s40, 0
      %p500 = por %p498, %p499
      %p501 = scmp.ne.s32.totalorder %s489, %s490
      %p502 = scmp.eq.s32.totalorder %s41, 3
      %p503 = por %p501, %p502
      %p505 = scmp.ne.s32.totalorder %s490, %s504
      %p506 = scmp.eq.s32.totalorder %s41, 0
      %p507 = por %p505, %p506
      %s509 = sadd.s32 %s508, 1
      %p512 = scmp.eq.s32.totalorder %s35, 3
      %p513 = scmp.ne.s32.totalorder %s508, %s510
      %p514 = scmp.eq.s32.totalorder %s35, 0
      %p515 = por %p513, %p514
      %p516 = scmp.ne.s32.totalorder %s508, %s510
      %p517 = scmp.eq.s32.totalorder %s40, 3
      %p518 = por %p516, %p517
      %p519 = scmp.ne.s32.totalorder %s510, %s511
      %p520 = scmp.eq.s32.totalorder %s40, 0
      %p521 = por %p519, %p520
      %p522 = scmp.ne.s32.totalorder %s510, %s511
      %p523 = scmp.eq.s32.totalorder %s41, 3
      %p524 = por %p522, %p523
      %p526 = scmp.ne.s32.totalorder %s511, %s525
      %p527 = scmp.eq.s32.totalorder %s41, 0
      %p528 = por %p526, %p527
      %s529 = ssub.s32 %s42, %s54
      %p530 = scmp.eq.s32.totalorder %s529, 0
      %s532 = sadd.s32 %s531, 1
      %s533 = scalar_select %p530, %s531, %s532
      %p536 = pneg %p530
      %p537 = scmp.eq.s32.totalorder %s35, 3
      %p538 = por %p536, %p537
      %p539 = scmp.ne.s32.totalorder %s531, %s534
      %p540 = scmp.eq.s32.totalorder %s35, 0
      %p541 = por %p539, %p540
      %p542 = scmp.ne.s32.totalorder %s531, %s534
      %p543 = scmp.eq.s32.totalorder %s40, 3
      %p544 = por %p542, %p543
      %p545 = scmp.ne.s32.totalorder %s534, %s535
      %p546 = scmp.eq.s32.totalorder %s40, 0
      %p547 = por %p545, %p546
      %p548 = scmp.ne.s32.totalorder %s534, %s535
      %p549 = scmp.eq.s32.totalorder %s41, 3
      %p550 = por %p548, %p549
      %p552 = scmp.ne.s32.totalorder %s535, %s551
      %p553 = scmp.eq.s32.totalorder %s41, 0
      %p554 = por %p552, %p553
      %p555 = scmp.le.s32.totalorder 1, %s35
      %p556 = scmp.lt.s32.totalorder %s35, 5
      %p557 = pnand %p555, %p556
      %p558 = pneg %p557
      // Predicated region
      $region9: #{tpu_custom_call.1} parent=5 // pred_check
        _
      $region10: #{tpu_custom_call.1} parent=5 // pred_check_branch
        %560 = sbr.rel (%p557) target = $region12
      $region11: #{tpu_custom_call.1} parent=5 // pred_region
        %s561 = ssub.s32 %s35, 1
        // Predicated region
        $region13: #{tpu_custom_call.1} parent=11 // pred_check
          %p562 = pneg %p146
        $region14: #{tpu_custom_call.1} parent=11 // pred_check_branch
          %564 = sbr.rel (%p562) target = $region16
        $region15: #{tpu_custom_call.1} parent=11 // pred_region
          %s566 = ssub.s32 64, 64
          %567 = vsyncadd [#allocation8], %s566
          %s569 = sshll.u32 [#allocation9], 4
          %s570 = int_to_ptr.vmem [resolvable:$true] %s569
          %572 = dma.hbm_to_vmem [thread:$0]  %s3, 64, %s570, [#allocation8]
        $region16: #{tpu_custom_call.1} parent=11 // pred_fallthru
          _
        // Predicated region
        $region17: #{tpu_custom_call.1} parent=11 // pred_check
          %p573 = pneg %p167
        $region18: #{tpu_custom_call.1} parent=11 // pred_check_branch
          %575 = sbr.rel (%p573) target = $region20
        $region19: #{tpu_custom_call.1} parent=11 // pred_region
          %s577 = ssub.s32 16, 16
          %578 = vsyncadd [#allocation11], %s577
          %s580 = sshll.u32 [#allocation10], 4
          %s581 = int_to_ptr.vmem [resolvable:$true] %s580
          %583 = dma.hbm_to_vmem [thread:$0]  %s4, 16, %s581, [#allocation11]
        $region20: #{tpu_custom_call.1} parent=11 // pred_fallthru
          _
        // Predicated region
        $region21: #{tpu_custom_call.1} parent=11 // pred_check
          %p584 = pneg %p500
        $region22: #{tpu_custom_call.1} parent=11 // pred_check_branch
          %586 = sbr.rel (%p584) target = $region24
        $region23: #{tpu_custom_call.1} parent=11 // pred_region
          _
        $region24: #{tpu_custom_call.1} parent=11 // pred_fallthru
          _
        // Predicated region
        $region25: #{tpu_custom_call.1} parent=11 // pred_check
          %p587 = pneg %p521
        $region26: #{tpu_custom_call.1} parent=11 // pred_check_branch
          %589 = sbr.rel (%p587) target = $region28
        $region27: #{tpu_custom_call.1} parent=11 // pred_region
          _
        $region28: #{tpu_custom_call.1} parent=11 // pred_fallthru
          _
      $region12: #{tpu_custom_call.1} parent=5 // pred_fallthru
        _
      %p590 = scmp.lt.s32.totalorder %s35, 4
      // Predicated region
      $region29: #{tpu_custom_call.1} parent=5 // pred_check
        %p591 = pneg %p590
      $region30: #{tpu_custom_call.1} parent=5 // pred_check_branch
        %593 = sbr.rel (%p591) target = $region32
      $region31: #{tpu_custom_call.1} parent=5 // pred_region
        // Predicated region
        $region33: #{tpu_custom_call.1} parent=31 // pred_check
          %p594 = pneg %p67
        $region34: #{tpu_custom_call.1} parent=31 // pred_check_branch
          %596 = sbr.rel (%p594) target = $region36
        $region35: #{tpu_custom_call.1} parent=31 // pred_region
          %p597 = scmp.lt.s32.totalorder %s42, 1
          %s598 = scalar_select %p597, %s42, 1
          %s599 = smul.addr %s598, 4
          %s600 = smul.addr %s599, 8
          %s601 = scalar_lea.vmem %s0, %s600
        $region36: #{tpu_custom_call.1} parent=31 // pred_fallthru
          _
        // Predicated region
        $region37: #{tpu_custom_call.1} parent=31 // pred_check
          %p602 = pneg %p93
        $region38: #{tpu_custom_call.1} parent=31 // pred_check_branch
          %604 = sbr.rel (%p602) target = $region40
        $region39: #{tpu_custom_call.1} parent=31 // pred_region
          %s605 = sand.u32 %s35, 1
          %s606 = scalar_lea.sflag [#allocation5], %s605
          %s607 = sand.u32 %s83, 1
          %s608 = scalar_lea.vmem [#allocation4], %s607
          %s610 = ssub.s32 16, 16
          %611 = vsyncadd %s606, %s610
          %s612 = smul.addr %s42, 16
          %s613 = scalar_lea.hbm %s1, %s612
          %s615 = sshll.u32 %s608, 4
          %s616 = int_to_ptr.vmem [resolvable:$true] %s615
          %618 = dma.hbm_to_vmem [thread:$0]  %s613, 16, %s616, %s606
        $region40: #{tpu_custom_call.1} parent=31 // pred_fallthru
          _
        // Predicated region
        $region41: #{tpu_custom_call.1} parent=31 // pred_check
          %p619 = pneg %p119
        $region42: #{tpu_custom_call.1} parent=31 // pred_check_branch
          %621 = sbr.rel (%p619) target = $region44
        $region43: #{tpu_custom_call.1} parent=31 // pred_region
          %s622 = sand.u32 %s35, 1
          %s623 = scalar_lea.sflag [#allocation8], %s622
          %s624 = sand.u32 %s109, 1
          %s625 = scalar_lea.vmem [#allocation7], %s624
          %s627 = ssub.s32 16, 16
          %628 = vsyncadd %s623, %s627
          %s629 = smul.addr %s42, 16
          %s630 = scalar_lea.hbm %s2, %s629
          %s632 = sshll.u32 %s625, 4
          %s633 = int_to_ptr.vmem [resolvable:$true] %s632
          %635 = dma.hbm_to_vmem [thread:$0]  %s630, 16, %s633, %s623
        $region44: #{tpu_custom_call.1} parent=31 // pred_fallthru
          _
        // Predicated region
        $region45: #{tpu_custom_call.1} parent=31 // pred_check
          %p636 = pneg %p187
        $region46: #{tpu_custom_call.1} parent=31 // pred_check_branch
          %638 = sbr.rel (%p636) target = $region48
        $region47: #{tpu_custom_call.1} parent=31 // pred_region
          %s639 = sand.u32 %s35, 1
          %s640 = scalar_lea.sflag [#allocation5], %s639
          %s641 = sand.u32 %s177, 1
          %s642 = smul.addr %s641, 192
          %s643 = scalar_lea.vmem [#allocation12], %s642
          %s645 = ssub.s32 3072, 3072
          %646 = vsyncadd %s640, %s645
          %s647 = smul.addr %s43, 48
          %s648 = smul.addr %s647, 64
          %s649 = scalar_lea.hbm %s5, %s648
          %s650 = sshll.u32 %s643, 4
          %s651 = int_to_ptr.vmem [resolvable:$true] %s650
          %656 = dma.hbm_to_vmem [thread:$0]  %s649, 3072, %s651, %s640, 192, 192, 12
        $region48: #{tpu_custom_call.1} parent=31 // pred_fallthru
          _
        // Predicated region
        $region49: #{tpu_custom_call.1} parent=31 // pred_check
          %p657 = pneg %p213
        $region50: #{tpu_custom_call.1} parent=31 // pred_check_branch
          %659 = sbr.rel (%p657) target = $region52
        $region51: #{tpu_custom_call.1} parent=31 // pred_region
          %s660 = sand.u32 %s35, 1
          %s661 = scalar_lea.sflag [#allocation8], %s660
          %s662 = sand.u32 %s203, 1
          %s663 = smul.addr %s662, 3
          %s664 = scalar_lea.vmem [#allocation13], %s663
          %s666 = ssub.s32 48, 48
          %667 = vsyncadd %s661, %s666
          %s668 = smul.addr %s43, 3
          %s669 = smul.addr %s668, 16
          %s670 = scalar_lea.hbm %s6, %s669
          %s672 = sshll.u32 %s664, 4
          %s673 = int_to_ptr.vmem [resolvable:$true] %s672
          %675 = dma.hbm_to_vmem [thread:$0]  %s670, 48, %s673, %s661
        $region52: #{tpu_custom_call.1} parent=31 // pred_fallthru
          _
        // Predicated region
        $region53: #{tpu_custom_call.1} parent=31 // pred_check
          %p676 = pneg %p239
        $region54: #{tpu_custom_call.1} parent=31 // pred_check_branch
          %678 = sbr.rel (%p676) target = $region56
        $region55: #{tpu_custom_call.1} parent=31 // pred_region
          %s679 = sand.u32 %s35, 1
          %s680 = scalar_lea.sflag [#allocation5], %s679
          %s681 = sand.u32 %s229, 1
          %s682 = smul.addr %s681, 64
          %s683 = scalar_lea.vmem [#allocation14], %s682
          %s685 = ssub.s32 1024, 1024
          %686 = vsyncadd %s680, %s685
          %s687 = smul.addr %s43, 16
          %s688 = smul.addr %s687, 64
          %s689 = scalar_lea.hbm %s7, %s688
          %s690 = sshll.u32 %s683, 4
          %s691 = int_to_ptr.vmem [resolvable:$true] %s690
          %696 = dma.hbm_to_vmem [thread:$0]  %s689, 1024, %s691, %s680, 64, 64, 4
        $region56: #{tpu_custom_call.1} parent=31 // pred_fallthru
          _
        // Predicated region
        $region57: #{tpu_custom_call.1} parent=31 // pred_check
          %p697 = pneg %p265
        $region58: #{tpu_custom_call.1} parent=31 // pred_check_branch
          %699 = sbr.rel (%p697) target = $region60
        $region59: #{tpu_custom_call.1} parent=31 // pred_region
          %s700 = sand.u32 %s35, 1
          %s701 = scalar_lea.sflag [#allocation8], %s700
          %s702 = sand.u32 %s255, 1
          %s703 = scalar_lea.vmem [#allocation15], %s702
          %s705 = ssub.s32 16, 16
          %706 = vsyncadd %s701, %s705
          %s707 = smul.addr %s43, 16
          %s708 = scalar_lea.hbm %s8, %s707
          %s710 = sshll.u32 %s703, 4
          %s711 = int_to_ptr.vmem [resolvable:$true] %s710
          %713 = dma.hbm_to_vmem [thread:$0]  %s708, 16, %s711, %s701
        $region60: #{tpu_custom_call.1} parent=31 // pred_fallthru
          _
        // Predicated region
        $region61: #{tpu_custom_call.1} parent=31 // pred_check
          %p714 = pneg %p291
        $region62: #{tpu_custom_call.1} parent=31 // pred_check_branch
          %716 = sbr.rel (%p714) target = $region64
        $region63: #{tpu_custom_call.1} parent=31 // pred_region
          %s717 = sand.u32 %s35, 1
          %s718 = scalar_lea.sflag [#allocation5], %s717
          %s719 = sand.u32 %s281, 1
          %s720 = scalar_lea.vmem [#allocation16], %s719
          %s722 = ssub.s32 16, 16
          %723 = vsyncadd %s718, %s722
          %s724 = smul.addr %s43, 16
          %s725 = scalar_lea.hbm %s9, %s724
          %s727 = sshll.u32 %s720, 4
          %s728 = int_to_ptr.vmem [resolvable:$true] %s727
          %730 = dma.hbm_to_vmem [thread:$0]  %s725, 16, %s728, %s718
        $region64: #{tpu_custom_call.1} parent=31 // pred_fallthru
          _
        // Predicated region
        $region65: #{tpu_custom_call.1} parent=31 // pred_check
          %p731 = pneg %p317
        $region66: #{tpu_custom_call.1} parent=31 // pred_check_branch
          %733 = sbr.rel (%p731) target = $region68
        $region67: #{tpu_custom_call.1} parent=31 // pred_region
          %s734 = sand.u32 %s35, 1
          %s735 = scalar_lea.sflag [#allocation8], %s734
          %s736 = sand.u32 %s307, 1
          %s737 = scalar_lea.vmem [#allocation17], %s736
          %s739 = ssub.s32 16, 16
          %740 = vsyncadd %s735, %s739
          %s741 = smul.addr %s43, 16
          %s742 = scalar_lea.hbm %s10, %s741
          %s744 = sshll.u32 %s737, 4
          %s745 = int_to_ptr.vmem [resolvable:$true] %s744
          %747 = dma.hbm_to_vmem [thread:$0]  %s742, 16, %s745, %s735
        $region68: #{tpu_custom_call.1} parent=31 // pred_fallthru
          _
        // Predicated region
        $region69: #{tpu_custom_call.1} parent=31 // pred_check
          %p748 = pneg %p343
        $region70: #{tpu_custom_call.1} parent=31 // pred_check_branch
          %750 = sbr.rel (%p748) target = $region72
        $region71: #{tpu_custom_call.1} parent=31 // pred_region
          %s751 = sand.u32 %s35, 1
          %s752 = scalar_lea.sflag [#allocation5], %s751
          %s753 = sand.u32 %s333, 1
          %s754 = smul.addr %s753, 256
          %s755 = scalar_lea.vmem [#allocation18], %s754
          %s757 = ssub.s32 4096, 4096
          %758 = vsyncadd %s752, %s757
          %s759 = smul.addr %s43, 64
          %s760 = smul.addr %s759, 64
          %s761 = scalar_lea.hbm %s11, %s760
          %s762 = sshll.u32 %s755, 4
          %s763 = int_to_ptr.vmem [resolvable:$true] %s762
          %768 = dma.hbm_to_vmem [thread:$0]  %s761, 4096, %s763, %s752, 256, 256, 16
        $region72: #{tpu_custom_call.1} parent=31 // pred_fallthru
          _
        // Predicated region
        $region73: #{tpu_custom_call.1} parent=31 // pred_check
          %p769 = pneg %p369
        $region74: #{tpu_custom_call.1} parent=31 // pred_check_branch
          %771 = sbr.rel (%p769) target = $region76
        $region75: #{tpu_custom_call.1} parent=31 // pred_region
          %p772 = scmp.lt.s32.totalorder %s43, 1
          %s773 = scalar_select %p772, %s43, 1
          %s774 = smul.addr %s773, 4
          %s775 = scalar_lea.vmem %s12, %s774
        $region76: #{tpu_custom_call.1} parent=31 // pred_fallthru
          _
        // Predicated region
        $region77: #{tpu_custom_call.1} parent=31 // pred_check
          %p776 = pneg %p395
        $region78: #{tpu_custom_call.1} parent=31 // pred_check_branch
          %778 = sbr.rel (%p776) target = $region80
        $region79: #{tpu_custom_call.1} parent=31 // pred_region
          %s779 = sand.u32 %s35, 1
          %s780 = scalar_lea.sflag [#allocation8], %s779
          %s781 = sand.u32 %s385, 1
          %s782 = smul.addr %s781, 256
          %s783 = scalar_lea.vmem [#allocation19], %s782
          %s785 = ssub.s32 4096, 4096
          %786 = vsyncadd %s780, %s785
          %s787 = smul.addr %s43, 64
          %s788 = smul.addr %s787, 64
          %s789 = scalar_lea.hbm %s13, %s788
          %s790 = sshll.u32 %s783, 4
          %s791 = int_to_ptr.vmem [resolvable:$true] %s790
          %796 = dma.hbm_to_vmem [thread:$0]  %s789, 4096, %s791, %s780, 64, 64, 4
        $region80: #{tpu_custom_call.1} parent=31 // pred_fallthru
          _
        // Predicated region
        $region81: #{tpu_custom_call.1} parent=31 // pred_check
          %p797 = pneg %p421
        $region82: #{tpu_custom_call.1} parent=31 // pred_check_branch
          %799 = sbr.rel (%p797) target = $region84
        $region83: #{tpu_custom_call.1} parent=31 // pred_region
          %s800 = sand.u32 %s35, 1
          %s801 = scalar_lea.sflag [#allocation5], %s800
          %s802 = sand.u32 %s411, 1
          %s803 = scalar_lea.vmem [#allocation20], %s802
          %s805 = ssub.s32 16, 16
          %806 = vsyncadd %s801, %s805
          %s807 = smul.addr %s43, 16
          %s808 = scalar_lea.hbm %s14, %s807
          %s810 = sshll.u32 %s803, 4
          %s811 = int_to_ptr.vmem [resolvable:$true] %s810
          %813 = dma.hbm_to_vmem [thread:$0]  %s808, 16, %s811, %s801
        $region84: #{tpu_custom_call.1} parent=31 // pred_fallthru
          _
        // Predicated region
        $region85: #{tpu_custom_call.1} parent=31 // pred_check
          %p814 = pneg %p447
        $region86: #{tpu_custom_call.1} parent=31 // pred_check_branch
          %816 = sbr.rel (%p814) target = $region88
        $region87: #{tpu_custom_call.1} parent=31 // pred_region
          %s817 = sand.u32 %s35, 1
          %s818 = scalar_lea.sflag [#allocation8], %s817
          %s819 = sand.u32 %s437, 1
          %s820 = scalar_lea.vmem [#allocation21], %s819
          %s822 = ssub.s32 16, 16
          %823 = vsyncadd %s818, %s822
          %s824 = smul.addr %s43, 16
          %s825 = scalar_lea.hbm %s15, %s824
          %s827 = sshll.u32 %s820, 4
          %s828 = int_to_ptr.vmem [resolvable:$true] %s827
          %830 = dma.hbm_to_vmem [thread:$0]  %s825, 16, %s828, %s818
        $region88: #{tpu_custom_call.1} parent=31 // pred_fallthru
          _
        // Predicated region
        $region89: #{tpu_custom_call.1} parent=31 // pred_check
          %p831 = pneg %p473
        $region90: #{tpu_custom_call.1} parent=31 // pred_check_branch
          %833 = sbr.rel (%p831) target = $region92
        $region91: #{tpu_custom_call.1} parent=31 // pred_region
          %s834 = sand.u32 %s35, 1
          %s835 = scalar_lea.sflag [#allocation5], %s834
          %s836 = sand.u32 %s463, 1
          %s837 = scalar_lea.vmem [#allocation22], %s836
          %s839 = ssub.s32 16, 16
          %840 = vsyncadd %s835, %s839
          %s841 = smul.addr %s43, 16
          %s842 = scalar_lea.hbm %s16, %s841
          %s844 = sshll.u32 %s837, 4
          %s845 = int_to_ptr.vmem [resolvable:$true] %s844
          %847 = dma.hbm_to_vmem [thread:$0]  %s842, 16, %s845, %s835
        $region92: #{tpu_custom_call.1} parent=31 // pred_fallthru
          _
      $region32: #{tpu_custom_call.1} parent=5 // pred_fallthru
        _
      %p848 = scmp.le.s32.totalorder 1, %s35
      %p849 = scmp.lt.s32.totalorder %s35, 5
      %p850 = pnand %p848, %p849
      %p851 = pneg %p850
      // Predicated region
      $region93: #{tpu_custom_call.1} parent=5 // pred_check
        _
      $region94: #{tpu_custom_call.1} parent=5 // pred_check_branch
        %853 = sbr.rel (%p850) target = $region96
      $region95: #{tpu_custom_call.1} parent=5 // pred_region
        %s854 = ssub.s32 %s35, 1
        %s855 = sand.u32 %s40, 1
        %s856 = scalar_lea.sflag [#allocation5], %s855
        %s857 = sand.u32 %s86, 1
        %s858 = scalar_lea.vmem [#allocation4], %s857
        // Predicated region
        $region97: #{tpu_custom_call.1} parent=95 // pred_check
          %p859 = pneg %p99
        $region98: #{tpu_custom_call.1} parent=95 // pred_check_branch
          %861 = sbr.rel (%p859) target = $region100
        $region99: #{tpu_custom_call.1} parent=95 // pred_region
          %862 = dma.done %s856, 16
        $region100: #{tpu_custom_call.1} parent=95 // pred_fallthru
          _
        %s863 = sand.u32 %s40, 1
        %s864 = scalar_lea.sflag [#allocation8], %s863
        %s865 = sand.u32 %s112, 1
        %s866 = scalar_lea.vmem [#allocation7], %s865
        // Predicated region
        $region101: #{tpu_custom_call.1} parent=95 // pred_check
          %p867 = pneg %p125
        $region102: #{tpu_custom_call.1} parent=95 // pred_check_branch
          %869 = sbr.rel (%p867) target = $region104
        $region103: #{tpu_custom_call.1} parent=95 // pred_region
          %870 = dma.done %s864, 16
        $region104: #{tpu_custom_call.1} parent=95 // pred_fallthru
          _
        // Predicated region
        $region105: #{tpu_custom_call.1} parent=95 // pred_check
          %p871 = pneg %p146
        $region106: #{tpu_custom_call.1} parent=95 // pred_check_branch
          %873 = sbr.rel (%p871) target = $region108
        $region107: #{tpu_custom_call.1} parent=95 // pred_region
          %874 = dma.done [#allocation8], 64
        $region108: #{tpu_custom_call.1} parent=95 // pred_fallthru
          _
        // Predicated region
        $region109: #{tpu_custom_call.1} parent=95 // pred_check
          %p875 = pneg %p167
        $region110: #{tpu_custom_call.1} parent=95 // pred_check_branch
          %877 = sbr.rel (%p875) target = $region112
        $region111: #{tpu_custom_call.1} parent=95 // pred_region
          %878 = dma.done [#allocation11], 16
        $region112: #{tpu_custom_call.1} parent=95 // pred_fallthru
          _
        %s879 = sand.u32 %s40, 1
        %s880 = scalar_lea.sflag [#allocation5], %s879
        %s881 = sand.u32 %s180, 1
        %s882 = smul.addr %s881, 192
        %s883 = scalar_lea.vmem [#allocation12], %s882
        // Predicated region
        $region113: #{tpu_custom_call.1} parent=95 // pred_check
          %p884 = pneg %p193
        $region114: #{tpu_custom_call.1} parent=95 // pred_check_branch
          %886 = sbr.rel (%p884) target = $region116
        $region115: #{tpu_custom_call.1} parent=95 // pred_region
          %887 = dma.done %s880, 3072
        $region116: #{tpu_custom_call.1} parent=95 // pred_fallthru
          _
        %s888 = sand.u32 %s40, 1
        %s889 = scalar_lea.sflag [#allocation8], %s888
        %s890 = sand.u32 %s206, 1
        %s891 = smul.addr %s890, 3
        %s892 = scalar_lea.vmem [#allocation13], %s891
        // Predicated region
        $region117: #{tpu_custom_call.1} parent=95 // pred_check
          %p893 = pneg %p219
        $region118: #{tpu_custom_call.1} parent=95 // pred_check_branch
          %895 = sbr.rel (%p893) target = $region120
        $region119: #{tpu_custom_call.1} parent=95 // pred_region
          %896 = dma.done %s889, 48
        $region120: #{tpu_custom_call.1} parent=95 // pred_fallthru
          _
        %s897 = sand.u32 %s40, 1
        %s898 = scalar_lea.sflag [#allocation5], %s897
        %s899 = sand.u32 %s232, 1
        %s900 = smul.addr %s899, 64
        %s901 = scalar_lea.vmem [#allocation14], %s900
        // Predicated region
        $region121: #{tpu_custom_call.1} parent=95 // pred_check
          %p902 = pneg %p245
        $region122: #{tpu_custom_call.1} parent=95 // pred_check_branch
          %904 = sbr.rel (%p902) target = $region124
        $region123: #{tpu_custom_call.1} parent=95 // pred_region
          %905 = dma.done %s898, 1024
        $region124: #{tpu_custom_call.1} parent=95 // pred_fallthru
          _
        %s906 = sand.u32 %s40, 1
        %s907 = scalar_lea.sflag [#allocation8], %s906
        %s908 = sand.u32 %s258, 1
        %s909 = scalar_lea.vmem [#allocation15], %s908
        // Predicated region
        $region125: #{tpu_custom_call.1} parent=95 // pred_check
          %p910 = pneg %p271
        $region126: #{tpu_custom_call.1} parent=95 // pred_check_branch
          %912 = sbr.rel (%p910) target = $region128
        $region127: #{tpu_custom_call.1} parent=95 // pred_region
          %913 = dma.done %s907, 16
        $region128: #{tpu_custom_call.1} parent=95 // pred_fallthru
          _
        %s914 = sand.u32 %s40, 1
        %s915 = scalar_lea.sflag [#allocation5], %s914
        %s916 = sand.u32 %s284, 1
        %s917 = scalar_lea.vmem [#allocation16], %s916
        // Predicated region
        $region129: #{tpu_custom_call.1} parent=95 // pred_check
          %p918 = pneg %p297
        $region130: #{tpu_custom_call.1} parent=95 // pred_check_branch
          %920 = sbr.rel (%p918) target = $region132
        $region131: #{tpu_custom_call.1} parent=95 // pred_region
          %921 = dma.done %s915, 16
        $region132: #{tpu_custom_call.1} parent=95 // pred_fallthru
          _
        %s922 = sand.u32 %s40, 1
        %s923 = scalar_lea.sflag [#allocation8], %s922
        %s924 = sand.u32 %s310, 1
        %s925 = scalar_lea.vmem [#allocation17], %s924
        // Predicated region
        $region133: #{tpu_custom_call.1} parent=95 // pred_check
          %p926 = pneg %p323
        $region134: #{tpu_custom_call.1} parent=95 // pred_check_branch
          %928 = sbr.rel (%p926) target = $region136
        $region135: #{tpu_custom_call.1} parent=95 // pred_region
          %929 = dma.done %s923, 16
        $region136: #{tpu_custom_call.1} parent=95 // pred_fallthru
          _
        %s930 = sand.u32 %s40, 1
        %s931 = scalar_lea.sflag [#allocation5], %s930
        %s932 = sand.u32 %s336, 1
        %s933 = smul.addr %s932, 256
        %s934 = scalar_lea.vmem [#allocation18], %s933
        // Predicated region
        $region137: #{tpu_custom_call.1} parent=95 // pred_check
          %p935 = pneg %p349
        $region138: #{tpu_custom_call.1} parent=95 // pred_check_branch
          %937 = sbr.rel (%p935) target = $region140
        $region139: #{tpu_custom_call.1} parent=95 // pred_region
          %938 = dma.done %s931, 4096
        $region140: #{tpu_custom_call.1} parent=95 // pred_fallthru
          _
        %s939 = sand.u32 %s40, 1
        %s940 = scalar_lea.sflag [#allocation8], %s939
        %s941 = sand.u32 %s388, 1
        %s942 = smul.addr %s941, 256
        %s943 = scalar_lea.vmem [#allocation19], %s942
        // Predicated region
        $region141: #{tpu_custom_call.1} parent=95 // pred_check
          %p944 = pneg %p401
        $region142: #{tpu_custom_call.1} parent=95 // pred_check_branch
          %946 = sbr.rel (%p944) target = $region144
        $region143: #{tpu_custom_call.1} parent=95 // pred_region
          %947 = dma.done %s940, 4096
        $region144: #{tpu_custom_call.1} parent=95 // pred_fallthru
          _
        %s948 = sand.u32 %s40, 1
        %s949 = scalar_lea.sflag [#allocation5], %s948
        %s950 = sand.u32 %s414, 1
        %s951 = scalar_lea.vmem [#allocation20], %s950
        // Predicated region
        $region145: #{tpu_custom_call.1} parent=95 // pred_check
          %p952 = pneg %p427
        $region146: #{tpu_custom_call.1} parent=95 // pred_check_branch
          %954 = sbr.rel (%p952) target = $region148
        $region147: #{tpu_custom_call.1} parent=95 // pred_region
          %955 = dma.done %s949, 16
        $region148: #{tpu_custom_call.1} parent=95 // pred_fallthru
          _
        %s956 = sand.u32 %s40, 1
        %s957 = scalar_lea.sflag [#allocation8], %s956
        %s958 = sand.u32 %s440, 1
        %s959 = scalar_lea.vmem [#allocation21], %s958
        // Predicated region
        $region149: #{tpu_custom_call.1} parent=95 // pred_check
          %p960 = pneg %p453
        $region150: #{tpu_custom_call.1} parent=95 // pred_check_branch
          %962 = sbr.rel (%p960) target = $region152
        $region151: #{tpu_custom_call.1} parent=95 // pred_region
          %963 = dma.done %s957, 16
        $region152: #{tpu_custom_call.1} parent=95 // pred_fallthru
          _
        %s964 = sand.u32 %s40, 1
        %s965 = scalar_lea.sflag [#allocation5], %s964
        %s966 = sand.u32 %s466, 1
        %s967 = scalar_lea.vmem [#allocation22], %s966
        // Predicated region
        $region153: #{tpu_custom_call.1} parent=95 // pred_check
          %p968 = pneg %p479
        $region154: #{tpu_custom_call.1} parent=95 // pred_check_branch
          %970 = sbr.rel (%p968) target = $region156
        $region155: #{tpu_custom_call.1} parent=95 // pred_region
          %971 = dma.done %s965, 16
        $region156: #{tpu_custom_call.1} parent=95 // pred_fallthru
          _
        %p972 = scmp.lt.s32.totalorder %s44, 1
        %s973 = scalar_select %p972, %s44, 1
        %s974 = smul.addr %s973, 4
        %s975 = smul.addr %s974, 8
        %s976 = scalar_lea.vmem %s0, %s975
        %p977 = pneg %p73
        %p978 = pneg %p70
        %s979 = sand.u32 %s40, 1
        %s980 = scalar_lea.sflag [#allocation5], %s979
        %s981 = sand.u32 %s86, 1
        %s982 = scalar_lea.vmem [#allocation4], %s981
        %p983 = pneg %p99
        %p984 = pneg %p96
        %s985 = sand.u32 %s40, 1
        %s986 = scalar_lea.sflag [#allocation8], %s985
        %s987 = sand.u32 %s112, 1
        %s988 = scalar_lea.vmem [#allocation7], %s987
        %p989 = pneg %p125
        %p990 = pneg %p122
        %p991 = pneg %p146
        %p992 = pneg %p143
        %p993 = pneg %p167
        %p994 = pneg %p164
        %s995 = sand.u32 %s40, 1
        %s996 = scalar_lea.sflag [#allocation5], %s995
        %s997 = sand.u32 %s180, 1
        %s998 = smul.addr %s997, 192
        %s999 = scalar_lea.vmem [#allocation12], %s998
        %p1000 = pneg %p193
        %p1001 = pneg %p190
        %s1002 = sand.u32 %s40, 1
        %s1003 = scalar_lea.sflag [#allocation8], %s1002
        %s1004 = sand.u32 %s206, 1
        %s1005 = smul.addr %s1004, 3
        %s1006 = scalar_lea.vmem [#allocation13], %s1005
        %p1007 = pneg %p219
        %p1008 = pneg %p216
        %s1009 = sand.u32 %s40, 1
        %s1010 = scalar_lea.sflag [#allocation5], %s1009
        %s1011 = sand.u32 %s232, 1
        %s1012 = smul.addr %s1011, 64
        %s1013 = scalar_lea.vmem [#allocation14], %s1012
        %p1014 = pneg %p245
        %p1015 = pneg %p242
        %s1016 = sand.u32 %s40, 1
        %s1017 = scalar_lea.sflag [#allocation8], %s1016
        %s1018 = sand.u32 %s258, 1
        %s1019 = scalar_lea.vmem [#allocation15], %s1018
        %p1020 = pneg %p271
        %p1021 = pneg %p268
        %s1022 = sand.u32 %s40, 1
        %s1023 = scalar_lea.sflag [#allocation5], %s1022
        %s1024 = sand.u32 %s284, 1
        %s1025 = scalar_lea.vmem [#allocation16], %s1024
        %p1026 = pneg %p297
        %p1027 = pneg %p294
        %s1028 = sand.u32 %s40, 1
        %s1029 = scalar_lea.sflag [#allocation8], %s1028
        %s1030 = sand.u32 %s310, 1
        %s1031 = scalar_lea.vmem [#allocation17], %s1030
        %p1032 = pneg %p323
        %p1033 = pneg %p320
        %s1034 = sand.u32 %s40, 1
        %s1035 = scalar_lea.sflag [#allocation5], %s1034
        %s1036 = sand.u32 %s336, 1
        %s1037 = smul.addr %s1036, 256
        %s1038 = scalar_lea.vmem [#allocation18], %s1037
        %p1039 = pneg %p349
        %p1040 = pneg %p346
        %p1041 = scmp.lt.s32.totalorder %s45, 1
        %s1042 = scalar_select %p1041, %s45, 1
        %s1043 = smul.addr %s1042, 4
        %s1044 = scalar_lea.vmem %s12, %s1043
        %p1045 = pneg %p375
        %p1046 = pneg %p372
        %s1047 = sand.u32 %s40, 1
        %s1048 = scalar_lea.sflag [#allocation8], %s1047
        %s1049 = sand.u32 %s388, 1
        %s1050 = smul.addr %s1049, 256
        %s1051 = scalar_lea.vmem [#allocation19], %s1050
        %p1052 = pneg %p401
        %p1053 = pneg %p398
        %s1054 = sand.u32 %s40, 1
        %s1055 = scalar_lea.sflag [#allocation5], %s1054
        %s1056 = sand.u32 %s414, 1
        %s1057 = scalar_lea.vmem [#allocation20], %s1056
        %p1058 = pneg %p427
        %p1059 = pneg %p424
        %s1060 = sand.u32 %s40, 1
        %s1061 = scalar_lea.sflag [#allocation8], %s1060
        %s1062 = sand.u32 %s440, 1
        %s1063 = scalar_lea.vmem [#allocation21], %s1062
        %p1064 = pneg %p453
        %p1065 = pneg %p450
        %s1066 = sand.u32 %s40, 1
        %s1067 = scalar_lea.sflag [#allocation5], %s1066
        %s1068 = sand.u32 %s466, 1
        %s1069 = scalar_lea.vmem [#allocation22], %s1068
        %p1070 = pneg %p479
        %p1071 = pneg %p476
        %p1072 = pneg %p500
        %p1073 = pneg %p497
        %p1074 = pneg %p521
        %p1075 = pneg %p518
        %p1076 = pneg %p547
        %p1077 = pneg %p544
        %s1078 = sand.u32 %s534, 1
        %s1079 = scalar_lea.sflag [#allocation6], %s1078
        %s1080 = sand.u32 %s534, 1
        %s1081 = scalar_lea.vmem [#allocation23], %s1080
        %p1082 = scmp.lt.s32.totalorder %s44, 1
        %s1083 = scalar_select %p1082, %s44, 1
        %s1084 = smul.addr %s1083, 4
        %s1085 = smul.addr %s1084, 8
        %s1086 = scalar_lea.vmem %s0, %s1085
        %p1087 = scmp.lt.s32.totalorder %s45, 1
        %s1088 = scalar_select %p1087, %s45, 1
        %s1089 = smul.addr %s1088, 4
        %s1090 = scalar_lea.vmem %s12, %s1089
        %p1092 = scmp.eq.s32.totalorder %s45, 0
        // Predicated region
        $region157: #{tpu_custom_call.1} parent=95 // pred_check
          %p1093 = pneg %p1092
        $region158: #{tpu_custom_call.1} parent=95 // pred_check_branch
          %1095 = sbr.rel (%p1093) target = $region160
        $region159: #{tpu_custom_call.1} parent=95 // pred_region
          %v1096 = vld [vmem:[%s1086] sm:$0xff]
          %v1097 = vld [vmem:[%s1086 + $0x8] sm:$0xff]
          %v1098 = vld [vmem:[%s1086 + $0x10] sm:$0xff]
          %v1099 = vld [vmem:[%s1086 + $0x18] sm:$0xff]
          %v1100 = vld [vmem:[#allocation9] sm:$0xf]
          %v1101 = vld [vmem:[#allocation10] sm:$0x1]
          %v1103 = vlaneseq
          %v1104 = vshrl.u32 %v1103, 7
          %v1105 = vsub.s32 0, %v1104
          %v1106 = vrot.slane %v1101, %v1105
          %vm1108 = vcmask 31744
          %v1110 = vsel %vm1108, %v1096, 0
          %v1113 = vsel %vm1108, %v1097, 0
          %v1116 = vsel %vm1108, %v1098, 0
          %v1119 = vsel %vm1108, %v1099, 0
          %vm1121 = vcmask 1043456
          %v1123 = vsel %vm1121, %v1100, 0
          %1125 = vmatprep.subr.mxu0 0.0
          %1126 = vmatpush1.msra.mxu0 %v1123
          %1127 = vmatprep.subr.mxu0 0.0
          %1128 = vmatpush1.msra.mxu0 0.0
          %1129 = vmatprep.subr.mxu0 0.0
          %1130 = vmatpush1.msra.mxu0 0.0
          %1131 = vmatprep.subr.mxu0 0.0
          %1132 = vmatpush1.msra.mxu0 0.0
          %1133 = vmatprep.subr.mxu0 0.0
          %1134 = vmatpush1.msra.mxu0 0.0
          %1135 = vmatprep.subr.mxu0 0.0
          %1136 = vmatpush1.msra.mxu0 0.0
          %1137 = vmatprep.subr.mxu0 0.0
          %1138 = vmatpush1.msra.mxu0 0.0
          %1139 = vmatprep.subr.mxu0 0.0
          %1140 = vmatpush1.msra.mxu0 0.0
          %1141 = vmatprep.subr.mxu0 0.0
          %1142 = vmatpush1.msra.mxu0 0.0
          %1143 = vmatprep.subr.mxu0 0.0
          %1144 = vmatpush1.msra.mxu0 0.0
          %1145 = vmatprep.subr.mxu0 0.0
          %1146 = vmatpush1.msra.mxu0 0.0
          %1147 = vmatprep.subr.mxu0 0.0
          %1148 = vmatpush1.msra.mxu0 0.0
          %1149 = vmatprep.subr.mxu0 0.0
          %1150 = vmatpush1.msra.mxu0 0.0
          %1151 = vmatprep.subr.mxu0 0.0
          %1152 = vmatpush1.msra.mxu0 0.0
          %1153 = vmatprep.subr.mxu0 0.0
          %1154 = vmatpush1.msra.mxu0 0.0
          %1155 = vmatprep.subr.mxu0 0.0
          %1156 = vmatpush1.msra.mxu0 0.0
          %1157 = vmatprep.subr.mxu0 0.0
          %1158 = vmatpush1.msra.mxu0 0.0
          %1159 = vmatprep.subr.mxu0 0.0
          %1160 = vmatpush1.msra.mxu0 0.0
          %1161 = vmatprep.subr.mxu0 0.0
          %1162 = vmatpush1.msra.mxu0 0.0
          %1163 = vmatprep.subr.mxu0 0.0
          %1164 = vmatpush1.msra.mxu0 0.0
          %1165 = vmatprep.subr.mxu0 0.0
          %1166 = vmatpush1.msra.mxu0 0.0
          %1167 = vmatprep.subr.mxu0 0.0
          %1168 = vmatpush1.msra.mxu0 0.0
          %1169 = vmatprep.subr.mxu0 0.0
          %1170 = vmatpush1.msra.mxu0 0.0
          %1171 = vmatprep.subr.mxu0 0.0
          %1172 = vmatpush1.msra.mxu0 0.0
          %1173 = vmatprep.subr.mxu0 0.0
          %1174 = vmatpush1.msra.mxu0 0.0
          %1175 = vmatprep.subr.mxu0 0.0
          %1176 = vmatpush1.msra.mxu0 0.0
          %1177 = vmatprep.subr.mxu0 0.0
          %1178 = vmatpush1.msra.mxu0 0.0
          %1179 = vmatprep.subr.mxu0 0.0
          %1180 = vmatpush1.msra.mxu0 0.0
          %1181 = vmatprep.subr.mxu0 0.0
          %1182 = vmatpush1.msra.mxu0 0.0
          %1183 = vmatprep.subr.mxu0 0.0
          %1184 = vmatpush1.msra.mxu0 0.0
          %1185 = vmatprep.subr.mxu0 0.0
          %1186 = vmatpush1.msra.mxu0 0.0
          %1187 = vmatprep.subr.mxu0 0.0
          %1188 = vmatpush1.msra.mxu0 0.0
          %1189 = vmatprep.mubr.f32.mxu0 0.0
          %1190 = vmatmul.mubr.f32.gmra.mrb[0].mxu0 %v1110
          %v1191 = vpop.f32.mrb[0].mxu0
          %v1192 = vadd.f32 %v1106, %v1191
          %v1193 = vpop.f32.mrb[0].mxu0
          %1194 = vmatprep.mubr.f32.mxu0 0.0
          %1195 = vmatmul.mubr.f32.gmra.mrb[0].mxu0 %v1113
          %v1196 = vpop.f32.mrb[0].mxu0
          %v1197 = vadd.f32 %v1106, %v1196
          %v1198 = vpop.f32.mrb[0].mxu0
          %1199 = vmatprep.mubr.f32.mxu0 0.0
          %1200 = vmatmul.mubr.f32.gmra.mrb[0].mxu0 %v1116
          %v1201 = vpop.f32.mrb[0].mxu0
          %v1202 = vadd.f32 %v1106, %v1201
          %v1203 = vpop.f32.mrb[0].mxu0
          %1204 = vmatprep.mubr.f32.mxu0 0.0
          %1205 = vmatmul.mubr.f32.gmra.mrb[0].mxu0 %v1119
          %v1206 = vpop.f32.mrb[0].mxu0
          %v1207 = vadd.f32 %v1106, %v1206
          %v1208 = vpop.f32.mrb[0].mxu0
          %1209 = vdwg.mxu0
          %1210 = vst [vmem:[#allocation2] sm:$0xff] %v1192
          %1211 = vst [vmem:[#allocation2 + $0x8] sm:$0xff] %v1197
          %1212 = vst [vmem:[#allocation2 + $0x10] sm:$0xff] %v1202
          %1213 = vst [vmem:[#allocation2 + $0x18] sm:$0xff] %v1207
        $region160: #{tpu_custom_call.1} parent=95 // pred_fallthru
          _
        %v1214 = vld [vmem:[#allocation2] sm:$0xff]
        %v1215 = vld [vmem:[#allocation2 + $0x8] sm:$0xff]
        %v1216 = vld [vmem:[#allocation2 + $0x10] sm:$0xff]
        %v1217 = vld [vmem:[#allocation2 + $0x18] sm:$0xff]
        %v1218 = vld [vmem:[%s858] sm:$0x1]
        %v1219 = vpack.c.bf16 %v1215, %v1214
        %v1220 = vpack.c.bf16 %v1217, %v1216
        %v1221 = vld [vmem:[%s883] sm:$0xff]
        %v1222 = vld [vmem:[%s883 + $0x8] sm:$0xf]
        %v1223 = vld [vmem:[%s883 + $0xc] sm:$0xff]
        %v1224 = vld [vmem:[%s883 + $0x14] sm:$0xf]
        %v1225 = vld [vmem:[%s883 + $0x18] sm:$0xff]
        %v1226 = vld [vmem:[%s883 + $0x20] sm:$0xf]
        %v1227 = vld [vmem:[%s883 + $0x24] sm:$0xff]
        %v1228 = vld [vmem:[%s883 + $0x2c] sm:$0xf]
        %v1229 = vld [vmem:[%s883 + $0x30] sm:$0xff]
        %v1230 = vld [vmem:[%s883 + $0x38] sm:$0xf]
        %v1231 = vld [vmem:[%s883 + $0x3c] sm:$0xff]
        %v1232 = vld [vmem:[%s883 + $0x44] sm:$0xf]
        %v1233 = vld [vmem:[%s883 + $0x48] sm:$0xff]
        %v1234 = vld [vmem:[%s883 + $0x50] sm:$0xf]
        %v1235 = vld [vmem:[%s883 + $0x54] sm:$0xff]
        %v1236 = vld [vmem:[%s883 + $0x5c] sm:$0xf]
        %v1237 = vld [vmem:[%s883 + $0x60] sm:$0xff]
        %v1238 = vld [vmem:[%s883 + $0x68] sm:$0xf]
        %v1239 = vld [vmem:[%s883 + $0x6c] sm:$0xff]
        %v1240 = vld [vmem:[%s883 + $0x74] sm:$0xf]
        %v1241 = vld [vmem:[%s883 + $0x78] sm:$0xff]
        %v1242 = vld [vmem:[%s883 + $0x80] sm:$0xf]
        %v1243 = vld [vmem:[%s883 + $0x84] sm:$0xff]
        %v1244 = vld [vmem:[%s883 + $0x8c] sm:$0xf]
        %v1245 = vld [vmem:[%s883 + $0x90] sm:$0xff]
        %v1246 = vld [vmem:[%s883 + $0x98] sm:$0xf]
        %v1247 = vld [vmem:[%s883 + $0x9c] sm:$0xff]
        %v1248 = vld [vmem:[%s883 + $0xa4] sm:$0xf]
        %v1249 = vld [vmem:[%s883 + $0xa8] sm:$0xff]
        %v1250 = vld [vmem:[%s883 + $0xb0] sm:$0xf]
        %v1251 = vld [vmem:[%s883 + $0xb4] sm:$0xff]
        %v1252 = vld [vmem:[%s883 + $0xbc] sm:$0xf]
        %v1253 = vld [vmem:[%s892] sm:$0x7]
        %v1255 = vlaneseq
        %v1256 = vshrl.u32 %v1255, 7
        %v1257 = vsub.s32 0, %v1256
        %v1258 = vrot.slane %v1253, %v1257
        %v1259 = vlaneseq
        %v1260 = vshrl.u32 %v1259, 7
        %v1261 = vsub.s32 1, %v1260
        %v1262 = vrot.slane %v1253, %v1261
        %v1263 = vlaneseq
        %v1264 = vshrl.u32 %v1263, 7
        %v1265 = vsub.s32 2, %v1264
        %v1266 = vrot.slane %v1253, %v1265
        %v1302 = vunpack.c.l.b16 %v1221
        %v1303 = vunpack.c.h.b16 %v1221
        %v1304 = vunpack.c.l.b16 %v1222
        %v1305 = vunpack.c.l.b16 %v1223
        %v1306 = vunpack.c.h.b16 %v1223
        %v1307 = vunpack.c.l.b16 %v1224
        %v1308 = vunpack.c.l.b16 %v1225
        %v1309 = vunpack.c.h.b16 %v1225
        %v1310 = vunpack.c.l.b16 %v1226
        %v1311 = vunpack.c.l.b16 %v1227
        %v1312 = vunpack.c.h.b16 %v1227
        %v1313 = vunpack.c.l.b16 %v1228
        %v1314 = vunpack.c.l.b16 %v1229
        %v1315 = vunpack.c.h.b16 %v1229
        %v1316 = vunpack.c.l.b16 %v1230
        %v1317 = vunpack.c.l.b16 %v1231
        %v1318 = vunpack.c.h.b16 %v1231
        %v1319 = vunpack.c.l.b16 %v1232
        %v1320 = vunpack.c.l.b16 %v1233
        %v1321 = vunpack.c.h.b16 %v1233
        %v1322 = vunpack.c.l.b16 %v1234
        %v1323 = vunpack.c.l.b16 %v1235
        %v1324 = vunpack.c.h.b16 %v1235
        %v1325 = vunpack.c.l.b16 %v1236
        %v1326 = vunpack.c.l.b16 %v1237
        %v1327 = vunpack.c.h.b16 %v1237
        %v1328 = vunpack.c.l.b16 %v1238
        %v1329 = vunpack.c.l.b16 %v1239
        %v1330 = vunpack.c.h.b16 %v1239
        %v1331 = vunpack.c.l.b16 %v1240
        %v1332 = vunpack.c.l.b16 %v1241
        %v1333 = vunpack.c.h.b16 %v1241
        %v1334 = vunpack.c.l.b16 %v1242
        %v1335 = vunpack.c.l.b16 %v1243
        %v1336 = vunpack.c.h.b16 %v1243
        %v1337 = vunpack.c.l.b16 %v1244
        %v1338 = vunpack.c.l.b16 %v1245
        %v1339 = vunpack.c.h.b16 %v1245
        %v1340 = vunpack.c.l.b16 %v1246
        %v1341 = vunpack.c.l.b16 %v1247
        %v1342 = vunpack.c.h.b16 %v1247
        %v1343 = vunpack.c.l.b16 %v1248
        %v1344 = vunpack.c.l.b16 %v1249
        %v1345 = vunpack.c.h.b16 %v1249
        %v1346 = vunpack.c.l.b16 %v1250
        %v1347 = vunpack.c.l.b16 %v1251
        %v1348 = vunpack.c.h.b16 %v1251
        %v1349 = vunpack.c.l.b16 %v1252
        %v1350 = vpack.c.b16 %v1305, %v1302
        %v1351 = vpack.c.b16 %v1306, %v1303
        %v1352 = vpack.c.b16 %v1307, %v1304
        %v1353 = vpack.c.b16 %v1311, %v1308
        %v1354 = vpack.c.b16 %v1312, %v1309
        %v1355 = vpack.c.b16 %v1313, %v1310
        %v1356 = vpack.c.b16 %v1317, %v1314
        %v1357 = vpack.c.b16 %v1318, %v1315
        %v1358 = vpack.c.b16 %v1319, %v1316
        %v1359 = vpack.c.b16 %v1323, %v1320
        %v1360 = vpack.c.b16 %v1324, %v1321
        %v1361 = vpack.c.b16 %v1325, %v1322
        %v1362 = vpack.c.b16 %v1329, %v1326
        %v1363 = vpack.c.b16 %v1330, %v1327
        %v1364 = vpack.c.b16 %v1331, %v1328
        %v1365 = vpack.c.b16 %v1335, %v1332
        %v1366 = vpack.c.b16 %v1336, %v1333
        %v1367 = vpack.c.b16 %v1337, %v1334
        %v1368 = vpack.c.b16 %v1341, %v1338
        %v1369 = vpack.c.b16 %v1342, %v1339
        %v1370 = vpack.c.b16 %v1343, %v1340
        %v1371 = vpack.c.b16 %v1347, %v1344
        %v1372 = vpack.c.b16 %v1348, %v1345
        %v1373 = vpack.c.b16 %v1349, %v1346
        %1398 = vmatprep.subr.bf16.mxu0 %v1351
        %1399 = vmatpush1.bf16.msra.mxu0 %v1350
        %1400 = vmatprep.subr.bf16.mxu0 %v1354
        %1401 = vmatpush1.bf16.msra.mxu0 %v1353
        %1402 = vmatprep.subr.bf16.mxu0 %v1357
        %1403 = vmatpush1.bf16.msra.mxu0 %v1356
        %1404 = vmatprep.subr.bf16.mxu0 %v1360
        %1405 = vmatpush1.bf16.msra.mxu0 %v1359
        %1406 = vmatprep.subr.bf16.mxu0 %v1363
        %1407 = vmatpush1.bf16.msra.mxu0 %v1362
        %1408 = vmatprep.subr.bf16.mxu0 %v1366
        %1409 = vmatpush1.bf16.msra.mxu0 %v1365
        %1410 = vmatprep.subr.bf16.mxu0 %v1369
        %1411 = vmatpush1.bf16.msra.mxu0 %v1368
        %1412 = vmatprep.subr.bf16.mxu0 %v1372
        %1413 = vmatpush1.bf16.msra.mxu0 %v1371
        %1414 = vmatprep.subr.bf16.mxu0 0
        %1415 = vmatpush1.bf16.msra.mxu0 0
        %1416 = vmatprep.subr.bf16.mxu0 0
        %1417 = vmatpush1.bf16.msra.mxu0 0
        %1418 = vmatprep.subr.bf16.mxu0 0
        %1419 = vmatpush1.bf16.msra.mxu0 0
        %1420 = vmatprep.subr.bf16.mxu0 0
        %1421 = vmatpush1.bf16.msra.mxu0 0
        %1422 = vmatprep.subr.bf16.mxu0 0
        %1423 = vmatpush1.bf16.msra.mxu0 0
        %1424 = vmatprep.subr.bf16.mxu0 0
        %1425 = vmatpush1.bf16.msra.mxu0 0
        %1426 = vmatprep.subr.bf16.mxu0 0
        %1427 = vmatpush1.bf16.msra.mxu0 0
        %1428 = vmatprep.subr.bf16.mxu0 0
        %1429 = vmatpush1.bf16.msra.mxu0 0
        %1430 = vmatprep.mubr.bf16.mxu0 0
        %1431 = vmatmul.mubr.bf16.gmra.mrb[0].mxu0 %v1219
        %v1432 = vpop.f32.mrb[0].mxu0
        %v1433 = vadd.f32 %v1258, %v1432
        %v1434 = vpop.f32.mrb[0].mxu0
        %v1435 = vadd.f32 %v1262, %v1434
        %v1436 = vpop.f32.mrb[0].mxu0
        %v1437 = vadd.f32 %v1258, %v1436
        %v1438 = vpop.f32.mrb[0].mxu0
        %v1439 = vadd.f32 %v1262, %v1438
        %1440 = vmatprep.mubr.bf16.mxu0 0
        %1441 = vmatmul.mubr.bf16.gmra.mrb[0].mxu0 %v1220
        %v1442 = vpop.f32.mrb[0].mxu0
        %v1443 = vadd.f32 %v1258, %v1442
        %v1444 = vpop.f32.mrb[0].mxu0
        %v1445 = vadd.f32 %v1262, %v1444
        %v1446 = vpop.f32.mrb[0].mxu0
        %v1447 = vadd.f32 %v1258, %v1446
        %v1448 = vpop.f32.mrb[0].mxu0
        %v1449 = vadd.f32 %v1262, %v1448
        %1450 = vdwg.mxu0
        %1451 = vmatprep.subr.bf16.mxu0 0
        %1452 = vmatpush1.bf16.msra.mxu0 %v1352
        %1453 = vmatprep.subr.bf16.mxu0 0
        %1454 = vmatpush1.bf16.msra.mxu0 %v1355
        %1455 = vmatprep.subr.bf16.mxu0 0
        %1456 = vmatpush1.bf16.msra.mxu0 %v1358
        %1457 = vmatprep.subr.bf16.mxu0 0
        %1458 = vmatpush1.bf16.msra.mxu0 %v1361
        %1459 = vmatprep.subr.bf16.mxu0 0
        %1460 = vmatpush1.bf16.msra.mxu0 %v1364
        %1461 = vmatprep.subr.bf16.mxu0 0
        %1462 = vmatpush1.bf16.msra.mxu0 %v1367
        %1463 = vmatprep.subr.bf16.mxu0 0
        %1464 = vmatpush1.bf16.msra.mxu0 %v1370
        %1465 = vmatprep.subr.bf16.mxu0 0
        %1466 = vmatpush1.bf16.msra.mxu0 %v1373
        %1467 = vmatprep.subr.bf16.mxu0 0
        %1468 = vmatpush1.bf16.msra.mxu0 0
        %1469 = vmatprep.subr.bf16.mxu0 0
        %1470 = vmatpush1.bf16.msra.mxu0 0
        %1471 = vmatprep.subr.bf16.mxu0 0
        %1472 = vmatpush1.bf16.msra.mxu0 0
        %1473 = vmatprep.subr.bf16.mxu0 0
        %1474 = vmatpush1.bf16.msra.mxu0 0
        %1475 = vmatprep.subr.bf16.mxu0 0
        %1476 = vmatpush1.bf16.msra.mxu0 0
        %1477 = vmatprep.subr.bf16.mxu0 0
        %1478 = vmatpush1.bf16.msra.mxu0 0
        %1479 = vmatprep.subr.bf16.mxu0 0
        %1480 = vmatpush1.bf16.msra.mxu0 0
        %1481 = vmatprep.subr.bf16.mxu0 0
        %1482 = vmatpush1.bf16.msra.mxu0 0
        %1483 = vmatprep.mubr.bf16.mxu0 0
        %1484 = vmatmul.mubr.bf16.gmra.mrb[0].mxu0 %v1219
        %v1485 = vpop.f32.mrb[0].mxu0
        %v1486 = vadd.f32 %v1266, %v1485
        %v1487 = vpop.f32.mrb[0].mxu0
        %v1488 = vpop.f32.mrb[0].mxu0
        %v1489 = vadd.f32 %v1266, %v1488
        %v1490 = vpop.f32.mrb[0].mxu0
        %1491 = vmatprep.mubr.bf16.mxu0 0
        %1492 = vmatmul.mubr.bf16.gmra.mrb[0].mxu0 %v1220
        %v1493 = vpop.f32.mrb[0].mxu0
        %v1494 = vadd.f32 %v1266, %v1493
        %v1495 = vpop.f32.mrb[0].mxu0
        %v1496 = vpop.f32.mrb[0].mxu0
        %v1497 = vadd.f32 %v1266, %v1496
        %v1498 = vpop.f32.mrb[0].mxu0
        %1499 = vdwg.mxu0
        %1504 = vrot.lane.b32.xlu0 %v1433, 96
        %v1505 = vpop.permute.xlu0 %1504
        %1506 = vrot.lane.b32.xlu0 %v1437, 96
        %v1507 = vpop.permute.xlu0 %1506
        %1508 = vrot.lane.b32.xlu0 %v1443, 96
        %v1509 = vpop.permute.xlu0 %1508
        %1510 = vrot.lane.b32.xlu0 %v1447, 96
        %v1511 = vpop.permute.xlu0 %1510
        %1516 = vrot.lane.b32.xlu0 %v1433, 64
        %v1517 = vpop.permute.xlu0 %1516
        %1518 = vrot.lane.b32.xlu0 %v1437, 64
        %v1519 = vpop.permute.xlu0 %1518
        %1520 = vrot.lane.b32.xlu0 %v1443, 64
        %v1521 = vpop.permute.xlu0 %1520
        %1522 = vrot.lane.b32.xlu0 %v1447, 64
        %v1523 = vpop.permute.xlu0 %1522
        %1528 = vrot.lane.b32.xlu0 %v1433, 32
        %v1529 = vpop.permute.xlu0 %1528
        %1530 = vrot.lane.b32.xlu0 %v1437, 32
        %v1531 = vpop.permute.xlu0 %1530
        %1532 = vrot.lane.b32.xlu0 %v1443, 32
        %v1533 = vpop.permute.xlu0 %1532
        %1534 = vrot.lane.b32.xlu0 %v1447, 32
        %v1535 = vpop.permute.xlu0 %1534
        %1544 = vrot.lane.b32.xlu0 %v1435, 96
        %v1545 = vpop.permute.xlu0 %1544
        %1546 = vrot.lane.b32.xlu0 %v1439, 96
        %v1547 = vpop.permute.xlu0 %1546
        %1548 = vrot.lane.b32.xlu0 %v1445, 96
        %v1549 = vpop.permute.xlu0 %1548
        %1550 = vrot.lane.b32.xlu0 %v1449, 96
        %v1551 = vpop.permute.xlu0 %1550
        %1556 = vrot.lane.b32.xlu0 %v1435, 64
        %v1557 = vpop.permute.xlu0 %1556
        %1558 = vrot.lane.b32.xlu0 %v1439, 64
        %v1559 = vpop.permute.xlu0 %1558
        %1560 = vrot.lane.b32.xlu0 %v1445, 64
        %v1561 = vpop.permute.xlu0 %1560
        %1562 = vrot.lane.b32.xlu0 %v1449, 64
        %v1563 = vpop.permute.xlu0 %1562
        %1568 = vrot.lane.b32.xlu0 %v1435, 32
        %v1569 = vpop.permute.xlu0 %1568
        %1570 = vrot.lane.b32.xlu0 %v1439, 32
        %v1571 = vpop.permute.xlu0 %1570
        %1572 = vrot.lane.b32.xlu0 %v1445, 32
        %v1573 = vpop.permute.xlu0 %1572
        %1574 = vrot.lane.b32.xlu0 %v1449, 32
        %v1575 = vpop.permute.xlu0 %1574
        %1584 = vrot.lane.b32.xlu0 %v1486, 96
        %v1585 = vpop.permute.xlu0 %1584
        %1586 = vrot.lane.b32.xlu0 %v1489, 96
        %v1587 = vpop.permute.xlu0 %1586
        %1588 = vrot.lane.b32.xlu0 %v1494, 96
        %v1589 = vpop.permute.xlu0 %1588
        %1590 = vrot.lane.b32.xlu0 %v1497, 96
        %v1591 = vpop.permute.xlu0 %1590
        %1596 = vrot.lane.b32.xlu0 %v1486, 64
        %v1597 = vpop.permute.xlu0 %1596
        %1598 = vrot.lane.b32.xlu0 %v1489, 64
        %v1599 = vpop.permute.xlu0 %1598
        %1600 = vrot.lane.b32.xlu0 %v1494, 64
        %v1601 = vpop.permute.xlu0 %1600
        %1602 = vrot.lane.b32.xlu0 %v1497, 64
        %v1603 = vpop.permute.xlu0 %1602
        %1608 = vrot.lane.b32.xlu0 %v1486, 32
        %v1609 = vpop.permute.xlu0 %1608
        %1610 = vrot.lane.b32.xlu0 %v1489, 32
        %v1611 = vpop.permute.xlu0 %1610
        %1612 = vrot.lane.b32.xlu0 %v1494, 32
        %v1613 = vpop.permute.xlu0 %1612
        %1614 = vrot.lane.b32.xlu0 %v1497, 32
        %v1615 = vpop.permute.xlu0 %1614
        %v1620 = vpack.c.bf16 %v1437, %v1433
        %v1621 = vpack.c.bf16 %v1447, %v1443
        %v1622 = vpack.c.bf16 %v1507, %v1505
        %v1623 = vpack.c.bf16 %v1511, %v1509
        %v1624 = vpack.c.bf16 %v1519, %v1517
        %v1625 = vpack.c.bf16 %v1523, %v1521
        %v1626 = vpack.c.bf16 %v1531, %v1529
        %v1627 = vpack.c.bf16 %v1535, %v1533
        %v1628 = vpack.c.bf16 %v1439, %v1435
        %v1629 = vpack.c.bf16 %v1449, %v1445
        %v1630 = vpack.c.bf16 %v1547, %v1545
        %v1631 = vpack.c.bf16 %v1551, %v1549
        %v1632 = vpack.c.bf16 %v1559, %v1557
        %v1633 = vpack.c.bf16 %v1563, %v1561
        %v1634 = vpack.c.bf16 %v1571, %v1569
        %v1635 = vpack.c.bf16 %v1575, %v1573
        %vm1636 = vcmask 261120
        %v1638 = vsel %vm1636, %v1620, 0
        %v1641 = vsel %vm1636, %v1621, 0
        %v1644 = vsel %vm1636, %v1628, 0
        %v1647 = vsel %vm1636, %v1629, 0
        %1649 = vmatprep.subr.bf16.mxu0 0
        %1650 = vmatpush1.bf16.xpose.msra.mxu0 %v1644
        %1651 = vmatprep.subr.bf16.mxu0 0
        %1652 = vmatpush1.bf16.xpose.msra.mxu0 %v1647
        %1653 = vmatprep.subr.bf16.mxu0 0
        %1654 = vmatpush1.bf16.xpose.msra.mxu0 0
        %1655 = vmatprep.subr.bf16.mxu0 0
        %1656 = vmatpush1.bf16.xpose.msra.mxu0 0
        %1657 = vmatprep.subr.bf16.mxu0 0
        %1658 = vmatpush1.bf16.xpose.msra.mxu0 0
        %1659 = vmatprep.subr.bf16.mxu0 0
        %1660 = vmatpush1.bf16.xpose.msra.mxu0 0
        %1661 = vmatprep.subr.bf16.mxu0 0
        %1662 = vmatpush1.bf16.xpose.msra.mxu0 0
        %1663 = vmatprep.subr.bf16.mxu0 0
        %1664 = vmatpush1.bf16.xpose.msra.mxu0 0
        %1665 = vmatprep.subr.bf16.mxu0 0
        %1666 = vmatpush1.bf16.xpose.msra.mxu0 0
        %1667 = vmatprep.subr.bf16.mxu0 0
        %1668 = vmatpush1.bf16.xpose.msra.mxu0 0
        %1669 = vmatprep.subr.bf16.mxu0 0
        %1670 = vmatpush1.bf16.xpose.msra.mxu0 0
        %1671 = vmatprep.subr.bf16.mxu0 0
        %1672 = vmatpush1.bf16.xpose.msra.mxu0 0
        %1673 = vmatprep.subr.bf16.mxu0 0
        %1674 = vmatpush1.bf16.xpose.msra.mxu0 0
        %1675 = vmatprep.subr.bf16.mxu0 0
        %1676 = vmatpush1.bf16.xpose.msra.mxu0 0
        %1677 = vmatprep.subr.bf16.mxu0 0
        %1678 = vmatpush1.bf16.xpose.msra.mxu0 0
        %1679 = vmatprep.subr.bf16.mxu0 0
        %1680 = vmatpush1.bf16.xpose.msra.mxu0 0
        %1681 = vmatprep.mubr.bf16.mxu0 0
        %1682 = vmatmul.mubr.bf16.gmra.mrb[0].mxu0 %v1638
        %v1683 = vpop.f32.mrb[0].mxu0
        %v1684 = vadd.f32 0.0, %v1683
        %v1685 = vpop.f32.mrb[0].mxu0
        %v1686 = vpop.f32.mrb[0].mxu0
        %v1687 = vadd.f32 0.0, %v1686
        %v1688 = vpop.f32.mrb[0].mxu0
        %1689 = vmatprep.mubr.bf16.mxu0 0
        %1690 = vmatmul.mubr.bf16.gmra.mrb[0].mxu0 %v1641
        %v1691 = vpop.f32.mrb[0].mxu0
        %v1692 = vadd.f32 0.0, %v1691
        %v1693 = vpop.f32.mrb[0].mxu0
        %v1694 = vpop.f32.mrb[0].mxu0
        %v1695 = vadd.f32 0.0, %v1694
        %v1696 = vpop.f32.mrb[0].mxu0
        %1697 = vdwg.mxu0
        %v1699 = vsel %vm1636, %v1622, 0
        %v1702 = vsel %vm1636, %v1623, 0
        %v1705 = vsel %vm1636, %v1630, 0
        %v1708 = vsel %vm1636, %v1631, 0
        %1710 = vmatprep.subr.bf16.mxu0 0
        %1711 = vmatpush1.bf16.xpose.msra.mxu0 %v1705
        %1712 = vmatprep.subr.bf16.mxu0 0
        %1713 = vmatpush1.bf16.xpose.msra.mxu0 %v1708
        %1714 = vmatprep.subr.bf16.mxu0 0
        %1715 = vmatpush1.bf16.xpose.msra.mxu0 0
        %1716 = vmatprep.subr.bf16.mxu0 0
        %1717 = vmatpush1.bf16.xpose.msra.mxu0 0
        %1718 = vmatprep.subr.bf16.mxu0 0
        %1719 = vmatpush1.bf16.xpose.msra.mxu0 0
        %1720 = vmatprep.subr.bf16.mxu0 0
        %1721 = vmatpush1.bf16.xpose.msra.mxu0 0
        %1722 = vmatprep.subr.bf16.mxu0 0
        %1723 = vmatpush1.bf16.xpose.msra.mxu0 0
        %1724 = vmatprep.subr.bf16.mxu0 0
        %1725 = vmatpush1.bf16.xpose.msra.mxu0 0
        %1726 = vmatprep.subr.bf16.mxu0 0
        %1727 = vmatpush1.bf16.xpose.msra.mxu0 0
        %1728 = vmatprep.subr.bf16.mxu0 0
        %1729 = vmatpush1.bf16.xpose.msra.mxu0 0
        %1730 = vmatprep.subr.bf16.mxu0 0
        %1731 = vmatpush1.bf16.xpose.msra.mxu0 0
        %1732 = vmatprep.subr.bf16.mxu0 0
        %1733 = vmatpush1.bf16.xpose.msra.mxu0 0
        %1734 = vmatprep.subr.bf16.mxu0 0
        %1735 = vmatpush1.bf16.xpose.msra.mxu0 0
        %1736 = vmatprep.subr.bf16.mxu0 0
        %1737 = vmatpush1.bf16.xpose.msra.mxu0 0
        %1738 = vmatprep.subr.bf16.mxu0 0
        %1739 = vmatpush1.bf16.xpose.msra.mxu0 0
        %1740 = vmatprep.subr.bf16.mxu0 0
        %1741 = vmatpush1.bf16.xpose.msra.mxu0 0
        %1742 = vmatprep.mubr.bf16.mxu0 0
        %1743 = vmatmul.mubr.bf16.gmra.mrb[0].mxu0 %v1699
        %v1744 = vpop.f32.mrb[0].mxu0
        %v1745 = vadd.f32 0.0, %v1744
        %v1746 = vpop.f32.mrb[0].mxu0
        %v1747 = vpop.f32.mrb[0].mxu0
        %v1748 = vadd.f32 0.0, %v1747
        %v1749 = vpop.f32.mrb[0].mxu0
        %1750 = vmatprep.mubr.bf16.mxu0 0
        %1751 = vmatmul.mubr.bf16.gmra.mrb[0].mxu0 %v1702
        %v1752 = vpop.f32.mrb[0].mxu0
        %v1753 = vadd.f32 0.0, %v1752
        %v1754 = vpop.f32.mrb[0].mxu0
        %v1755 = vpop.f32.mrb[0].mxu0
        %v1756 = vadd.f32 0.0, %v1755
        %v1757 = vpop.f32.mrb[0].mxu0
        %1758 = vdwg.mxu0
        %v1760 = vsel %vm1636, %v1624, 0
        %v1763 = vsel %vm1636, %v1625, 0
        %v1766 = vsel %vm1636, %v1632, 0
        %v1769 = vsel %vm1636, %v1633, 0
        %1771 = vmatprep.subr.bf16.mxu0 0
        %1772 = vmatpush1.bf16.xpose.msra.mxu0 %v1766
        %1773 = vmatprep.subr.bf16.mxu0 0
        %1774 = vmatpush1.bf16.xpose.msra.mxu0 %v1769
        %1775 = vmatprep.subr.bf16.mxu0 0
        %1776 = vmatpush1.bf16.xpose.msra.mxu0 0
        %1777 = vmatprep.subr.bf16.mxu0 0
        %1778 = vmatpush1.bf16.xpose.msra.mxu0 0
        %1779 = vmatprep.subr.bf16.mxu0 0
        %1780 = vmatpush1.bf16.xpose.msra.mxu0 0
        %1781 = vmatprep.subr.bf16.mxu0 0
        %1782 = vmatpush1.bf16.xpose.msra.mxu0 0
        %1783 = vmatprep.subr.bf16.mxu0 0
        %1784 = vmatpush1.bf16.xpose.msra.mxu0 0
        %1785 = vmatprep.subr.bf16.mxu0 0
        %1786 = vmatpush1.bf16.xpose.msra.mxu0 0
        %1787 = vmatprep.subr.bf16.mxu0 0
        %1788 = vmatpush1.bf16.xpose.msra.mxu0 0
        %1789 = vmatprep.subr.bf16.mxu0 0
        %1790 = vmatpush1.bf16.xpose.msra.mxu0 0
        %1791 = vmatprep.subr.bf16.mxu0 0
        %1792 = vmatpush1.bf16.xpose.msra.mxu0 0
        %1793 = vmatprep.subr.bf16.mxu0 0
        %1794 = vmatpush1.bf16.xpose.msra.mxu0 0
        %1795 = vmatprep.subr.bf16.mxu0 0
        %1796 = vmatpush1.bf16.xpose.msra.mxu0 0
        %1797 = vmatprep.subr.bf16.mxu0 0
        %1798 = vmatpush1.bf16.xpose.msra.mxu0 0
        %1799 = vmatprep.subr.bf16.mxu0 0
        %1800 = vmatpush1.bf16.xpose.msra.mxu0 0
        %1801 = vmatprep.subr.bf16.mxu0 0
        %1802 = vmatpush1.bf16.xpose.msra.mxu0 0
        %1803 = vmatprep.mubr.bf16.mxu0 0
        %1804 = vmatmul.mubr.bf16.gmra.mrb[0].mxu0 %v1760
        %v1805 = vpop.f32.mrb[0].mxu0
        %v1806 = vadd.f32 0.0, %v1805
        %v1807 = vpop.f32.mrb[0].mxu0
        %v1808 = vpop.f32.mrb[0].mxu0
        %v1809 = vadd.f32 0.0, %v1808
        %v1810 = vpop.f32.mrb[0].mxu0
        %1811 = vmatprep.mubr.bf16.mxu0 0
        %1812 = vmatmul.mubr.bf16.gmra.mrb[0].mxu0 %v1763
        %v1813 = vpop.f32.mrb[0].mxu0
        %v1814 = vadd.f32 0.0, %v1813
        %v1815 = vpop.f32.mrb[0].mxu0
        %v1816 = vpop.f32.mrb[0].mxu0
        %v1817 = vadd.f32 0.0, %v1816
        %v1818 = vpop.f32.mrb[0].mxu0
        %1819 = vdwg.mxu0
        %v1821 = vsel %vm1636, %v1626, 0
        %v1824 = vsel %vm1636, %v1627, 0
        %v1827 = vsel %vm1636, %v1634, 0
        %v1830 = vsel %vm1636, %v1635, 0
        %1832 = vmatprep.subr.bf16.mxu0 0
        %1833 = vmatpush1.bf16.xpose.msra.mxu0 %v1827
        %1834 = vmatprep.subr.bf16.mxu0 0
        %1835 = vmatpush1.bf16.xpose.msra.mxu0 %v1830
        %1836 = vmatprep.subr.bf16.mxu0 0
        %1837 = vmatpush1.bf16.xpose.msra.mxu0 0
        %1838 = vmatprep.subr.bf16.mxu0 0
        %1839 = vmatpush1.bf16.xpose.msra.mxu0 0
        %1840 = vmatprep.subr.bf16.mxu0 0
        %1841 = vmatpush1.bf16.xpose.msra.mxu0 0
        %1842 = vmatprep.subr.bf16.mxu0 0
        %1843 = vmatpush1.bf16.xpose.msra.mxu0 0
        %1844 = vmatprep.subr.bf16.mxu0 0
        %1845 = vmatpush1.bf16.xpose.msra.mxu0 0
        %1846 = vmatprep.subr.bf16.mxu0 0
        %1847 = vmatpush1.bf16.xpose.msra.mxu0 0
        %1848 = vmatprep.subr.bf16.mxu0 0
        %1849 = vmatpush1.bf16.xpose.msra.mxu0 0
        %1850 = vmatprep.subr.bf16.mxu0 0
        %1851 = vmatpush1.bf16.xpose.msra.mxu0 0
        %1852 = vmatprep.subr.bf16.mxu0 0
        %1853 = vmatpush1.bf16.xpose.msra.mxu0 0
        %1854 = vmatprep.subr.bf16.mxu0 0
        %1855 = vmatpush1.bf16.xpose.msra.mxu0 0
        %1856 = vmatprep.subr.bf16.mxu0 0
        %1857 = vmatpush1.bf16.xpose.msra.mxu0 0
        %1858 = vmatprep.subr.bf16.mxu0 0
        %1859 = vmatpush1.bf16.xpose.msra.mxu0 0
        %1860 = vmatprep.subr.bf16.mxu0 0
        %1861 = vmatpush1.bf16.xpose.msra.mxu0 0
        %1862 = vmatprep.subr.bf16.mxu0 0
        %1863 = vmatpush1.bf16.xpose.msra.mxu0 0
        %1864 = vmatprep.mubr.bf16.mxu0 0
        %1865 = vmatmul.mubr.bf16.gmra.mrb[0].mxu0 %v1821
        %v1866 = vpop.f32.mrb[0].mxu0
        %v1867 = vadd.f32 0.0, %v1866
        %v1868 = vpop.f32.mrb[0].mxu0
        %v1869 = vpop.f32.mrb[0].mxu0
        %v1870 = vadd.f32 0.0, %v1869
        %v1871 = vpop.f32.mrb[0].mxu0
        %1872 = vmatprep.mubr.bf16.mxu0 0
        %1873 = vmatmul.mubr.bf16.gmra.mrb[0].mxu0 %v1824
        %v1874 = vpop.f32.mrb[0].mxu0
        %v1875 = vadd.f32 0.0, %v1874
        %v1876 = vpop.f32.mrb[0].mxu0
        %v1877 = vpop.f32.mrb[0].mxu0
        %v1878 = vadd.f32 0.0, %v1877
        %v1879 = vpop.f32.mrb[0].mxu0
        %1880 = vdwg.mxu0
        %v1881 = vmul.f32 %v1684, 0.17677669
        %v1882 = vmul.f32 %v1687, 0.17677669
        %v1883 = vmul.f32 %v1692, 0.17677669
        %v1884 = vmul.f32 %v1695, 0.17677669
        %v1885 = vmul.f32 %v1745, 0.17677669
        %v1886 = vmul.f32 %v1748, 0.17677669
        %v1887 = vmul.f32 %v1753, 0.17677669
        %v1888 = vmul.f32 %v1756, 0.17677669
        %v1889 = vmul.f32 %v1806, 0.17677669
        %v1890 = vmul.f32 %v1809, 0.17677669
        %v1891 = vmul.f32 %v1814, 0.17677669
        %v1892 = vmul.f32 %v1817, 0.17677669
        %v1893 = vmul.f32 %v1867, 0.17677669
        %v1894 = vmul.f32 %v1870, 0.17677669
        %v1895 = vmul.f32 %v1875, 0.17677669
        %v1896 = vmul.f32 %v1878, 0.17677669
        %v1898 = vlaneseq
        %v1899 = vshrl.u32 %v1898, 7
        %v1900 = vsub.s32 0, %v1899
        %v1901 = vrot.slane %v1218, %v1900
        %v1903 = vadd.f32 %v1881, %v1901
        %v1904 = vadd.f32 %v1882, %v1901
        %v1905 = vadd.f32 %v1883, %v1901
        %v1906 = vadd.f32 %v1884, %v1901
        %v1907 = vadd.f32 %v1885, %v1901
        %v1908 = vadd.f32 %v1886, %v1901
        %v1909 = vadd.f32 %v1887, %v1901
        %v1910 = vadd.f32 %v1888, %v1901
        %v1911 = vadd.f32 %v1889, %v1901
        %v1912 = vadd.f32 %v1890, %v1901
        %v1913 = vadd.f32 %v1891, %v1901
        %v1914 = vadd.f32 %v1892, %v1901
        %v1915 = vadd.f32 %v1893, %v1901
        %v1916 = vadd.f32 %v1894, %v1901
        %v1917 = vadd.f32 %v1895, %v1901
        %v1918 = vadd.f32 %v1896, %v1901
        %v1919 = vsel %vm1636, %v1903, -inf
        %1920 = vmax.xlane.f32.xlu0 %v1919
        %v1921 = vpop.xlane.xlu0 %1920
        %v1922 = vsel %vm1636, %v1904, -inf
        %1923 = vmax.xlane.f32.xlu0 %v1922
        %v1924 = vpop.xlane.xlu0 %1923
        %v1925 = vsel %vm1636, %v1905, -inf
        %1926 = vmax.xlane.f32.xlu0 %v1925
        %v1927 = vpop.xlane.xlu0 %1926
        %v1928 = vsel %vm1636, %v1906, -inf
        %1929 = vmax.xlane.f32.xlu0 %v1928
        %v1930 = vpop.xlane.xlu0 %1929
        %v1931 = vsel %vm1636, %v1907, -inf
        %1932 = vmax.xlane.f32.xlu0 %v1931
        %v1933 = vpop.xlane.xlu0 %1932
        %v1934 = vsel %vm1636, %v1908, -inf
        %1935 = vmax.xlane.f32.xlu0 %v1934
        %v1936 = vpop.xlane.xlu0 %1935
        %v1937 = vsel %vm1636, %v1909, -inf
        %1938 = vmax.xlane.f32.xlu0 %v1937
        %v1939 = vpop.xlane.xlu0 %1938
        %v1940 = vsel %vm1636, %v1910, -inf
        %1941 = vmax.xlane.f32.xlu0 %v1940
        %v1942 = vpop.xlane.xlu0 %1941
        %v1943 = vsel %vm1636, %v1911, -inf
        %1944 = vmax.xlane.f32.xlu0 %v1943
        %v1945 = vpop.xlane.xlu0 %1944
        %v1946 = vsel %vm1636, %v1912, -inf
        %1947 = vmax.xlane.f32.xlu0 %v1946
        %v1948 = vpop.xlane.xlu0 %1947
        %v1949 = vsel %vm1636, %v1913, -inf
        %1950 = vmax.xlane.f32.xlu0 %v1949
        %v1951 = vpop.xlane.xlu0 %1950
        %v1952 = vsel %vm1636, %v1914, -inf
        %1953 = vmax.xlane.f32.xlu0 %v1952
        %v1954 = vpop.xlane.xlu0 %1953
        %v1955 = vsel %vm1636, %v1915, -inf
        %1956 = vmax.xlane.f32.xlu0 %v1955
        %v1957 = vpop.xlane.xlu0 %1956
        %v1958 = vsel %vm1636, %v1916, -inf
        %1959 = vmax.xlane.f32.xlu0 %v1958
        %v1960 = vpop.xlane.xlu0 %1959
        %v1961 = vsel %vm1636, %v1917, -inf
        %1962 = vmax.xlane.f32.xlu0 %v1961
        %v1963 = vpop.xlane.xlu0 %1962
        %v1964 = vsel %vm1636, %v1918, -inf
        %1965 = vmax.xlane.f32.xlu0 %v1964
        %v1966 = vpop.xlane.xlu0 %1965
        %v1967 = vsub.f32 %v1903, %v1921
        %v1968 = vsub.f32 %v1904, %v1924
        %v1969 = vsub.f32 %v1905, %v1927
        %v1970 = vsub.f32 %v1906, %v1930
        %v1971 = vsub.f32 %v1907, %v1933
        %v1972 = vsub.f32 %v1908, %v1936
        %v1973 = vsub.f32 %v1909, %v1939
        %v1974 = vsub.f32 %v1910, %v1942
        %v1975 = vsub.f32 %v1911, %v1945
        %v1976 = vsub.f32 %v1912, %v1948
        %v1977 = vsub.f32 %v1913, %v1951
        %v1978 = vsub.f32 %v1914, %v1954
        %v1979 = vsub.f32 %v1915, %v1957
        %v1980 = vsub.f32 %v1916, %v1960
        %v1981 = vsub.f32 %v1917, %v1963
        %v1982 = vsub.f32 %v1918, %v1966
        %v1983 = vmul.f32 %v1967, 1.442695
        %v1984 = vpow.pop %v1983
        %v1985 = vmul.f32 %v1968, 1.442695
        %v1986 = vpow.pop %v1985
        %v1987 = vmul.f32 %v1969, 1.442695
        %v1988 = vpow.pop %v1987
        %v1989 = vmul.f32 %v1970, 1.442695
        %v1990 = vpow.pop %v1989
        %v1991 = vmul.f32 %v1971, 1.442695
        %v1992 = vpow.pop %v1991
        %v1993 = vmul.f32 %v1972, 1.442695
        %v1994 = vpow.pop %v1993
        %v1995 = vmul.f32 %v1973, 1.442695
        %v1996 = vpow.pop %v1995
        %v1997 = vmul.f32 %v1974, 1.442695
        %v1998 = vpow.pop %v1997
        %v1999 = vmul.f32 %v1975, 1.442695
        %v2000 = vpow.pop %v1999
        %v2001 = vmul.f32 %v1976, 1.442695
        %v2002 = vpow.pop %v2001
        %v2003 = vmul.f32 %v1977, 1.442695
        %v2004 = vpow.pop %v2003
        %v2005 = vmul.f32 %v1978, 1.442695
        %v2006 = vpow.pop %v2005
        %v2007 = vmul.f32 %v1979, 1.442695
        %v2008 = vpow.pop %v2007
        %v2009 = vmul.f32 %v1980, 1.442695
        %v2010 = vpow.pop %v2009
        %v2011 = vmul.f32 %v1981, 1.442695
        %v2012 = vpow.pop %v2011
        %v2013 = vmul.f32 %v1982, 1.442695
        %v2014 = vpow.pop %v2013
        %v2015 = vsel %vm1636, %v1984, 0.0
        %2016 = vadd.xlane.f32.xlu0 %v2015
        %v2017 = vpop.xlane.xlu0 %2016
        %v2018 = vsel %vm1636, %v1986, 0.0
        %2019 = vadd.xlane.f32.xlu0 %v2018
        %v2020 = vpop.xlane.xlu0 %2019
        %v2021 = vsel %vm1636, %v1988, 0.0
        %2022 = vadd.xlane.f32.xlu0 %v2021
        %v2023 = vpop.xlane.xlu0 %2022
        %v2024 = vsel %vm1636, %v1990, 0.0
        %2025 = vadd.xlane.f32.xlu0 %v2024
        %v2026 = vpop.xlane.xlu0 %2025
        %v2027 = vsel %vm1636, %v1992, 0.0
        %2028 = vadd.xlane.f32.xlu0 %v2027
        %v2029 = vpop.xlane.xlu0 %2028
        %v2030 = vsel %vm1636, %v1994, 0.0
        %2031 = vadd.xlane.f32.xlu0 %v2030
        %v2032 = vpop.xlane.xlu0 %2031
        %v2033 = vsel %vm1636, %v1996, 0.0
        %2034 = vadd.xlane.f32.xlu0 %v2033
        %v2035 = vpop.xlane.xlu0 %2034
        %v2036 = vsel %vm1636, %v1998, 0.0
        %2037 = vadd.xlane.f32.xlu0 %v2036
        %v2038 = vpop.xlane.xlu0 %2037
        %v2039 = vsel %vm1636, %v2000, 0.0
        %2040 = vadd.xlane.f32.xlu0 %v2039
        %v2041 = vpop.xlane.xlu0 %2040
        %v2042 = vsel %vm1636, %v2002, 0.0
        %2043 = vadd.xlane.f32.xlu0 %v2042
        %v2044 = vpop.xlane.xlu0 %2043
        %v2045 = vsel %vm1636, %v2004, 0.0
        %2046 = vadd.xlane.f32.xlu0 %v2045
        %v2047 = vpop.xlane.xlu0 %2046
        %v2048 = vsel %vm1636, %v2006, 0.0
        %2049 = vadd.xlane.f32.xlu0 %v2048
        %v2050 = vpop.xlane.xlu0 %2049
        %v2051 = vsel %vm1636, %v2008, 0.0
        %2052 = vadd.xlane.f32.xlu0 %v2051
        %v2053 = vpop.xlane.xlu0 %2052
        %v2054 = vsel %vm1636, %v2010, 0.0
        %2055 = vadd.xlane.f32.xlu0 %v2054
        %v2056 = vpop.xlane.xlu0 %2055
        %v2057 = vsel %vm1636, %v2012, 0.0
        %2058 = vadd.xlane.f32.xlu0 %v2057
        %v2059 = vpop.xlane.xlu0 %2058
        %v2060 = vsel %vm1636, %v2014, 0.0
        %2061 = vadd.xlane.f32.xlu0 %v2060
        %v2062 = vpop.xlane.xlu0 %2061
        %v2063 = vrcp.pop %v2017
        %v2064 = vrcp.pop %v2020
        %v2065 = vrcp.pop %v2023
        %v2066 = vrcp.pop %v2026
        %v2067 = vrcp.pop %v2029
        %v2068 = vrcp.pop %v2032
        %v2069 = vrcp.pop %v2035
        %v2070 = vrcp.pop %v2038
        %v2071 = vrcp.pop %v2041
        %v2072 = vrcp.pop %v2044
        %v2073 = vrcp.pop %v2047
        %v2074 = vrcp.pop %v2050
        %v2075 = vrcp.pop %v2053
        %v2076 = vrcp.pop %v2056
        %v2077 = vrcp.pop %v2059
        %v2078 = vrcp.pop %v2062
        %v2079 = vmul.f32 %v1984, %v2063
        %v2080 = vmul.f32 %v1986, %v2064
        %v2081 = vmul.f32 %v1988, %v2065
        %v2082 = vmul.f32 %v1990, %v2066
        %v2083 = vmul.f32 %v1992, %v2067
        %v2084 = vmul.f32 %v1994, %v2068
        %v2085 = vmul.f32 %v1996, %v2069
        %v2086 = vmul.f32 %v1998, %v2070
        %v2087 = vmul.f32 %v2000, %v2071
        %v2088 = vmul.f32 %v2002, %v2072
        %v2089 = vmul.f32 %v2004, %v2073
        %v2090 = vmul.f32 %v2006, %v2074
        %v2091 = vmul.f32 %v2008, %v2075
        %v2092 = vmul.f32 %v2010, %v2076
        %v2093 = vmul.f32 %v2012, %v2077
        %v2094 = vmul.f32 %v2014, %v2078
        %v2095 = vpack.c.bf16 %v2080, %v2079
        %v2096 = vpack.c.bf16 %v2082, %v2081
        %v2097 = vpack.c.bf16 %v2084, %v2083
        %v2098 = vpack.c.bf16 %v2086, %v2085
        %v2099 = vpack.c.bf16 %v2088, %v2087
        %v2100 = vpack.c.bf16 %v2090, %v2089
        %v2101 = vpack.c.bf16 %v2092, %v2091
        %v2102 = vpack.c.bf16 %v2094, %v2093
        %v2103 = vpack.c.bf16 %v1489, %v1486
        %v2104 = vpack.c.bf16 %v1497, %v1494
        %v2105 = vpack.c.bf16 %v1587, %v1585
        %v2106 = vpack.c.bf16 %v1591, %v1589
        %v2107 = vpack.c.bf16 %v1599, %v1597
        %v2108 = vpack.c.bf16 %v1603, %v1601
        %v2109 = vpack.c.bf16 %v1611, %v1609
        %v2110 = vpack.c.bf16 %v1615, %v1613
        %v2112 = vsel %vm1636, %v2095, 0
        %v2115 = vsel %vm1636, %v2096, 0
        %2117 = vmatprep.subr.bf16.mxu0 0
        %2118 = vmatpush1.bf16.msra.mxu0 %v2103
        %2119 = vmatprep.subr.bf16.mxu0 0
        %2120 = vmatpush1.bf16.msra.mxu0 %v2104
        %2121 = vmatprep.subr.bf16.mxu0 0
        %2122 = vmatpush1.bf16.msra.mxu0 0
        %2123 = vmatprep.subr.bf16.mxu0 0
        %2124 = vmatpush1.bf16.msra.mxu0 0
        %2125 = vmatprep.subr.bf16.mxu0 0
        %2126 = vmatpush1.bf16.msra.mxu0 0
        %2127 = vmatprep.subr.bf16.mxu0 0
        %2128 = vmatpush1.bf16.msra.mxu0 0
        %2129 = vmatprep.subr.bf16.mxu0 0
        %2130 = vmatpush1.bf16.msra.mxu0 0
        %2131 = vmatprep.subr.bf16.mxu0 0
        %2132 = vmatpush1.bf16.msra.mxu0 0
        %2133 = vmatprep.subr.bf16.mxu0 0
        %2134 = vmatpush1.bf16.msra.mxu0 0
        %2135 = vmatprep.subr.bf16.mxu0 0
        %2136 = vmatpush1.bf16.msra.mxu0 0
        %2137 = vmatprep.subr.bf16.mxu0 0
        %2138 = vmatpush1.bf16.msra.mxu0 0
        %2139 = vmatprep.subr.bf16.mxu0 0
        %2140 = vmatpush1.bf16.msra.mxu0 0
        %2141 = vmatprep.subr.bf16.mxu0 0
        %2142 = vmatpush1.bf16.msra.mxu0 0
        %2143 = vmatprep.subr.bf16.mxu0 0
        %2144 = vmatpush1.bf16.msra.mxu0 0
        %2145 = vmatprep.subr.bf16.mxu0 0
        %2146 = vmatpush1.bf16.msra.mxu0 0
        %2147 = vmatprep.subr.bf16.mxu0 0
        %2148 = vmatpush1.bf16.msra.mxu0 0
        %2149 = vmatprep.mubr.bf16.mxu0 0
        %2150 = vmatmul.mubr.bf16.gmra.mrb[0].mxu0 %v2112
        %v2151 = vpop.f32.mrb[0].mxu0
        %v2152 = vadd.f32 0.0, %v2151
        %v2153 = vpop.f32.mrb[0].mxu0
        %v2154 = vpop.f32.mrb[0].mxu0
        %v2155 = vadd.f32 0.0, %v2154
        %v2156 = vpop.f32.mrb[0].mxu0
        %2157 = vmatprep.mubr.bf16.mxu0 0
        %2158 = vmatmul.mubr.bf16.gmra.mrb[0].mxu0 %v2115
        %v2159 = vpop.f32.mrb[0].mxu0
        %v2160 = vadd.f32 0.0, %v2159
        %v2161 = vpop.f32.mrb[0].mxu0
        %v2162 = vpop.f32.mrb[0].mxu0
        %v2163 = vadd.f32 0.0, %v2162
        %v2164 = vpop.f32.mrb[0].mxu0
        %2165 = vdwg.mxu0
        %v2167 = vsel %vm1636, %v2097, 0
        %v2170 = vsel %vm1636, %v2098, 0
        %2172 = vmatprep.subr.bf16.mxu0 0
        %2173 = vmatpush1.bf16.msra.mxu0 %v2105
        %2174 = vmatprep.subr.bf16.mxu0 0
        %2175 = vmatpush1.bf16.msra.mxu0 %v2106
        %2176 = vmatprep.subr.bf16.mxu0 0
        %2177 = vmatpush1.bf16.msra.mxu0 0
        %2178 = vmatprep.subr.bf16.mxu0 0
        %2179 = vmatpush1.bf16.msra.mxu0 0
        %2180 = vmatprep.subr.bf16.mxu0 0
        %2181 = vmatpush1.bf16.msra.mxu0 0
        %2182 = vmatprep.subr.bf16.mxu0 0
        %2183 = vmatpush1.bf16.msra.mxu0 0
        %2184 = vmatprep.subr.bf16.mxu0 0
        %2185 = vmatpush1.bf16.msra.mxu0 0
        %2186 = vmatprep.subr.bf16.mxu0 0
        %2187 = vmatpush1.bf16.msra.mxu0 0
        %2188 = vmatprep.subr.bf16.mxu0 0
        %2189 = vmatpush1.bf16.msra.mxu0 0
        %2190 = vmatprep.subr.bf16.mxu0 0
        %2191 = vmatpush1.bf16.msra.mxu0 0
        %2192 = vmatprep.subr.bf16.mxu0 0
        %2193 = vmatpush1.bf16.msra.mxu0 0
        %2194 = vmatprep.subr.bf16.mxu0 0
        %2195 = vmatpush1.bf16.msra.mxu0 0
        %2196 = vmatprep.subr.bf16.mxu0 0
        %2197 = vmatpush1.bf16.msra.mxu0 0
        %2198 = vmatprep.subr.bf16.mxu0 0
        %2199 = vmatpush1.bf16.msra.mxu0 0
        %2200 = vmatprep.subr.bf16.mxu0 0
        %2201 = vmatpush1.bf16.msra.mxu0 0
        %2202 = vmatprep.subr.bf16.mxu0 0
        %2203 = vmatpush1.bf16.msra.mxu0 0
        %2204 = vmatprep.mubr.bf16.mxu0 0
        %2205 = vmatmul.mubr.bf16.gmra.mrb[0].mxu0 %v2167
        %v2206 = vpop.f32.mrb[0].mxu0
        %v2207 = vadd.f32 0.0, %v2206
        %v2208 = vpop.f32.mrb[0].mxu0
        %v2209 = vpop.f32.mrb[0].mxu0
        %v2210 = vadd.f32 0.0, %v2209
        %v2211 = vpop.f32.mrb[0].mxu0
        %2212 = vmatprep.mubr.bf16.mxu0 0
        %2213 = vmatmul.mubr.bf16.gmra.mrb[0].mxu0 %v2170
        %v2214 = vpop.f32.mrb[0].mxu0
        %v2215 = vadd.f32 0.0, %v2214
        %v2216 = vpop.f32.mrb[0].mxu0
        %v2217 = vpop.f32.mrb[0].mxu0
        %v2218 = vadd.f32 0.0, %v2217
        %v2219 = vpop.f32.mrb[0].mxu0
        %2220 = vdwg.mxu0
        %v2222 = vsel %vm1636, %v2099, 0
        %v2225 = vsel %vm1636, %v2100, 0
        %2227 = vmatprep.subr.bf16.mxu0 0
        %2228 = vmatpush1.bf16.msra.mxu0 %v2107
        %2229 = vmatprep.subr.bf16.mxu0 0
        %2230 = vmatpush1.bf16.msra.mxu0 %v2108
        %2231 = vmatprep.subr.bf16.mxu0 0
        %2232 = vmatpush1.bf16.msra.mxu0 0
        %2233 = vmatprep.subr.bf16.mxu0 0
        %2234 = vmatpush1.bf16.msra.mxu0 0
        %2235 = vmatprep.subr.bf16.mxu0 0
        %2236 = vmatpush1.bf16.msra.mxu0 0
        %2237 = vmatprep.subr.bf16.mxu0 0
        %2238 = vmatpush1.bf16.msra.mxu0 0
        %2239 = vmatprep.subr.bf16.mxu0 0
        %2240 = vmatpush1.bf16.msra.mxu0 0
        %2241 = vmatprep.subr.bf16.mxu0 0
        %2242 = vmatpush1.bf16.msra.mxu0 0
        %2243 = vmatprep.subr.bf16.mxu0 0
        %2244 = vmatpush1.bf16.msra.mxu0 0
        %2245 = vmatprep.subr.bf16.mxu0 0
        %2246 = vmatpush1.bf16.msra.mxu0 0
        %2247 = vmatprep.subr.bf16.mxu0 0
        %2248 = vmatpush1.bf16.msra.mxu0 0
        %2249 = vmatprep.subr.bf16.mxu0 0
        %2250 = vmatpush1.bf16.msra.mxu0 0
        %2251 = vmatprep.subr.bf16.mxu0 0
        %2252 = vmatpush1.bf16.msra.mxu0 0
        %2253 = vmatprep.subr.bf16.mxu0 0
        %2254 = vmatpush1.bf16.msra.mxu0 0
        %2255 = vmatprep.subr.bf16.mxu0 0
        %2256 = vmatpush1.bf16.msra.mxu0 0
        %2257 = vmatprep.subr.bf16.mxu0 0
        %2258 = vmatpush1.bf16.msra.mxu0 0
        %2259 = vmatprep.mubr.bf16.mxu0 0
        %2260 = vmatmul.mubr.bf16.gmra.mrb[0].mxu0 %v2222
        %v2261 = vpop.f32.mrb[0].mxu0
        %v2262 = vadd.f32 0.0, %v2261
        %v2263 = vpop.f32.mrb[0].mxu0
        %v2264 = vpop.f32.mrb[0].mxu0
        %v2265 = vadd.f32 0.0, %v2264
        %v2266 = vpop.f32.mrb[0].mxu0
        %2267 = vmatprep.mubr.bf16.mxu0 0
        %2268 = vmatmul.mubr.bf16.gmra.mrb[0].mxu0 %v2225
        %v2269 = vpop.f32.mrb[0].mxu0
        %v2270 = vadd.f32 0.0, %v2269
        %v2271 = vpop.f32.mrb[0].mxu0
        %v2272 = vpop.f32.mrb[0].mxu0
        %v2273 = vadd.f32 0.0, %v2272
        %v2274 = vpop.f32.mrb[0].mxu0
        %2275 = vdwg.mxu0
        %v2277 = vsel %vm1636, %v2101, 0
        %v2280 = vsel %vm1636, %v2102, 0
        %2282 = vmatprep.subr.bf16.mxu0 0
        %2283 = vmatpush1.bf16.msra.mxu0 %v2109
        %2284 = vmatprep.subr.bf16.mxu0 0
        %2285 = vmatpush1.bf16.msra.mxu0 %v2110
        %2286 = vmatprep.subr.bf16.mxu0 0
        %2287 = vmatpush1.bf16.msra.mxu0 0
        %2288 = vmatprep.subr.bf16.mxu0 0
        %2289 = vmatpush1.bf16.msra.mxu0 0
        %2290 = vmatprep.subr.bf16.mxu0 0
        %2291 = vmatpush1.bf16.msra.mxu0 0
        %2292 = vmatprep.subr.bf16.mxu0 0
        %2293 = vmatpush1.bf16.msra.mxu0 0
        %2294 = vmatprep.subr.bf16.mxu0 0
        %2295 = vmatpush1.bf16.msra.mxu0 0
        %2296 = vmatprep.subr.bf16.mxu0 0
        %2297 = vmatpush1.bf16.msra.mxu0 0
        %2298 = vmatprep.subr.bf16.mxu0 0
        %2299 = vmatpush1.bf16.msra.mxu0 0
        %2300 = vmatprep.subr.bf16.mxu0 0
        %2301 = vmatpush1.bf16.msra.mxu0 0
        %2302 = vmatprep.subr.bf16.mxu0 0
        %2303 = vmatpush1.bf16.msra.mxu0 0
        %2304 = vmatprep.subr.bf16.mxu0 0
        %2305 = vmatpush1.bf16.msra.mxu0 0
        %2306 = vmatprep.subr.bf16.mxu0 0
        %2307 = vmatpush1.bf16.msra.mxu0 0
        %2308 = vmatprep.subr.bf16.mxu0 0
        %2309 = vmatpush1.bf16.msra.mxu0 0
        %2310 = vmatprep.subr.bf16.mxu0 0
        %2311 = vmatpush1.bf16.msra.mxu0 0
        %2312 = vmatprep.subr.bf16.mxu0 0
        %2313 = vmatpush1.bf16.msra.mxu0 0
        %2314 = vmatprep.mubr.bf16.mxu0 0
        %2315 = vmatmul.mubr.bf16.gmra.mrb[0].mxu0 %v2277
        %v2316 = vpop.f32.mrb[0].mxu0
        %v2317 = vadd.f32 0.0, %v2316
        %v2318 = vpop.f32.mrb[0].mxu0
        %v2319 = vpop.f32.mrb[0].mxu0
        %v2320 = vadd.f32 0.0, %v2319
        %v2321 = vpop.f32.mrb[0].mxu0
        %2322 = vmatprep.mubr.bf16.mxu0 0
        %2323 = vmatmul.mubr.bf16.gmra.mrb[0].mxu0 %v2280
        %v2324 = vpop.f32.mrb[0].mxu0
        %v2325 = vadd.f32 0.0, %v2324
        %v2326 = vpop.f32.mrb[0].mxu0
        %v2327 = vpop.f32.mrb[0].mxu0
        %v2328 = vadd.f32 0.0, %v2327
        %v2329 = vpop.f32.mrb[0].mxu0
        %2330 = vdwg.mxu0
        %2331 = vst.msk [vmem:[#allocation3] sm:$0xff] %vm1636, %v2152
        %2332 = vst.msk [vmem:[#allocation3 + $0x8] sm:$0xff] %vm1636, %v2155
        %2333 = vst.msk [vmem:[#allocation3 + $0x10] sm:$0xff] %vm1636, %v2160
        %2334 = vst.msk [vmem:[#allocation3 + $0x18] sm:$0xff] %vm1636, %v2163
        %2339 = vrot.lane.b32.xlu0 %v2207, 32
        %v2340 = vpop.permute.xlu0 %2339
        %2341 = vrot.lane.b32.xlu0 %v2210, 32
        %v2342 = vpop.permute.xlu0 %2341
        %2343 = vrot.lane.b32.xlu0 %v2215, 32
        %v2344 = vpop.permute.xlu0 %2343
        %2345 = vrot.lane.b32.xlu0 %v2218, 32
        %v2346 = vpop.permute.xlu0 %2345
        %vm2351 = vcmask 523520
        %2352 = vst.msk [vmem:[#allocation3] sm:$0xff] %vm2351, %v2340
        %2353 = vst.msk [vmem:[#allocation3 + $0x8] sm:$0xff] %vm2351, %v2342
        %2354 = vst.msk [vmem:[#allocation3 + $0x10] sm:$0xff] %vm2351, %v2344
        %2355 = vst.msk [vmem:[#allocation3 + $0x18] sm:$0xff] %vm2351, %v2346
        %2360 = vrot.lane.b32.xlu0 %v2262, 64
        %v2361 = vpop.permute.xlu0 %2360
        %2362 = vrot.lane.b32.xlu0 %v2265, 64
        %v2363 = vpop.permute.xlu0 %2362
        %2364 = vrot.lane.b32.xlu0 %v2270, 64
        %v2365 = vpop.permute.xlu0 %2364
        %2366 = vrot.lane.b32.xlu0 %v2273, 64
        %v2367 = vpop.permute.xlu0 %2366
        %vm2372 = vcmask 785920
        %2373 = vst.msk [vmem:[#allocation3] sm:$0xff] %vm2372, %v2361
        %2374 = vst.msk [vmem:[#allocation3 + $0x8] sm:$0xff] %vm2372, %v2363
        %2375 = vst.msk [vmem:[#allocation3 + $0x10] sm:$0xff] %vm2372, %v2365
        %2376 = vst.msk [vmem:[#allocation3 + $0x18] sm:$0xff] %vm2372, %v2367
        %2381 = vrot.lane.b32.xlu0 %v2317, 96
        %v2382 = vpop.permute.xlu0 %2381
        %2383 = vrot.lane.b32.xlu0 %v2320, 96
        %v2384 = vpop.permute.xlu0 %2383
        %2385 = vrot.lane.b32.xlu0 %v2325, 96
        %v2386 = vpop.permute.xlu0 %2385
        %2387 = vrot.lane.b32.xlu0 %v2328, 96
        %v2388 = vpop.permute.xlu0 %2387
        %vm2393 = vcmask 1048320
        %2394 = vst.msk [vmem:[#allocation3] sm:$0xff] %vm2393, %v2382
        %2395 = vst.msk [vmem:[#allocation3 + $0x8] sm:$0xff] %vm2393, %v2384
        %2396 = vst.msk [vmem:[#allocation3 + $0x10] sm:$0xff] %vm2393, %v2386
        %2397 = vst.msk [vmem:[#allocation3 + $0x18] sm:$0xff] %vm2393, %v2388
        %v2398 = vld [vmem:[#allocation3] sm:$0xff]
        %v2399 = vld [vmem:[#allocation3 + $0x8] sm:$0xff]
        %v2400 = vld [vmem:[#allocation3 + $0x10] sm:$0xff]
        %v2401 = vld [vmem:[#allocation3 + $0x18] sm:$0xff]
        %v2402 = vpack.c.bf16 %v2399, %v2398
        %v2403 = vpack.c.bf16 %v2401, %v2400
        %v2404 = vld [vmem:[%s901] sm:$0xf]
        %v2405 = vld [vmem:[%s901 + $0x4] sm:$0xf]
        %v2406 = vld [vmem:[%s901 + $0x8] sm:$0xf]
        %v2407 = vld [vmem:[%s901 + $0xc] sm:$0xf]
        %v2408 = vld [vmem:[%s901 + $0x10] sm:$0xf]
        %v2409 = vld [vmem:[%s901 + $0x14] sm:$0xf]
        %v2410 = vld [vmem:[%s901 + $0x18] sm:$0xf]
        %v2411 = vld [vmem:[%s901 + $0x1c] sm:$0xf]
        %v2412 = vld [vmem:[%s901 + $0x20] sm:$0xf]
        %v2413 = vld [vmem:[%s901 + $0x24] sm:$0xf]
        %v2414 = vld [vmem:[%s901 + $0x28] sm:$0xf]
        %v2415 = vld [vmem:[%s901 + $0x2c] sm:$0xf]
        %v2416 = vld [vmem:[%s901 + $0x30] sm:$0xf]
        %v2417 = vld [vmem:[%s901 + $0x34] sm:$0xf]
        %v2418 = vld [vmem:[%s901 + $0x38] sm:$0xf]
        %v2419 = vld [vmem:[%s901 + $0x3c] sm:$0xf]
        %v2420 = vld [vmem:[%s909] sm:$0x1]
        %v2422 = vlaneseq
        %v2423 = vshrl.u32 %v2422, 7
        %v2424 = vsub.s32 0, %v2423
        %v2425 = vrot.slane %v2420, %v2424
        %v2443 = vunpack.c.l.b16 %v2404
        %v2444 = vunpack.c.l.b16 %v2405
        %v2445 = vunpack.c.l.b16 %v2406
        %v2446 = vunpack.c.l.b16 %v2407
        %v2447 = vunpack.c.l.b16 %v2408
        %v2448 = vunpack.c.l.b16 %v2409
        %v2449 = vunpack.c.l.b16 %v2410
        %v2450 = vunpack.c.l.b16 %v2411
        %v2451 = vunpack.c.l.b16 %v2412
        %v2452 = vunpack.c.l.b16 %v2413
        %v2453 = vunpack.c.l.b16 %v2414
        %v2454 = vunpack.c.l.b16 %v2415
        %v2455 = vunpack.c.l.b16 %v2416
        %v2456 = vunpack.c.l.b16 %v2417
        %v2457 = vunpack.c.l.b16 %v2418
        %v2458 = vunpack.c.l.b16 %v2419
        %v2459 = vpack.c.b16 %v2444, %v2443
        %v2460 = vpack.c.b16 %v2446, %v2445
        %v2461 = vpack.c.b16 %v2448, %v2447
        %v2462 = vpack.c.b16 %v2450, %v2449
        %v2463 = vpack.c.b16 %v2452, %v2451
        %v2464 = vpack.c.b16 %v2454, %v2453
        %v2465 = vpack.c.b16 %v2456, %v2455
        %v2466 = vpack.c.b16 %v2458, %v2457
        %2475 = vmatprep.subr.bf16.mxu0 0
        %2476 = vmatpush1.bf16.msra.mxu0 %v2459
        %2477 = vmatprep.subr.bf16.mxu0 0
        %2478 = vmatpush1.bf16.msra.mxu0 %v2460
        %2479 = vmatprep.subr.bf16.mxu0 0
        %2480 = vmatpush1.bf16.msra.mxu0 %v2461
        %2481 = vmatprep.subr.bf16.mxu0 0
        %2482 = vmatpush1.bf16.msra.mxu0 %v2462
        %2483 = vmatprep.subr.bf16.mxu0 0
        %2484 = vmatpush1.bf16.msra.mxu0 %v2463
        %2485 = vmatprep.subr.bf16.mxu0 0
        %2486 = vmatpush1.bf16.msra.mxu0 %v2464
        %2487 = vmatprep.subr.bf16.mxu0 0
        %2488 = vmatpush1.bf16.msra.mxu0 %v2465
        %2489 = vmatprep.subr.bf16.mxu0 0
        %2490 = vmatpush1.bf16.msra.mxu0 %v2466
        %2491 = vmatprep.subr.bf16.mxu0 0
        %2492 = vmatpush1.bf16.msra.mxu0 0
        %2493 = vmatprep.subr.bf16.mxu0 0
        %2494 = vmatpush1.bf16.msra.mxu0 0
        %2495 = vmatprep.subr.bf16.mxu0 0
        %2496 = vmatpush1.bf16.msra.mxu0 0
        %2497 = vmatprep.subr.bf16.mxu0 0
        %2498 = vmatpush1.bf16.msra.mxu0 0
        %2499 = vmatprep.subr.bf16.mxu0 0
        %2500 = vmatpush1.bf16.msra.mxu0 0
        %2501 = vmatprep.subr.bf16.mxu0 0
        %2502 = vmatpush1.bf16.msra.mxu0 0
        %2503 = vmatprep.subr.bf16.mxu0 0
        %2504 = vmatpush1.bf16.msra.mxu0 0
        %2505 = vmatprep.subr.bf16.mxu0 0
        %2506 = vmatpush1.bf16.msra.mxu0 0
        %2507 = vmatprep.mubr.bf16.mxu0 0
        %2508 = vmatmul.mubr.bf16.gmra.mrb[0].mxu0 %v2402
        %v2509 = vpop.f32.mrb[0].mxu0
        %v2510 = vadd.f32 %v2425, %v2509
        %v2511 = vpop.f32.mrb[0].mxu0
        %v2512 = vpop.f32.mrb[0].mxu0
        %v2513 = vadd.f32 %v2425, %v2512
        %v2514 = vpop.f32.mrb[0].mxu0
        %2515 = vmatprep.mubr.bf16.mxu0 0
        %2516 = vmatmul.mubr.bf16.gmra.mrb[0].mxu0 %v2403
        %v2517 = vpop.f32.mrb[0].mxu0
        %v2518 = vadd.f32 %v2425, %v2517
        %v2519 = vpop.f32.mrb[0].mxu0
        %v2520 = vpop.f32.mrb[0].mxu0
        %v2521 = vadd.f32 %v2425, %v2520
        %v2522 = vpop.f32.mrb[0].mxu0
        %2523 = vdwg.mxu0
        %v2524 = vadd.f32 %v1214, %v2510
        %v2525 = vadd.f32 %v1215, %v2513
        %v2526 = vadd.f32 %v1216, %v2518
        %v2527 = vadd.f32 %v1217, %v2521
        %2528 = vadd.xlane.f32.xlu0 %v2524
        %v2529 = vpop.xlane.xlu0 %2528
        %2530 = vadd.xlane.f32.xlu0 %v2525
        %v2531 = vpop.xlane.xlu0 %2530
        %2532 = vadd.xlane.f32.xlu0 %v2526
        %v2533 = vpop.xlane.xlu0 %2532
        %2534 = vadd.xlane.f32.xlu0 %v2527
        %v2535 = vpop.xlane.xlu0 %2534
        %v2536 = vrcp.pop 128.0
        %v2537 = vmul.f32 %v2529, %v2536
        %v2538 = vmul.f32 %v2531, %v2536
        %v2539 = vmul.f32 %v2533, %v2536
        %v2540 = vmul.f32 %v2535, %v2536
        %v2541 = vsub.f32 %v2524, %v2537
        %v2542 = vsub.f32 %v2525, %v2538
        %v2543 = vsub.f32 %v2526, %v2539
        %v2544 = vsub.f32 %v2527, %v2540
        %v2545 = vmul.f32 %v2541, %v2541
        %v2546 = vmul.f32 %v2542, %v2542
        %v2547 = vmul.f32 %v2543, %v2543
        %v2548 = vmul.f32 %v2544, %v2544
        %2549 = vadd.xlane.f32.xlu0 %v2545
        %v2550 = vpop.xlane.xlu0 %2549
        %2551 = vadd.xlane.f32.xlu0 %v2546
        %v2552 = vpop.xlane.xlu0 %2551
        %2553 = vadd.xlane.f32.xlu0 %v2547
        %v2554 = vpop.xlane.xlu0 %2553
        %2555 = vadd.xlane.f32.xlu0 %v2548
        %v2556 = vpop.xlane.xlu0 %2555
        %v2557 = vmul.f32 %v2550, %v2536
        %v2558 = vmul.f32 %v2552, %v2536
        %v2559 = vmul.f32 %v2554, %v2536
        %v2560 = vmul.f32 %v2556, %v2536
        %v2561 = vadd.f32 %v2557, 1e-05
        %v2562 = vadd.f32 %v2558, 1e-05
        %v2563 = vadd.f32 %v2559, 1e-05
        %v2564 = vadd.f32 %v2560, 1e-05
        %v2565 = vrsqrt.pop %v2561
        %v2566 = vrsqrt.pop %v2562
        %v2567 = vrsqrt.pop %v2563
        %v2568 = vrsqrt.pop %v2564
        %v2569 = vmul.f32 %v2541, %v2565
        %v2570 = vmul.f32 %v2542, %v2566
        %v2571 = vmul.f32 %v2543, %v2567
        %v2572 = vmul.f32 %v2544, %v2568
        %v2573 = vld [vmem:[%s917] sm:$0x1]
        %v2575 = vlaneseq
        %v2576 = vshrl.u32 %v2575, 7
        %v2577 = vsub.s32 0, %v2576
        %v2578 = vrot.slane %v2573, %v2577
        %v2580 = vmul.f32 %v2569, %v2578
        %v2581 = vmul.f32 %v2570, %v2578
        %v2582 = vmul.f32 %v2571, %v2578
        %v2583 = vmul.f32 %v2572, %v2578
        %v2584 = vld [vmem:[%s925] sm:$0x1]
        %v2586 = vlaneseq
        %v2587 = vshrl.u32 %v2586, 7
        %v2588 = vsub.s32 0, %v2587
        %v2589 = vrot.slane %v2584, %v2588
        %v2591 = vadd.f32 %v2580, %v2589
        %v2592 = vadd.f32 %v2581, %v2589
        %v2593 = vadd.f32 %v2582, %v2589
        %v2594 = vadd.f32 %v2583, %v2589
        %v2595 = vpack.c.bf16 %v2592, %v2591
        %v2596 = vpack.c.bf16 %v2594, %v2593
        %v2597 = vld [vmem:[%s934] sm:$0xff]
        %v2598 = vld [vmem:[%s934 + $0x8] sm:$0xff]
        %v2599 = vld [vmem:[%s934 + $0x10] sm:$0xff]
        %v2600 = vld [vmem:[%s934 + $0x18] sm:$0xff]
        %v2601 = vld [vmem:[%s934 + $0x20] sm:$0xff]
        %v2602 = vld [vmem:[%s934 + $0x28] sm:$0xff]
        %v2603 = vld [vmem:[%s934 + $0x30] sm:$0xff]
        %v2604 = vld [vmem:[%s934 + $0x38] sm:$0xff]
        %v2605 = vld [vmem:[%s934 + $0x40] sm:$0xff]
        %v2606 = vld [vmem:[%s934 + $0x48] sm:$0xff]
        %v2607 = vld [vmem:[%s934 + $0x50] sm:$0xff]
        %v2608 = vld [vmem:[%s934 + $0x58] sm:$0xff]
        %v2609 = vld [vmem:[%s934 + $0x60] sm:$0xff]
        %v2610 = vld [vmem:[%s934 + $0x68] sm:$0xff]
        %v2611 = vld [vmem:[%s934 + $0x70] sm:$0xff]
        %v2612 = vld [vmem:[%s934 + $0x78] sm:$0xff]
        %v2613 = vld [vmem:[%s934 + $0x80] sm:$0xff]
        %v2614 = vld [vmem:[%s934 + $0x88] sm:$0xff]
        %v2615 = vld [vmem:[%s934 + $0x90] sm:$0xff]
        %v2616 = vld [vmem:[%s934 + $0x98] sm:$0xff]
        %v2617 = vld [vmem:[%s934 + $0xa0] sm:$0xff]
        %v2618 = vld [vmem:[%s934 + $0xa8] sm:$0xff]
        %v2619 = vld [vmem:[%s934 + $0xb0] sm:$0xff]
        %v2620 = vld [vmem:[%s934 + $0xb8] sm:$0xff]
        %v2621 = vld [vmem:[%s934 + $0xc0] sm:$0xff]
        %v2622 = vld [vmem:[%s934 + $0xc8] sm:$0xff]
        %v2623 = vld [vmem:[%s934 + $0xd0] sm:$0xff]
        %v2624 = vld [vmem:[%s934 + $0xd8] sm:$0xff]
        %v2625 = vld [vmem:[%s934 + $0xe0] sm:$0xff]
        %v2626 = vld [vmem:[%s934 + $0xe8] sm:$0xff]
        %v2627 = vld [vmem:[%s934 + $0xf0] sm:$0xff]
        %v2628 = vld [vmem:[%s934 + $0xf8] sm:$0xff]
        %v2629 = vld [vmem:[%s1090] sm:$0xf]
        %v2631 = vlaneseq
        %v2632 = vshrl.u32 %v2631, 7
        %v2633 = vsub.s32 0, %v2632
        %v2634 = vrot.slane %v2629, %v2633
        %v2635 = vlaneseq
        %v2636 = vshrl.u32 %v2635, 7
        %v2637 = vsub.s32 1, %v2636
        %v2638 = vrot.slane %v2629, %v2637
        %v2639 = vlaneseq
        %v2640 = vshrl.u32 %v2639, 7
        %v2641 = vsub.s32 2, %v2640
        %v2642 = vrot.slane %v2629, %v2641
        %v2643 = vlaneseq
        %v2644 = vshrl.u32 %v2643, 7
        %v2645 = vsub.s32 3, %v2644
        %v2646 = vrot.slane %v2629, %v2645
        %v2683 = vunpack.c.l.b16 %v2597
        %v2684 = vunpack.c.h.b16 %v2597
        %v2685 = vunpack.c.l.b16 %v2598
        %v2686 = vunpack.c.h.b16 %v2598
        %v2687 = vunpack.c.l.b16 %v2599
        %v2688 = vunpack.c.h.b16 %v2599
        %v2689 = vunpack.c.l.b16 %v2600
        %v2690 = vunpack.c.h.b16 %v2600
        %v2691 = vunpack.c.l.b16 %v2601
        %v2692 = vunpack.c.h.b16 %v2601
        %v2693 = vunpack.c.l.b16 %v2602
        %v2694 = vunpack.c.h.b16 %v2602
        %v2695 = vunpack.c.l.b16 %v2603
        %v2696 = vunpack.c.h.b16 %v2603
        %v2697 = vunpack.c.l.b16 %v2604
        %v2698 = vunpack.c.h.b16 %v2604
        %v2699 = vunpack.c.l.b16 %v2605
        %v2700 = vunpack.c.h.b16 %v2605
        %v2701 = vunpack.c.l.b16 %v2606
        %v2702 = vunpack.c.h.b16 %v2606
        %v2703 = vunpack.c.l.b16 %v2607
        %v2704 = vunpack.c.h.b16 %v2607
        %v2705 = vunpack.c.l.b16 %v2608
        %v2706 = vunpack.c.h.b16 %v2608
        %v2707 = vunpack.c.l.b16 %v2609
        %v2708 = vunpack.c.h.b16 %v2609
        %v2709 = vunpack.c.l.b16 %v2610
        %v2710 = vunpack.c.h.b16 %v2610
        %v2711 = vunpack.c.l.b16 %v2611
        %v2712 = vunpack.c.h.b16 %v2611
        %v2713 = vunpack.c.l.b16 %v2612
        %v2714 = vunpack.c.h.b16 %v2612
        %v2715 = vunpack.c.l.b16 %v2613
        %v2716 = vunpack.c.h.b16 %v2613
        %v2717 = vunpack.c.l.b16 %v2614
        %v2718 = vunpack.c.h.b16 %v2614
        %v2719 = vunpack.c.l.b16 %v2615
        %v2720 = vunpack.c.h.b16 %v2615
        %v2721 = vunpack.c.l.b16 %v2616
        %v2722 = vunpack.c.h.b16 %v2616
        %v2723 = vunpack.c.l.b16 %v2617
        %v2724 = vunpack.c.h.b16 %v2617
        %v2725 = vunpack.c.l.b16 %v2618
        %v2726 = vunpack.c.h.b16 %v2618
        %v2727 = vunpack.c.l.b16 %v2619
        %v2728 = vunpack.c.h.b16 %v2619
        %v2729 = vunpack.c.l.b16 %v2620
        %v2730 = vunpack.c.h.b16 %v2620
        %v2731 = vunpack.c.l.b16 %v2621
        %v2732 = vunpack.c.h.b16 %v2621
        %v2733 = vunpack.c.l.b16 %v2622
        %v2734 = vunpack.c.h.b16 %v2622
        %v2735 = vunpack.c.l.b16 %v2623
        %v2736 = vunpack.c.h.b16 %v2623
        %v2737 = vunpack.c.l.b16 %v2624
        %v2738 = vunpack.c.h.b16 %v2624
        %v2739 = vunpack.c.l.b16 %v2625
        %v2740 = vunpack.c.h.b16 %v2625
        %v2741 = vunpack.c.l.b16 %v2626
        %v2742 = vunpack.c.h.b16 %v2626
        %v2743 = vunpack.c.l.b16 %v2627
        %v2744 = vunpack.c.h.b16 %v2627
        %v2745 = vunpack.c.l.b16 %v2628
        %v2746 = vunpack.c.h.b16 %v2628
        %v2747 = vpack.c.b16 %v2687, %v2683
        %v2748 = vpack.c.b16 %v2688, %v2684
        %v2749 = vpack.c.b16 %v2689, %v2685
        %v2750 = vpack.c.b16 %v2690, %v2686
        %v2751 = vpack.c.b16 %v2695, %v2691
        %v2752 = vpack.c.b16 %v2696, %v2692
        %v2753 = vpack.c.b16 %v2697, %v2693
        %v2754 = vpack.c.b16 %v2698, %v2694
        %v2755 = vpack.c.b16 %v2703, %v2699
        %v2756 = vpack.c.b16 %v2704, %v2700
        %v2757 = vpack.c.b16 %v2705, %v2701
        %v2758 = vpack.c.b16 %v2706, %v2702
        %v2759 = vpack.c.b16 %v2711, %v2707
        %v2760 = vpack.c.b16 %v2712, %v2708
        %v2761 = vpack.c.b16 %v2713, %v2709
        %v2762 = vpack.c.b16 %v2714, %v2710
        %v2763 = vpack.c.b16 %v2719, %v2715
        %v2764 = vpack.c.b16 %v2720, %v2716
        %v2765 = vpack.c.b16 %v2721, %v2717
        %v2766 = vpack.c.b16 %v2722, %v2718
        %v2767 = vpack.c.b16 %v2727, %v2723
        %v2768 = vpack.c.b16 %v2728, %v2724
        %v2769 = vpack.c.b16 %v2729, %v2725
        %v2770 = vpack.c.b16 %v2730, %v2726
        %v2771 = vpack.c.b16 %v2735, %v2731
        %v2772 = vpack.c.b16 %v2736, %v2732
        %v2773 = vpack.c.b16 %v2737, %v2733
        %v2774 = vpack.c.b16 %v2738, %v2734
        %v2775 = vpack.c.b16 %v2743, %v2739
        %v2776 = vpack.c.b16 %v2744, %v2740
        %v2777 = vpack.c.b16 %v2745, %v2741
        %v2778 = vpack.c.b16 %v2746, %v2742
        %2811 = vmatprep.subr.bf16.mxu0 %v2748
        %2812 = vmatpush1.bf16.msra.mxu0 %v2747
        %2813 = vmatprep.subr.bf16.mxu0 %v2752
        %2814 = vmatpush1.bf16.msra.mxu0 %v2751
        %2815 = vmatprep.subr.bf16.mxu0 %v2756
        %2816 = vmatpush1.bf16.msra.mxu0 %v2755
        %2817 = vmatprep.subr.bf16.mxu0 %v2760
        %2818 = vmatpush1.bf16.msra.mxu0 %v2759
        %2819 = vmatprep.subr.bf16.mxu0 %v2764
        %2820 = vmatpush1.bf16.msra.mxu0 %v2763
        %2821 = vmatprep.subr.bf16.mxu0 %v2768
        %2822 = vmatpush1.bf16.msra.mxu0 %v2767
        %2823 = vmatprep.subr.bf16.mxu0 %v2772
        %2824 = vmatpush1.bf16.msra.mxu0 %v2771
        %2825 = vmatprep.subr.bf16.mxu0 %v2776
        %2826 = vmatpush1.bf16.msra.mxu0 %v2775
        %2827 = vmatprep.subr.bf16.mxu0 0
        %2828 = vmatpush1.bf16.msra.mxu0 0
        %2829 = vmatprep.subr.bf16.mxu0 0
        %2830 = vmatpush1.bf16.msra.mxu0 0
        %2831 = vmatprep.subr.bf16.mxu0 0
        %2832 = vmatpush1.bf16.msra.mxu0 0
        %2833 = vmatprep.subr.bf16.mxu0 0
        %2834 = vmatpush1.bf16.msra.mxu0 0
        %2835 = vmatprep.subr.bf16.mxu0 0
        %2836 = vmatpush1.bf16.msra.mxu0 0
        %2837 = vmatprep.subr.bf16.mxu0 0
        %2838 = vmatpush1.bf16.msra.mxu0 0
        %2839 = vmatprep.subr.bf16.mxu0 0
        %2840 = vmatpush1.bf16.msra.mxu0 0
        %2841 = vmatprep.subr.bf16.mxu0 0
        %2842 = vmatpush1.bf16.msra.mxu0 0
        %2843 = vmatprep.mubr.bf16.mxu0 0
        %2844 = vmatmul.mubr.bf16.gmra.mrb[0].mxu0 %v2595
        %v2845 = vpop.f32.mrb[0].mxu0
        %v2846 = vadd.f32 %v2634, %v2845
        %v2847 = vpop.f32.mrb[0].mxu0
        %v2848 = vadd.f32 %v2638, %v2847
        %v2849 = vpop.f32.mrb[0].mxu0
        %v2850 = vadd.f32 %v2634, %v2849
        %v2851 = vpop.f32.mrb[0].mxu0
        %v2852 = vadd.f32 %v2638, %v2851
        %2853 = vmatprep.mubr.bf16.mxu0 0
        %2854 = vmatmul.mubr.bf16.gmra.mrb[0].mxu0 %v2596
        %v2855 = vpop.f32.mrb[0].mxu0
        %v2856 = vadd.f32 %v2634, %v2855
        %v2857 = vpop.f32.mrb[0].mxu0
        %v2858 = vadd.f32 %v2638, %v2857
        %v2859 = vpop.f32.mrb[0].mxu0
        %v2860 = vadd.f32 %v2634, %v2859
        %v2861 = vpop.f32.mrb[0].mxu0
        %v2862 = vadd.f32 %v2638, %v2861
        %2863 = vdwg.mxu0
        %2864 = vmatprep.subr.bf16.mxu0 %v2750
        %2865 = vmatpush1.bf16.msra.mxu0 %v2749
        %2866 = vmatprep.subr.bf16.mxu0 %v2754
        %2867 = vmatpush1.bf16.msra.mxu0 %v2753
        %2868 = vmatprep.subr.bf16.mxu0 %v2758
        %2869 = vmatpush1.bf16.msra.mxu0 %v2757
        %2870 = vmatprep.subr.bf16.mxu0 %v2762
        %2871 = vmatpush1.bf16.msra.mxu0 %v2761
        %2872 = vmatprep.subr.bf16.mxu0 %v2766
        %2873 = vmatpush1.bf16.msra.mxu0 %v2765
        %2874 = vmatprep.subr.bf16.mxu0 %v2770
        %2875 = vmatpush1.bf16.msra.mxu0 %v2769
        %2876 = vmatprep.subr.bf16.mxu0 %v2774
        %2877 = vmatpush1.bf16.msra.mxu0 %v2773
        %2878 = vmatprep.subr.bf16.mxu0 %v2778
        %2879 = vmatpush1.bf16.msra.mxu0 %v2777
        %2880 = vmatprep.subr.bf16.mxu0 0
        %2881 = vmatpush1.bf16.msra.mxu0 0
        %2882 = vmatprep.subr.bf16.mxu0 0
        %2883 = vmatpush1.bf16.msra.mxu0 0
        %2884 = vmatprep.subr.bf16.mxu0 0
        %2885 = vmatpush1.bf16.msra.mxu0 0
        %2886 = vmatprep.subr.bf16.mxu0 0
        %2887 = vmatpush1.bf16.msra.mxu0 0
        %2888 = vmatprep.subr.bf16.mxu0 0
        %2889 = vmatpush1.bf16.msra.mxu0 0
        %2890 = vmatprep.subr.bf16.mxu0 0
        %2891 = vmatpush1.bf16.msra.mxu0 0
        %2892 = vmatprep.subr.bf16.mxu0 0
        %2893 = vmatpush1.bf16.msra.mxu0 0
        %2894 = vmatprep.subr.bf16.mxu0 0
        %2895 = vmatpush1.bf16.msra.mxu0 0
        %2896 = vmatprep.mubr.bf16.mxu0 0
        %2897 = vmatmul.mubr.bf16.gmra.mrb[0].mxu0 %v2595
        %v2898 = vpop.f32.mrb[0].mxu0
        %v2899 = vadd.f32 %v2642, %v2898
        %v2900 = vpop.f32.mrb[0].mxu0
        %v2901 = vadd.f32 %v2646, %v2900
        %v2902 = vpop.f32.mrb[0].mxu0
        %v2903 = vadd.f32 %v2642, %v2902
        %v2904 = vpop.f32.mrb[0].mxu0
        %v2905 = vadd.f32 %v2646, %v2904
        %2906 = vmatprep.mubr.bf16.mxu0 0
        %2907 = vmatmul.mubr.bf16.gmra.mrb[0].mxu0 %v2596
        %v2908 = vpop.f32.mrb[0].mxu0
        %v2909 = vadd.f32 %v2642, %v2908
        %v2910 = vpop.f32.mrb[0].mxu0
        %v2911 = vadd.f32 %v2646, %v2910
        %v2912 = vpop.f32.mrb[0].mxu0
        %v2913 = vadd.f32 %v2642, %v2912
        %v2914 = vpop.f32.mrb[0].mxu0
        %v2915 = vadd.f32 %v2646, %v2914
        %2916 = vdwg.mxu0
        %v2917 = vmax.f32 %v2846, 0.0
        %v2918 = vmax.f32 %v2848, 0.0
        %v2919 = vmax.f32 %v2899, 0.0
        %v2920 = vmax.f32 %v2901, 0.0
        %v2921 = vmax.f32 %v2850, 0.0
        %v2922 = vmax.f32 %v2852, 0.0
        %v2923 = vmax.f32 %v2903, 0.0
        %v2924 = vmax.f32 %v2905, 0.0
        %v2925 = vmax.f32 %v2856, 0.0
        %v2926 = vmax.f32 %v2858, 0.0
        %v2927 = vmax.f32 %v2909, 0.0
        %v2928 = vmax.f32 %v2911, 0.0
        %v2929 = vmax.f32 %v2860, 0.0
        %v2930 = vmax.f32 %v2862, 0.0
        %v2931 = vmax.f32 %v2913, 0.0
        %v2932 = vmax.f32 %v2915, 0.0
        %v2933 = vpack.c.bf16 %v2921, %v2917
        %v2934 = vpack.c.bf16 %v2922, %v2918
        %v2935 = vpack.c.bf16 %v2923, %v2919
        %v2936 = vpack.c.bf16 %v2924, %v2920
        %v2937 = vpack.c.bf16 %v2929, %v2925
        %v2938 = vpack.c.bf16 %v2930, %v2926
        %v2939 = vpack.c.bf16 %v2931, %v2927
        %v2940 = vpack.c.bf16 %v2932, %v2928
        %v2941 = vld [vmem:[%s943] sm:$0xf]
        %v2942 = vld [vmem:[%s943 + $0x4] sm:$0xf]
        %v2943 = vld [vmem:[%s943 + $0x8] sm:$0xf]
        %v2944 = vld [vmem:[%s943 + $0xc] sm:$0xf]
        %v2945 = vld [vmem:[%s943 + $0x10] sm:$0xf]
        %v2946 = vld [vmem:[%s943 + $0x14] sm:$0xf]
        %v2947 = vld [vmem:[%s943 + $0x18] sm:$0xf]
        %v2948 = vld [vmem:[%s943 + $0x1c] sm:$0xf]
        %v2949 = vld [vmem:[%s943 + $0x20] sm:$0xf]
        %v2950 = vld [vmem:[%s943 + $0x24] sm:$0xf]
        %v2951 = vld [vmem:[%s943 + $0x28] sm:$0xf]
        %v2952 = vld [vmem:[%s943 + $0x2c] sm:$0xf]
        %v2953 = vld [vmem:[%s943 + $0x30] sm:$0xf]
        %v2954 = vld [vmem:[%s943 + $0x34] sm:$0xf]
        %v2955 = vld [vmem:[%s943 + $0x38] sm:$0xf]
        %v2956 = vld [vmem:[%s943 + $0x3c] sm:$0xf]
        %v2957 = vld [vmem:[%s943 + $0x40] sm:$0xf]
        %v2958 = vld [vmem:[%s943 + $0x44] sm:$0xf]
        %v2959 = vld [vmem:[%s943 + $0x48] sm:$0xf]
        %v2960 = vld [vmem:[%s943 + $0x4c] sm:$0xf]
        %v2961 = vld [vmem:[%s943 + $0x50] sm:$0xf]
        %v2962 = vld [vmem:[%s943 + $0x54] sm:$0xf]
        %v2963 = vld [vmem:[%s943 + $0x58] sm:$0xf]
        %v2964 = vld [vmem:[%s943 + $0x5c] sm:$0xf]
        %v2965 = vld [vmem:[%s943 + $0x60] sm:$0xf]
        %v2966 = vld [vmem:[%s943 + $0x64] sm:$0xf]
        %v2967 = vld [vmem:[%s943 + $0x68] sm:$0xf]
        %v2968 = vld [vmem:[%s943 + $0x6c] sm:$0xf]
        %v2969 = vld [vmem:[%s943 + $0x70] sm:$0xf]
        %v2970 = vld [vmem:[%s943 + $0x74] sm:$0xf]
        %v2971 = vld [vmem:[%s943 + $0x78] sm:$0xf]
        %v2972 = vld [vmem:[%s943 + $0x7c] sm:$0xf]
        %v2973 = vld [vmem:[%s943 + $0x80] sm:$0xf]
        %v2974 = vld [vmem:[%s943 + $0x84] sm:$0xf]
        %v2975 = vld [vmem:[%s943 + $0x88] sm:$0xf]
        %v2976 = vld [vmem:[%s943 + $0x8c] sm:$0xf]
        %v2977 = vld [vmem:[%s943 + $0x90] sm:$0xf]
        %v2978 = vld [vmem:[%s943 + $0x94] sm:$0xf]
        %v2979 = vld [vmem:[%s943 + $0x98] sm:$0xf]
        %v2980 = vld [vmem:[%s943 + $0x9c] sm:$0xf]
        %v2981 = vld [vmem:[%s943 + $0xa0] sm:$0xf]
        %v2982 = vld [vmem:[%s943 + $0xa4] sm:$0xf]
        %v2983 = vld [vmem:[%s943 + $0xa8] sm:$0xf]
        %v2984 = vld [vmem:[%s943 + $0xac] sm:$0xf]
        %v2985 = vld [vmem:[%s943 + $0xb0] sm:$0xf]
        %v2986 = vld [vmem:[%s943 + $0xb4] sm:$0xf]
        %v2987 = vld [vmem:[%s943 + $0xb8] sm:$0xf]
        %v2988 = vld [vmem:[%s943 + $0xbc] sm:$0xf]
        %v2989 = vld [vmem:[%s943 + $0xc0] sm:$0xf]
        %v2990 = vld [vmem:[%s943 + $0xc4] sm:$0xf]
        %v2991 = vld [vmem:[%s943 + $0xc8] sm:$0xf]
        %v2992 = vld [vmem:[%s943 + $0xcc] sm:$0xf]
        %v2993 = vld [vmem:[%s943 + $0xd0] sm:$0xf]
        %v2994 = vld [vmem:[%s943 + $0xd4] sm:$0xf]
        %v2995 = vld [vmem:[%s943 + $0xd8] sm:$0xf]
        %v2996 = vld [vmem:[%s943 + $0xdc] sm:$0xf]
        %v2997 = vld [vmem:[%s943 + $0xe0] sm:$0xf]
        %v2998 = vld [vmem:[%s943 + $0xe4] sm:$0xf]
        %v2999 = vld [vmem:[%s943 + $0xe8] sm:$0xf]
        %v3000 = vld [vmem:[%s943 + $0xec] sm:$0xf]
        %v3001 = vld [vmem:[%s943 + $0xf0] sm:$0xf]
        %v3002 = vld [vmem:[%s943 + $0xf4] sm:$0xf]
        %v3003 = vld [vmem:[%s943 + $0xf8] sm:$0xf]
        %v3004 = vld [vmem:[%s943 + $0xfc] sm:$0xf]
        %v3005 = vld [vmem:[%s951] sm:$0x1]
        %v3007 = vlaneseq
        %v3008 = vshrl.u32 %v3007, 7
        %v3009 = vsub.s32 0, %v3008
        %v3010 = vrot.slane %v3005, %v3009
        %v3076 = vunpack.c.l.b16 %v2941
        %v3077 = vunpack.c.l.b16 %v2942
        %v3078 = vunpack.c.l.b16 %v2943
        %v3079 = vunpack.c.l.b16 %v2944
        %v3080 = vunpack.c.l.b16 %v2945
        %v3081 = vunpack.c.l.b16 %v2946
        %v3082 = vunpack.c.l.b16 %v2947
        %v3083 = vunpack.c.l.b16 %v2948
        %v3084 = vunpack.c.l.b16 %v2949
        %v3085 = vunpack.c.l.b16 %v2950
        %v3086 = vunpack.c.l.b16 %v2951
        %v3087 = vunpack.c.l.b16 %v2952
        %v3088 = vunpack.c.l.b16 %v2953
        %v3089 = vunpack.c.l.b16 %v2954
        %v3090 = vunpack.c.l.b16 %v2955
        %v3091 = vunpack.c.l.b16 %v2956
        %v3092 = vunpack.c.l.b16 %v2957
        %v3093 = vunpack.c.l.b16 %v2958
        %v3094 = vunpack.c.l.b16 %v2959
        %v3095 = vunpack.c.l.b16 %v2960
        %v3096 = vunpack.c.l.b16 %v2961
        %v3097 = vunpack.c.l.b16 %v2962
        %v3098 = vunpack.c.l.b16 %v2963
        %v3099 = vunpack.c.l.b16 %v2964
        %v3100 = vunpack.c.l.b16 %v2965
        %v3101 = vunpack.c.l.b16 %v2966
        %v3102 = vunpack.c.l.b16 %v2967
        %v3103 = vunpack.c.l.b16 %v2968
        %v3104 = vunpack.c.l.b16 %v2969
        %v3105 = vunpack.c.l.b16 %v2970
        %v3106 = vunpack.c.l.b16 %v2971
        %v3107 = vunpack.c.l.b16 %v2972
        %v3108 = vunpack.c.l.b16 %v2973
        %v3109 = vunpack.c.l.b16 %v2974
        %v3110 = vunpack.c.l.b16 %v2975
        %v3111 = vunpack.c.l.b16 %v2976
        %v3112 = vunpack.c.l.b16 %v2977
        %v3113 = vunpack.c.l.b16 %v2978
        %v3114 = vunpack.c.l.b16 %v2979
        %v3115 = vunpack.c.l.b16 %v2980
        %v3116 = vunpack.c.l.b16 %v2981
        %v3117 = vunpack.c.l.b16 %v2982
        %v3118 = vunpack.c.l.b16 %v2983
        %v3119 = vunpack.c.l.b16 %v2984
        %v3120 = vunpack.c.l.b16 %v2985
        %v3121 = vunpack.c.l.b16 %v2986
        %v3122 = vunpack.c.l.b16 %v2987
        %v3123 = vunpack.c.l.b16 %v2988
        %v3124 = vunpack.c.l.b16 %v2989
        %v3125 = vunpack.c.l.b16 %v2990
        %v3126 = vunpack.c.l.b16 %v2991
        %v3127 = vunpack.c.l.b16 %v2992
        %v3128 = vunpack.c.l.b16 %v2993
        %v3129 = vunpack.c.l.b16 %v2994
        %v3130 = vunpack.c.l.b16 %v2995
        %v3131 = vunpack.c.l.b16 %v2996
        %v3132 = vunpack.c.l.b16 %v2997
        %v3133 = vunpack.c.l.b16 %v2998
        %v3134 = vunpack.c.l.b16 %v2999
        %v3135 = vunpack.c.l.b16 %v3000
        %v3136 = vunpack.c.l.b16 %v3001
        %v3137 = vunpack.c.l.b16 %v3002
        %v3138 = vunpack.c.l.b16 %v3003
        %v3139 = vunpack.c.l.b16 %v3004
        %v3140 = vpack.c.b16 %v3077, %v3076
        %v3141 = vpack.c.b16 %v3079, %v3078
        %v3142 = vpack.c.b16 %v3081, %v3080
        %v3143 = vpack.c.b16 %v3083, %v3082
        %v3144 = vpack.c.b16 %v3085, %v3084
        %v3145 = vpack.c.b16 %v3087, %v3086
        %v3146 = vpack.c.b16 %v3089, %v3088
        %v3147 = vpack.c.b16 %v3091, %v3090
        %v3148 = vpack.c.b16 %v3093, %v3092
        %v3149 = vpack.c.b16 %v3095, %v3094
        %v3150 = vpack.c.b16 %v3097, %v3096
        %v3151 = vpack.c.b16 %v3099, %v3098
        %v3152 = vpack.c.b16 %v3101, %v3100
        %v3153 = vpack.c.b16 %v3103, %v3102
        %v3154 = vpack.c.b16 %v3105, %v3104
        %v3155 = vpack.c.b16 %v3107, %v3106
        %v3156 = vpack.c.b16 %v3109, %v3108
        %v3157 = vpack.c.b16 %v3111, %v3110
        %v3158 = vpack.c.b16 %v3113, %v3112
        %v3159 = vpack.c.b16 %v3115, %v3114
        %v3160 = vpack.c.b16 %v3117, %v3116
        %v3161 = vpack.c.b16 %v3119, %v3118
        %v3162 = vpack.c.b16 %v3121, %v3120
        %v3163 = vpack.c.b16 %v3123, %v3122
        %v3164 = vpack.c.b16 %v3125, %v3124
        %v3165 = vpack.c.b16 %v3127, %v3126
        %v3166 = vpack.c.b16 %v3129, %v3128
        %v3167 = vpack.c.b16 %v3131, %v3130
        %v3168 = vpack.c.b16 %v3133, %v3132
        %v3169 = vpack.c.b16 %v3135, %v3134
        %v3170 = vpack.c.b16 %v3137, %v3136
        %v3171 = vpack.c.b16 %v3139, %v3138
        %3204 = vmatprep.subr.bf16.mxu0 0
        %3205 = vmatpush1.bf16.msra.mxu0 %v3140
        %3206 = vmatprep.subr.bf16.mxu0 0
        %3207 = vmatpush1.bf16.msra.mxu0 %v3141
        %3208 = vmatprep.subr.bf16.mxu0 0
        %3209 = vmatpush1.bf16.msra.mxu0 %v3142
        %3210 = vmatprep.subr.bf16.mxu0 0
        %3211 = vmatpush1.bf16.msra.mxu0 %v3143
        %3212 = vmatprep.subr.bf16.mxu0 0
        %3213 = vmatpush1.bf16.msra.mxu0 %v3144
        %3214 = vmatprep.subr.bf16.mxu0 0
        %3215 = vmatpush1.bf16.msra.mxu0 %v3145
        %3216 = vmatprep.subr.bf16.mxu0 0
        %3217 = vmatpush1.bf16.msra.mxu0 %v3146
        %3218 = vmatprep.subr.bf16.mxu0 0
        %3219 = vmatpush1.bf16.msra.mxu0 %v3147
        %3220 = vmatprep.subr.bf16.mxu0 0
        %3221 = vmatpush1.bf16.msra.mxu0 %v3148
        %3222 = vmatprep.subr.bf16.mxu0 0
        %3223 = vmatpush1.bf16.msra.mxu0 %v3149
        %3224 = vmatprep.subr.bf16.mxu0 0
        %3225 = vmatpush1.bf16.msra.mxu0 %v3150
        %3226 = vmatprep.subr.bf16.mxu0 0
        %3227 = vmatpush1.bf16.msra.mxu0 %v3151
        %3228 = vmatprep.subr.bf16.mxu0 0
        %3229 = vmatpush1.bf16.msra.mxu0 %v3152
        %3230 = vmatprep.subr.bf16.mxu0 0
        %3231 = vmatpush1.bf16.msra.mxu0 %v3153
        %3232 = vmatprep.subr.bf16.mxu0 0
        %3233 = vmatpush1.bf16.msra.mxu0 %v3154
        %3234 = vmatprep.subr.bf16.mxu0 0
        %3235 = vmatpush1.bf16.msra.mxu0 %v3155
        %3236 = vmatprep.mubr.bf16.mxu0 %v2934
        %3237 = vmatmul.mubr.bf16.gmra.mrb[0].mxu0 %v2933
        %v3238 = vpop.f32.mrb[0].mxu0
        %v3239 = vadd.f32 %v3010, %v3238
        %v3240 = vpop.f32.mrb[0].mxu0
        %v3241 = vpop.f32.mrb[0].mxu0
        %v3242 = vadd.f32 %v3010, %v3241
        %v3243 = vpop.f32.mrb[0].mxu0
        %3244 = vmatprep.mubr.bf16.mxu0 %v2938
        %3245 = vmatmul.mubr.bf16.gmra.mrb[0].mxu0 %v2937
        %v3246 = vpop.f32.mrb[0].mxu0
        %v3247 = vadd.f32 %v3010, %v3246
        %v3248 = vpop.f32.mrb[0].mxu0
        %v3249 = vpop.f32.mrb[0].mxu0
        %v3250 = vadd.f32 %v3010, %v3249
        %v3251 = vpop.f32.mrb[0].mxu0
        %3252 = vdwg.mxu0
        %3253 = vmatprep.subr.bf16.mxu0 0
        %3254 = vmatpush1.bf16.msra.mxu0 %v3156
        %3255 = vmatprep.subr.bf16.mxu0 0
        %3256 = vmatpush1.bf16.msra.mxu0 %v3157
        %3257 = vmatprep.subr.bf16.mxu0 0
        %3258 = vmatpush1.bf16.msra.mxu0 %v3158
        %3259 = vmatprep.subr.bf16.mxu0 0
        %3260 = vmatpush1.bf16.msra.mxu0 %v3159
        %3261 = vmatprep.subr.bf16.mxu0 0
        %3262 = vmatpush1.bf16.msra.mxu0 %v3160
        %3263 = vmatprep.subr.bf16.mxu0 0
        %3264 = vmatpush1.bf16.msra.mxu0 %v3161
        %3265 = vmatprep.subr.bf16.mxu0 0
        %3266 = vmatpush1.bf16.msra.mxu0 %v3162
        %3267 = vmatprep.subr.bf16.mxu0 0
        %3268 = vmatpush1.bf16.msra.mxu0 %v3163
        %3269 = vmatprep.subr.bf16.mxu0 0
        %3270 = vmatpush1.bf16.msra.mxu0 %v3164
        %3271 = vmatprep.subr.bf16.mxu0 0
        %3272 = vmatpush1.bf16.msra.mxu0 %v3165
        %3273 = vmatprep.subr.bf16.mxu0 0
        %3274 = vmatpush1.bf16.msra.mxu0 %v3166
        %3275 = vmatprep.subr.bf16.mxu0 0
        %3276 = vmatpush1.bf16.msra.mxu0 %v3167
        %3277 = vmatprep.subr.bf16.mxu0 0
        %3278 = vmatpush1.bf16.msra.mxu0 %v3168
        %3279 = vmatprep.subr.bf16.mxu0 0
        %3280 = vmatpush1.bf16.msra.mxu0 %v3169
        %3281 = vmatprep.subr.bf16.mxu0 0
        %3282 = vmatpush1.bf16.msra.mxu0 %v3170
        %3283 = vmatprep.subr.bf16.mxu0 0
        %3284 = vmatpush1.bf16.msra.mxu0 %v3171
        %3285 = vmatprep.mubr.bf16.mxu0 %v2936
        %3286 = vmatmul.mubr.bf16.gmra.mrb[0].mxu0 %v2935
        %v3287 = vpop.f32.mrb[0].mxu0
        %v3288 = vadd.f32 %v3239, %v3287
        %v3289 = vpop.f32.mrb[0].mxu0
        %v3290 = vpop.f32.mrb[0].mxu0
        %v3291 = vadd.f32 %v3242, %v3290
        %v3292 = vpop.f32.mrb[0].mxu0
        %3293 = vmatprep.mubr.bf16.mxu0 %v2940
        %3294 = vmatmul.mubr.bf16.gmra.mrb[0].mxu0 %v2939
        %v3295 = vpop.f32.mrb[0].mxu0
        %v3296 = vadd.f32 %v3247, %v3295
        %v3297 = vpop.f32.mrb[0].mxu0
        %v3298 = vpop.f32.mrb[0].mxu0
        %v3299 = vadd.f32 %v3250, %v3298
        %v3300 = vpop.f32.mrb[0].mxu0
        %3301 = vdwg.mxu0
        %v3302 = vadd.f32 %v2591, %v3288
        %v3303 = vadd.f32 %v2592, %v3291
        %v3304 = vadd.f32 %v2593, %v3296
        %v3305 = vadd.f32 %v2594, %v3299
        %3306 = vadd.xlane.f32.xlu0 %v3302
        %v3307 = vpop.xlane.xlu0 %3306
        %3308 = vadd.xlane.f32.xlu0 %v3303
        %v3309 = vpop.xlane.xlu0 %3308
        %3310 = vadd.xlane.f32.xlu0 %v3304
        %v3311 = vpop.xlane.xlu0 %3310
        %3312 = vadd.xlane.f32.xlu0 %v3305
        %v3313 = vpop.xlane.xlu0 %3312
        %v3314 = vmul.f32 %v3307, %v2536
        %v3315 = vmul.f32 %v3309, %v2536
        %v3316 = vmul.f32 %v3311, %v2536
        %v3317 = vmul.f32 %v3313, %v2536
        %v3318 = vsub.f32 %v3302, %v3314
        %v3319 = vsub.f32 %v3303, %v3315
        %v3320 = vsub.f32 %v3304, %v3316
        %v3321 = vsub.f32 %v3305, %v3317
        %v3322 = vmul.f32 %v3318, %v3318
        %v3323 = vmul.f32 %v3319, %v3319
        %v3324 = vmul.f32 %v3320, %v3320
        %v3325 = vmul.f32 %v3321, %v3321
        %3326 = vadd.xlane.f32.xlu0 %v3322
        %v3327 = vpop.xlane.xlu0 %3326
        %3328 = vadd.xlane.f32.xlu0 %v3323
        %v3329 = vpop.xlane.xlu0 %3328
        %3330 = vadd.xlane.f32.xlu0 %v3324
        %v3331 = vpop.xlane.xlu0 %3330
        %3332 = vadd.xlane.f32.xlu0 %v3325
        %v3333 = vpop.xlane.xlu0 %3332
        %v3334 = vmul.f32 %v3327, %v2536
        %v3335 = vmul.f32 %v3329, %v2536
        %v3336 = vmul.f32 %v3331, %v2536
        %v3337 = vmul.f32 %v3333, %v2536
        %v3338 = vadd.f32 %v3334, 1e-05
        %v3339 = vadd.f32 %v3335, 1e-05
        %v3340 = vadd.f32 %v3336, 1e-05
        %v3341 = vadd.f32 %v3337, 1e-05
        %v3342 = vrsqrt.pop %v3338
        %v3343 = vrsqrt.pop %v3339
        %v3344 = vrsqrt.pop %v3340
        %v3345 = vrsqrt.pop %v3341
        %v3346 = vmul.f32 %v3318, %v3342
        %v3347 = vmul.f32 %v3319, %v3343
        %v3348 = vmul.f32 %v3320, %v3344
        %v3349 = vmul.f32 %v3321, %v3345
        %v3350 = vld [vmem:[%s959] sm:$0x1]
        %v3352 = vlaneseq
        %v3353 = vshrl.u32 %v3352, 7
        %v3354 = vsub.s32 0, %v3353
        %v3355 = vrot.slane %v3350, %v3354
        %v3357 = vmul.f32 %v3346, %v3355
        %v3358 = vmul.f32 %v3347, %v3355
        %v3359 = vmul.f32 %v3348, %v3355
        %v3360 = vmul.f32 %v3349, %v3355
        %v3361 = vld [vmem:[%s967] sm:$0x1]
        %v3363 = vlaneseq
        %v3364 = vshrl.u32 %v3363, 7
        %v3365 = vsub.s32 0, %v3364
        %v3366 = vrot.slane %v3361, %v3365
        %v3368 = vadd.f32 %v3357, %v3366
        %v3369 = vadd.f32 %v3358, %v3366
        %v3370 = vadd.f32 %v3359, %v3366
        %v3371 = vadd.f32 %v3360, %v3366
        %3372 = vst [vmem:[#allocation2] sm:$0xff] %v3368
        %3373 = vst [vmem:[#allocation2 + $0x8] sm:$0xff] %v3369
        %3374 = vst [vmem:[#allocation2 + $0x10] sm:$0xff] %v3370
        %3375 = vst [vmem:[#allocation2 + $0x18] sm:$0xff] %v3371
        %p3376 = scmp.eq.s32.totalorder %s45, 1
        // Predicated region
        $region161: #{tpu_custom_call.1} parent=95 // pred_check
          %p3377 = pneg %p3376
        $region162: #{tpu_custom_call.1} parent=95 // pred_check_branch
          %3379 = sbr.rel (%p3377) target = $region164
        $region163: #{tpu_custom_call.1} parent=95 // pred_region
          %v3380 = vld [vmem:[%s866] sm:$0x1]
          %v3382 = vsel %vm1636, %v3380, 0
          %3384 = vmatprep.subr.mxu0 0.0
          %3385 = vmatpush1.msra.mxu0 %v3368
          %3386 = vmatprep.subr.mxu0 0.0
          %3387 = vmatpush1.msra.mxu0 %v3369
          %3388 = vmatprep.subr.mxu0 0.0
          %3389 = vmatpush1.msra.mxu0 %v3370
          %3390 = vmatprep.subr.mxu0 0.0
          %3391 = vmatpush1.msra.mxu0 %v3371
          %3392 = vmatprep.subr.mxu0 0.0
          %3393 = vmatpush1.msra.mxu0 0.0
          %3394 = vmatprep.subr.mxu0 0.0
          %3395 = vmatpush1.msra.mxu0 0.0
          %3396 = vmatprep.subr.mxu0 0.0
          %3397 = vmatpush1.msra.mxu0 0.0
          %3398 = vmatprep.subr.mxu0 0.0
          %3399 = vmatpush1.msra.mxu0 0.0
          %3400 = vmatprep.subr.mxu0 0.0
          %3401 = vmatpush1.msra.mxu0 0.0
          %3402 = vmatprep.subr.mxu0 0.0
          %3403 = vmatpush1.msra.mxu0 0.0
          %3404 = vmatprep.subr.mxu0 0.0
          %3405 = vmatpush1.msra.mxu0 0.0
          %3406 = vmatprep.subr.mxu0 0.0
          %3407 = vmatpush1.msra.mxu0 0.0
          %3408 = vmatprep.subr.mxu0 0.0
          %3409 = vmatpush1.msra.mxu0 0.0
          %3410 = vmatprep.subr.mxu0 0.0
          %3411 = vmatpush1.msra.mxu0 0.0
          %3412 = vmatprep.subr.mxu0 0.0
          %3413 = vmatpush1.msra.mxu0 0.0
          %3414 = vmatprep.subr.mxu0 0.0
          %3415 = vmatpush1.msra.mxu0 0.0
          %3416 = vmatprep.subr.mxu0 0.0
          %3417 = vmatpush1.msra.mxu0 0.0
          %3418 = vmatprep.subr.mxu0 0.0
          %3419 = vmatpush1.msra.mxu0 0.0
          %3420 = vmatprep.subr.mxu0 0.0
          %3421 = vmatpush1.msra.mxu0 0.0
          %3422 = vmatprep.subr.mxu0 0.0
          %3423 = vmatpush1.msra.mxu0 0.0
          %3424 = vmatprep.subr.mxu0 0.0
          %3425 = vmatpush1.msra.mxu0 0.0
          %3426 = vmatprep.subr.mxu0 0.0
          %3427 = vmatpush1.msra.mxu0 0.0
          %3428 = vmatprep.subr.mxu0 0.0
          %3429 = vmatpush1.msra.mxu0 0.0
          %3430 = vmatprep.subr.mxu0 0.0
          %3431 = vmatpush1.msra.mxu0 0.0
          %3432 = vmatprep.subr.mxu0 0.0
          %3433 = vmatpush1.msra.mxu0 0.0
          %3434 = vmatprep.subr.mxu0 0.0
          %3435 = vmatpush1.msra.mxu0 0.0
          %3436 = vmatprep.subr.mxu0 0.0
          %3437 = vmatpush1.msra.mxu0 0.0
          %3438 = vmatprep.subr.mxu0 0.0
          %3439 = vmatpush1.msra.mxu0 0.0
          %3440 = vmatprep.subr.mxu0 0.0
          %3441 = vmatpush1.msra.mxu0 0.0
          %3442 = vmatprep.subr.mxu0 0.0
          %3443 = vmatpush1.msra.mxu0 0.0
          %3444 = vmatprep.subr.mxu0 0.0
          %3445 = vmatpush1.msra.mxu0 0.0
          %3446 = vmatprep.subr.mxu0 0.0
          %3447 = vmatpush1.msra.mxu0 0.0
          %3448 = vmatprep.mubr.f32.mxu0 0.0
          %3449 = vmatmul.mubr.f32.gmra.mrb[0].mxu0 %v3382
          %v3450 = vpop.f32.mrb[0].mxu0
          %v3451 = vadd.f32 0.0, %v3450
          %v3452 = vpop.f32.mrb[0].mxu0
          %3453 = vdwg.mxu0
          %vm3454 = vcmask 253952
          %v3455 = vsel %vm3454, %v3380, 0.0
          %3456 = vadd.xlane.f32.xlu0 %v3455
          %v3457 = vpop.xlane.xlu0 %3456
          %v3458 = vmax.f32 %v3457, 1.0
          %v3459 = vrcp.pop %v3458
          %v3460 = vmul.f32 %v3451, %v3459
          %v3461 = vld [vmem:[%s17] sm:$0xff]
          %v3462 = vld [vmem:[%s17 + $0x8] sm:$0xff]
          %v3463 = vld [vmem:[%s17 + $0x10] sm:$0xff]
          %v3464 = vld [vmem:[%s17 + $0x18] sm:$0xff]
          %v3465 = vld [vmem:[%s17 + $0x20] sm:$0xff]
          %v3466 = vld [vmem:[%s17 + $0x28] sm:$0xff]
          %v3467 = vld [vmem:[%s17 + $0x30] sm:$0xff]
          %v3468 = vld [vmem:[%s17 + $0x38] sm:$0xff]
          %v3469 = vld [vmem:[%s17 + $0x40] sm:$0xff]
          %v3470 = vld [vmem:[%s17 + $0x48] sm:$0xff]
          %v3471 = vld [vmem:[%s17 + $0x50] sm:$0xff]
          %v3472 = vld [vmem:[%s17 + $0x58] sm:$0xff]
          %v3473 = vld [vmem:[%s17 + $0x60] sm:$0xff]
          %v3474 = vld [vmem:[%s17 + $0x68] sm:$0xff]
          %v3475 = vld [vmem:[%s17 + $0x70] sm:$0xff]
          %v3476 = vld [vmem:[%s17 + $0x78] sm:$0xff]
          %v3477 = vld [vmem:[%s18] sm:$0x1]
          %3478 = vmatprep.subr.mxu0 0.0
          %3479 = vmatpush1.msra.mxu0 %v3461
          %3480 = vmatprep.subr.mxu0 0.0
          %3481 = vmatpush1.msra.mxu0 %v3462
          %3482 = vmatprep.subr.mxu0 0.0
          %3483 = vmatpush1.msra.mxu0 %v3463
          %3484 = vmatprep.subr.mxu0 0.0
          %3485 = vmatpush1.msra.mxu0 %v3464
          %3486 = vmatprep.subr.mxu0 0.0
          %3487 = vmatpush1.msra.mxu0 %v3465
          %3488 = vmatprep.subr.mxu0 0.0
          %3489 = vmatpush1.msra.mxu0 %v3466
          %3490 = vmatprep.subr.mxu0 0.0
          %3491 = vmatpush1.msra.mxu0 %v3467
          %3492 = vmatprep.subr.mxu0 0.0
          %3493 = vmatpush1.msra.mxu0 %v3468
          %3494 = vmatprep.subr.mxu0 0.0
          %3495 = vmatpush1.msra.mxu0 %v3469
          %3496 = vmatprep.subr.mxu0 0.0
          %3497 = vmatpush1.msra.mxu0 %v3470
          %3498 = vmatprep.subr.mxu0 0.0
          %3499 = vmatpush1.msra.mxu0 %v3471
          %3500 = vmatprep.subr.mxu0 0.0
          %3501 = vmatpush1.msra.mxu0 %v3472
          %3502 = vmatprep.subr.mxu0 0.0
          %3503 = vmatpush1.msra.mxu0 %v3473
          %3504 = vmatprep.subr.mxu0 0.0
          %3505 = vmatpush1.msra.mxu0 %v3474
          %3506 = vmatprep.subr.mxu0 0.0
          %3507 = vmatpush1.msra.mxu0 %v3475
          %3508 = vmatprep.subr.mxu0 0.0
          %3509 = vmatpush1.msra.mxu0 %v3476
          %3510 = vmatprep.subr.mxu0 0.0
          %3511 = vmatpush1.msra.mxu0 0.0
          %3512 = vmatprep.subr.mxu0 0.0
          %3513 = vmatpush1.msra.mxu0 0.0
          %3514 = vmatprep.subr.mxu0 0.0
          %3515 = vmatpush1.msra.mxu0 0.0
          %3516 = vmatprep.subr.mxu0 0.0
          %3517 = vmatpush1.msra.mxu0 0.0
          %3518 = vmatprep.subr.mxu0 0.0
          %3519 = vmatpush1.msra.mxu0 0.0
          %3520 = vmatprep.subr.mxu0 0.0
          %3521 = vmatpush1.msra.mxu0 0.0
          %3522 = vmatprep.subr.mxu0 0.0
          %3523 = vmatpush1.msra.mxu0 0.0
          %3524 = vmatprep.subr.mxu0 0.0
          %3525 = vmatpush1.msra.mxu0 0.0
          %3526 = vmatprep.subr.mxu0 0.0
          %3527 = vmatpush1.msra.mxu0 0.0
          %3528 = vmatprep.subr.mxu0 0.0
          %3529 = vmatpush1.msra.mxu0 0.0
          %3530 = vmatprep.subr.mxu0 0.0
          %3531 = vmatpush1.msra.mxu0 0.0
          %3532 = vmatprep.subr.mxu0 0.0
          %3533 = vmatpush1.msra.mxu0 0.0
          %3534 = vmatprep.subr.mxu0 0.0
          %3535 = vmatpush1.msra.mxu0 0.0
          %3536 = vmatprep.subr.mxu0 0.0
          %3537 = vmatpush1.msra.mxu0 0.0
          %3538 = vmatprep.subr.mxu0 0.0
          %3539 = vmatpush1.msra.mxu0 0.0
          %3540 = vmatprep.subr.mxu0 0.0
          %3541 = vmatpush1.msra.mxu0 0.0
          %3542 = vmatprep.mubr.f32.mxu0 0.0
          %3543 = vmatmul.mubr.f32.gmra.mrb[0].mxu0 %v3460
          %v3544 = vpop.f32.mrb[0].mxu0
          %v3545 = vadd.f32 %v3477, %v3544
          %v3546 = vpop.f32.mrb[0].mxu0
          %3547 = vdwg.mxu0
          %3548 = vst [vmem:[%s1081] sm:$0x1] %v3545
        $region164: #{tpu_custom_call.1} parent=95 // pred_fallthru
          _
        %s3549 = sand.u32 %s534, 1
        %s3550 = scalar_lea.sflag [#allocation6], %s3549
        %s3551 = sand.u32 %s534, 1
        %s3552 = scalar_lea.vmem [#allocation23], %s3551
        // Predicated region
        $region165: #{tpu_custom_call.1} parent=95 // pred_check
          %p3553 = pneg %p544
        $region166: #{tpu_custom_call.1} parent=95 // pred_check_branch
          %3555 = sbr.rel (%p3553) target = $region168
        $region167: #{tpu_custom_call.1} parent=95 // pred_region
          %s3557 = ssub.s32 16, 16
          %3558 = vsyncadd %s3550, %s3557
          %s3559 = smul.addr %s44, 16
          %s3560 = scalar_lea.hbm %s19, %s3559
          %s3562 = sshll.u32 %s3552, 4
          %s3563 = int_to_ptr.vmem [resolvable:$true] %s3562
          %3565 = dma.vmem_to_hbm [thread:$0]  %s3563, 16, %s3560, %s3550
        $region168: #{tpu_custom_call.1} parent=95 // pred_fallthru
          _
      $region96: #{tpu_custom_call.1} parent=5 // pred_fallthru
        _
      %p3566 = scmp.le.s32.totalorder 2, %s35
      // Predicated region
      $region169: #{tpu_custom_call.1} parent=5 // pred_check
        %p3567 = pneg %p3566
      $region170: #{tpu_custom_call.1} parent=5 // pred_check_branch
        %3569 = sbr.rel (%p3567) target = $region172
      $region171: #{tpu_custom_call.1} parent=5 // pred_region
        %s3570 = ssub.s32 %s35, 2
        // Predicated region
        $region173: #{tpu_custom_call.1} parent=171 // pred_check
          %p3571 = pneg %p550
        $region174: #{tpu_custom_call.1} parent=171 // pred_check_branch
          %3573 = sbr.rel (%p3571) target = $region176
        $region175: #{tpu_custom_call.1} parent=171 // pred_region
          %s3574 = sand.u32 %s535, 1
          %s3575 = scalar_lea.sflag [#allocation6], %s3574
          %s3576 = sand.u32 %s535, 1
          %s3577 = scalar_lea.vmem [#allocation23], %s3576
          %3578 = dma.done %s3575, 16
        $region176: #{tpu_custom_call.1} parent=171 // pred_fallthru
          _
      $region172: #{tpu_custom_call.1} parent=5 // pred_fallthru
        _
    $region6: #{tpu_custom_call.1} parent=1 // loop_footer
      %s39 = sadd.s32 1, %s35
    $region7: #{tpu_custom_call.1} parent=1 // loop_footer_branch
      %34 = sbr.rel target = $region3
    $region8: #{tpu_custom_call.1} parent=1 // loop_exit
      _
    %3579 = vsyncpa [#allocation5], 1
    %s3580 = scalar_lea.sflag [#allocation5], 1
    %3581 = vsyncpa %s3580, 1
    %3582 = vsyncpa [#allocation8], 1
    %s3583 = scalar_lea.sflag [#allocation8], 1
    %3584 = vsyncpa %s3583, 1
    %3585 = vsyncpa [#allocation11], 1
    %3586 = vsyncpa [#allocation6], 1
    %s3587 = scalar_lea.sflag [#allocation6], 1
    %3588 = vsyncpa %s3587, 1

</llo_original>
